<compile_context>
chip_gen: v6e
topology: v6e:2x2x1
jax: 0.10.0
libtpu: 0.0.40
codegen_flags: <defaults>
</compile_context>

<pallas_src>
import functools

import jax
import jax.numpy as jnp
from jax.experimental import pallas as pl
from jax.experimental.pallas import tpu as pltpu


_LN_EPS = 1e-5
_BN_EPS = 1e-5


# ----------------------------------------------------------------------- kernel math

def _ln(t, g, b):
    mu = jnp.mean(t, axis=-1, keepdims=True)
    var = jnp.mean(jnp.square(t - mu), axis=-1, keepdims=True)
    return (t - mu) * jax.lax.rsqrt(var + _LN_EPS) * g + b


def _silu(t):
    return t * jax.nn.sigmoid(t)


def _mm(a, w):
    """bf16 x bf16 matmul with f32 accumulation (native MXU path)."""
    return jnp.dot(a.astype(jnp.bfloat16), w.astype(jnp.bfloat16),
                   preferred_element_type=jnp.float32)


def _conformer_kernel(num_heads, names, lens_ref, x_ref, *rest):
    n = len(names)
    p = {name: r for name, r in zip(names, rest[:n])}
    o_ref = rest[n]
    dw_buf = rest[n + 1]      # [BB, T+K-1, F] f32   (padded depthwise-conv buffer)
    att_buf = rest[n + 2]     # [BB*T, F]     bf16   (per-head attention output slab)

    BB, T, F = x_ref.shape
    K = p["dw_w"].shape[0]
    dh = F // num_heads
    pad = (K - 1) // 2
    i0 = pl.program_id(0)

    x = x_ref[...].reshape(BB * T, F)                 # merged rows: bigger MXU M dim

    # ---------- FF module 1:  x = 0.5 * FF1(x) + x ----------
    h = _ln(x, p["ln_ff1_g"][...], p["ln_ff1_b"][...])
    h = _mm(h, p["ff1_w_in"][...]) + p["ff1_b_in"][...]
    h = _silu(h)
    h = _mm(h, p["ff1_w_out"][...]) + p["ff1_b_out"][...]
    x = 0.5 * h + x

    # ---------- Convolution module:  x = Conv(x) + x ----------
    c = _ln(x, p["ln_conv_g"][...], p["ln_conv_b"][...])
    c = _mm(c, p["pw1_w"][...]) + p["pw1_b"][...]     # [BB*T, 2F]
    c = c[:, :F] * jax.nn.sigmoid(c[:, F:])           # GLU (128-aligned lane slices)
    # Depthwise conv1d over time, groups=F, 'same' zero padding (convolves over
    # padded frames like the PyTorch Conv1d).  Zero-padded VMEM buffer: each tap is
    # one sublane-offset slice + FMA (no per-tap compare/select on the VALU).
    if pad > 0:
        dw_buf[:, 0:pad, :] = jnp.zeros((BB, pad, F), jnp.float32)
        dw_buf[:, T + pad:T + 2 * pad, :] = jnp.zeros((BB, pad, F), jnp.float32)
    dw_buf[:, pad:pad + T, :] = c.reshape(BB, T, F)
    dw_w = p["dw_w"][...]                             # [K, F]
    acc = jnp.zeros((BB, T, F), jnp.float32)
    for k in range(K):                                # static unroll, K small
        acc = acc + dw_buf[:, k:k + T, :] * dw_w[k:k + 1, :]
    c = acc.reshape(BB * T, F) + p["dw_b"][...]
    # BatchNorm1d, inference mode (running statistics).
    bn_scale = p["bn_g"][...] * jax.lax.rsqrt(p["bn_var"][...] + _BN_EPS)
    c = (c - p["bn_mean"][...]) * bn_scale + p["bn_b"][...]
    c = _silu(c)
    c = _mm(c, p["pw2_w"][...]) + p["pw2_b"][...]
    x = c + x

    # ---------- MHSA module:  x = MHSA(x, mask) + x ----------
    m = _ln(x, p["ln_mhsa_g"][...], p["ln_mhsa_b"][...])
    m16 = m.astype(jnp.bfloat16)                      # cast once per stage
    t_iota = jax.lax.broadcasted_iota(jnp.int32, (1, T), 1)
    key_bias = []
    for b in range(BB):
        seq_len = lens_ref[i0 * BB + b]               # scalar-prefetch length (SMEM)
        key_bias.append(jnp.where(t_iota < seq_len, 0.0, -1e30).astype(jnp.float32))
    for hd in range(num_heads):
        # per-head q/k/v from full-K (F-deep) matmuls over all BB*T rows;
        # 1/sqrt(d_head) is pre-folded into q_w / q_b in the wrapper.
        q = (_mm(m16, p["q_w"][hd]) + p["q_b"][hd]).astype(jnp.bfloat16)   # [BB*T, dh]
        k_ = (_mm(m16, p["k_w"][hd]) + p["k_b"][hd]).astype(jnp.bfloat16)
        v_ = (_mm(m16, p["v_w"][hd]) + p["v_b"][hd]).astype(jnp.bfloat16)
        for b in range(BB):                           # attention stays per-sequence
            r0 = b * T
            s = jax.lax.dot_general(q[r0:r0 + T, :], k_[r0:r0 + T, :],
                                    (((1,), (1,)), ((), ())),
                                    preferred_element_type=jnp.float32)    # [T, T] f32
            s = s + key_bias[b]
            s = s - jnp.max(s, axis=-1, keepdims=True)
            w = jnp.exp(s)
            # denominator >= 1 (the row max contributes exp(0)=1; for a fully padded
            # sequence the -1e30 bias cancels in the max subtraction), so the approx
            # EUP reciprocal never sees 0.
            w = w * pl.reciprocal(jnp.sum(w, axis=-1, keepdims=True), approx=True)
            head = _mm(w, v_[r0:r0 + T, :])                                # [T, dh]
            # lane-aligned slab write (static offsets); single out-projection below
            att_buf[r0:r0 + T, hd * dh:(hd + 1) * dh] = head.astype(jnp.bfloat16)
    att = _mm(att_buf[...], p["attn_out_w"][...]) + p["attn_out_b"][...]   # one [.,F]x[F,F]
    x = att + x

    # ---------- FF module 2:  x = 0.5 * FF2(x) + x ----------
    h = _ln(x, p["ln_ff2_g"][...], p["ln_ff2_b"][...])
    h = _mm(h, p["ff2_w_in"][...]) + p["ff2_b_in"][...]
    h = _silu(h)
    h = _mm(h, p["ff2_w_out"][...]) + p["ff2_b_out"][...]
    x = 0.5 * h + x

    # ---------- final layer norm ----------
    x = _ln(x, p["ln_final_g"][...], p["ln_final_b"][...])
    o_ref[...] = x.reshape(BB, T, F)


# --------------------------------------------------------------------------- params

def param_shapes(F, H, K):
    # vectors are stored as [1, N] so every parameter is a 2-D tile
    return {
        "ln_ff1_g": (1, F), "ln_ff1_b": (1, F),
        "ff1_w_in": (F, H), "ff1_b_in": (1, H),
        "ff1_w_out": (H, F), "ff1_b_out": (1, F),
        "ln_conv_g": (1, F), "ln_conv_b": (1, F),
        "pw1_w": (F, 2 * F), "pw1_b": (1, 2 * F),
        "dw_w": (K, F), "dw_b": (1, F),
        "bn_g": (1, F), "bn_b": (1, F), "bn_mean": (1, F), "bn_var": (1, F),
        "pw2_w": (F, F), "pw2_b": (1, F),
        "ln_mhsa_g": (1, F), "ln_mhsa_b": (1, F),
        "qkv_w": (F, 3 * F), "qkv_b": (1, 3 * F),
        "attn_out_w": (F, F), "attn_out_b": (1, F),
        "ln_ff2_g": (1, F), "ln_ff2_b": (1, F),
        "ff2_w_in": (F, H), "ff2_b_in": (1, H),
        "ff2_w_out": (H, F), "ff2_b_out": (1, F),
        "ln_final_g": (1, F), "ln_final_b": (1, F),
    }


def init_params(key, F, H, K):
    shapes = param_shapes(F, H, K)
    params = {}
    keys = jax.random.split(key, len(shapes))
    gammas = {"ln_ff1_g", "ln_conv_g", "ln_mhsa_g", "ln_ff2_g", "ln_final_g", "bn_g"}
    for (name, shape), k in zip(shapes.items(), keys):
        if name in gammas:
            params[name] = 1.0 + 0.1 * jax.random.normal(k, shape, jnp.float32)
        elif name == "bn_var":
            params[name] = jax.random.uniform(k, shape, jnp.float32, 0.5, 1.5)
        elif shape[0] != 1:  # weight matrices / depthwise taps
            scale = 1.0 / (float(shape[0]) ** 0.5)
            params[name] = scale * jax.random.normal(k, shape, jnp.float32)
        else:  # biases / betas / running means
            params[name] = 0.1 * jax.random.normal(k, shape, jnp.float32)
    return params


# matrices that feed the MXU -> stored/loaded as bf16
_MATMUL_WEIGHTS = ("ff1_w_in", "ff1_w_out", "pw1_w", "pw2_w",
                   "attn_out_w", "ff2_w_in", "ff2_w_out")


def _prepare_kernel_params(params, num_heads):
    """Reorganize the module parameters for the kernel:
    bf16 matmul weights; qkv projection split per head ([H, F, d_head] / [H, 1, d_head])
    with the 1/sqrt(d_head) scale folded into the q weights and bias."""
    F = params["attn_out_w"].shape[0]
    dh = F // num_heads
    scale = 1.0 / (float(dh) ** 0.5)
    qkv_w = params["qkv_w"]   # [F, 3F]
    qkv_b = params["qkv_b"]   # [1, 3F]

    def split_w(w):           # [F, F] -> [H, F, dh]
        return jnp.transpose(w.reshape(F, num_heads, dh), (1, 0, 2))

    def split_b(bv):          # [1, F] -> [H, 1, dh]
        return bv.reshape(num_heads, dh)[:, None, :]

    kp = {}
    for name, v in params.items():
        if name in ("qkv_w", "qkv_b"):
            continue
        kp[name] = v.astype(jnp.bfloat16) if name in _MATMUL_WEIGHTS else v
    kp["q_w"] = split_w(qkv_w[:, :F] * scale).astype(jnp.bfloat16)
    kp["k_w"] = split_w(qkv_w[:, F:2 * F]).astype(jnp.bfloat16)
    kp["v_w"] = split_w(qkv_w[:, 2 * F:]).astype(jnp.bfloat16)
    kp["q_b"] = split_b(qkv_b[:, :F] * scale)
    kp["k_b"] = split_b(qkv_b[:, F:2 * F])
    kp["v_b"] = split_b(qkv_b[:, 2 * F:])
    return kp


# -------------------------------------------------------------------------- wrapper

def conformer_block(x, sequence_mask, params, num_heads, *, batch_block=None):
    """x: [B, T, F] float32, sequence_mask: [B, T] bool (True = valid frame).

    The mask is assumed to be a contiguous prefix of valid frames (length-derived,
    as in the CTC pipeline); only per-sequence lengths are passed to the kernel.
    """
    B, T, F = x.shape
    lengths = jnp.sum(sequence_mask.astype(jnp.int32), axis=1)   # [B] int32 (SMEM)

    if batch_block is None:
        # Fold batch elements per grid step to raise the MXU M dim, but keep >= 2
        # grid steps when possible so v7x can shard across its two TensorCores.
        divisors = [d for d in range(1, B + 1) if B % d == 0 and d * T <= 256]
        multi = [d for d in divisors if B // d >= 2]
        batch_block = max(multi) if multi else (max(divisors) if divisors else 1)
    BB = batch_block
    assert B % BB == 0, "batch_block must divide the batch size"

    kp = _prepare_kernel_params(params, num_heads)
    names = tuple(kp.keys())
    values = [kp[name] for name in names]
    K = params["dw_w"].shape[0]
    H = params["ff1_w_in"].shape[1]

    in_specs = [pl.BlockSpec((BB, T, F), lambda i, lens: (i, 0, 0))]
    # Weights are grid-invariant: a single resident VMEM copy (no per-step re-DMA).
    in_specs += [pl.BlockSpec(memory_space=pltpu.MemorySpace.VMEM) for _ in values]

    # VMEM budget derived from the real footprint (resident weights, double-buffered
    # in/out activation blocks, scratch, a margin for live intermediates), clamped to
    # [32 MiB, 64 MiB] so the request is valid on v7x (64 MiB physical VMEM) as well
    # as v5e/v6e (128 MiB; the cap can be raised there for long sequences).
    weight_bytes = sum(v.size * v.dtype.itemsize for v in values)
    block_bytes = BB * T * F * 4
    scratch_bytes = BB * (T + K - 1) * F * 4 + BB * T * F * 2
    interm_bytes = 10 * BB * T * max(2 * F, H) * 4 + T * T * 4
    est = weight_bytes + 4 * block_bytes + scratch_bytes + interm_bytes
    vmem_limit = int(min(max(2 * est, 32 << 20), 64 << 20))

    kernel = functools.partial(_conformer_kernel, num_heads, names)
    return pl.pallas_call(
        kernel,
        out_shape=jax.ShapeDtypeStruct((B, T, F), jnp.float32),
        grid_spec=pltpu.PrefetchScalarGridSpec(
            num_scalar_prefetch=1,
            grid=(B // BB,),
            in_specs=in_specs,
            out_specs=pl.BlockSpec((BB, T, F), lambda i, lens: (i, 0, 0)),
            scratch_shapes=[
                pltpu.VMEM((BB, T + K - 1, F), jnp.float32),   # padded depthwise buf
                pltpu.VMEM((BB * T, F), jnp.bfloat16),          # attention head slab
            ],
        ),
        compiler_params=pltpu.CompilerParams(
            dimension_semantics=("parallel",),   # batch steps are independent
            vmem_limit_bytes=vmem_limit,
        ),
    )(lengths, x, *values)


# ------------------------------------------------------------------------ reference

def conformer_block_ref(x, sequence_mask, params, num_heads):
    """Independent pure-JAX f32 reference (HIGHEST matmul precision)."""
    B, T, F = x.shape
    K = params["dw_w"].shape[0]
    dh = F // num_heads
    p = params
    dot = functools.partial(jnp.dot, precision=jax.lax.Precision.HIGHEST)

    def ln(t, g, b):
        mu = jnp.mean(t, axis=-1, keepdims=True)
        var = jnp.mean(jnp.square(t - mu), axis=-1, keepdims=True)
        return (t - mu) * jax.lax.rsqrt(var + _LN_EPS) * g + b

    def silu(t):
        return t * jax.nn.sigmoid(t)

    outs = []
    for b in range(B):
        xb = x[b]
        mask = sequence_mask[b].astype(jnp.float32)

        h = ln(xb, p["ln_ff1_g"], p["ln_ff1_b"])
        h = silu(dot(h, p["ff1_w_in"]) + p["ff1_b_in"])
        h = dot(h, p["ff1_w_out"]) + p["ff1_b_out"]
        xb = 0.5 * h + xb

        c = ln(xb, p["ln_conv_g"], p["ln_conv_b"])
        c = dot(c, p["pw1_w"]) + p["pw1_b"]
        c = c[:, :F] * jax.nn.sigmoid(c[:, F:])
        pad = (K - 1) // 2
        cp = jnp.pad(c, ((pad, pad), (0, 0)))
        c = sum(cp[k:k + T, :] * p["dw_w"][k] for k in range(K)) + p["dw_b"]
        c = (c - p["bn_mean"]) * (p["bn_g"] * jax.lax.rsqrt(p["bn_var"] + _BN_EPS)) + p["bn_b"]
        c = dot(silu(c), p["pw2_w"]) + p["pw2_b"]
        xb = c + xb

        m = ln(xb, p["ln_mhsa_g"], p["ln_mhsa_b"])
        qkv = dot(m, p["qkv_w"]) + p["qkv_b"]
        key_bias = (1.0 - mask)[None, :] * (-1e30)
        scale = 1.0 / (float(dh) ** 0.5)
        heads = []
        for hd in range(num_heads):
            lo = hd * dh
            q = qkv[:, lo:lo + dh] * scale
            k_ = qkv[:, F + lo:F + lo + dh]
            v_ = qkv[:, 2 * F + lo:2 * F + lo + dh]
            s = dot(q, k_.T) + key_bias
            s = s - jnp.max(s, axis=-1, keepdims=True)
            w = jnp.exp(s)
            w = w / jnp.sum(w, axis=-1, keepdims=True)
            heads.append(dot(w, v_))
        att = dot(jnp.concatenate(heads, axis=-1), p["attn_out_w"]) + p["attn_out_b"]
        xb = att + xb

        h = ln(xb, p["ln_ff2_g"], p["ln_ff2_b"])
        h = silu(dot(h, p["ff2_w_in"]) + p["ff2_b_in"])
        h = dot(h, p["ff2_w_out"]) + p["ff2_b_out"]
        xb = 0.5 * h + xb

        outs.append(ln(xb, p["ln_final_g"], p["ln_final_b"]))
    return jnp.stack(outs, axis=0)


# ----------------------------------------------------------------------------- main

if __name__ == "__main__":
    # small but lane-dense shapes: F, H, 2F multiples of 128; T a multiple of 8
    B, T, F, H, NUM_HEADS, K = 2, 32, 128, 256, 4, 7

    key = jax.random.PRNGKey(0)
    kx, kparam = jax.random.split(key)
    x = jax.random.normal(kx, (B, T, F), jnp.float32)
    lengths = jnp.array([T, 23], jnp.int32)
    sequence_mask = jnp.arange(T)[None, :] < lengths[:, None]   # True = valid frame
    params = init_params(kparam, F, H, K)

    ref = conformer_block_ref(x, sequence_mask, params, NUM_HEADS)   # f32 ground truth

    # exercise both the per-sequence grid (default heuristic -> BB=1) and the
    # batch-folded grid (BB=2 -> merged [BB*T, F] rows for the non-attention matmuls)
    for bb in (None, 2):
        out = jax.block_until_ready(
            conformer_block(x, sequence_mask, params, NUM_HEADS, batch_block=bb))
        assert out.shape == (B, T, F)
        assert bool(jnp.all(jnp.isfinite(out)))
        err = jnp.abs(out - ref)
        max_err = float(jnp.max(err))
        mean_err = float(jnp.mean(err))
        # tolerance covers the bf16 MXU matmul path + approximate EUP reciprocal
        # against the f32 (HIGHEST precision) reference; structural bugs give O(1) errors
        assert max_err < 0.15 and mean_err < 0.02, (bb, max_err, mean_err)
    # NOTE: dropout layers are identity (inference); BatchNorm1d uses running stats.
    print("KERNEL_OK")
</pallas_src>

<mosaic_0001>
module attributes {stable_mosaic.version = 11 : i64} {
  func.func @_conformer_kernel(%arg0: i32, %arg1: memref<2xi32, #tpu.memory_space<smem>>, %arg2: memref<1x32x128xf32, #tpu.memory_space<vmem>>, %arg3: memref<1x128xf32, #tpu.memory_space<vmem>>, %arg4: memref<1x128xf32, #tpu.memory_space<vmem>>, %arg5: memref<128x256xbf16, #tpu.memory_space<vmem>>, %arg6: memref<1x256xf32, #tpu.memory_space<vmem>>, %arg7: memref<256x128xbf16, #tpu.memory_space<vmem>>, %arg8: memref<1x128xf32, #tpu.memory_space<vmem>>, %arg9: memref<1x128xf32, #tpu.memory_space<vmem>>, %arg10: memref<1x128xf32, #tpu.memory_space<vmem>>, %arg11: memref<128x256xbf16, #tpu.memory_space<vmem>>, %arg12: memref<1x256xf32, #tpu.memory_space<vmem>>, %arg13: memref<7x128xf32, #tpu.memory_space<vmem>>, %arg14: memref<1x128xf32, #tpu.memory_space<vmem>>, %arg15: memref<1x128xf32, #tpu.memory_space<vmem>>, %arg16: memref<1x128xf32, #tpu.memory_space<vmem>>, %arg17: memref<1x128xf32, #tpu.memory_space<vmem>>, %arg18: memref<1x128xf32, #tpu.memory_space<vmem>>, %arg19: memref<128x128xbf16, #tpu.memory_space<vmem>>, %arg20: memref<1x128xf32, #tpu.memory_space<vmem>>, %arg21: memref<1x128xf32, #tpu.memory_space<vmem>>, %arg22: memref<1x128xf32, #tpu.memory_space<vmem>>, %arg23: memref<128x128xbf16, #tpu.memory_space<vmem>>, %arg24: memref<1x128xf32, #tpu.memory_space<vmem>>, %arg25: memref<1x128xf32, #tpu.memory_space<vmem>>, %arg26: memref<1x128xf32, #tpu.memory_space<vmem>>, %arg27: memref<128x256xbf16, #tpu.memory_space<vmem>>, %arg28: memref<1x256xf32, #tpu.memory_space<vmem>>, %arg29: memref<256x128xbf16, #tpu.memory_space<vmem>>, %arg30: memref<1x128xf32, #tpu.memory_space<vmem>>, %arg31: memref<1x128xf32, #tpu.memory_space<vmem>>, %arg32: memref<1x128xf32, #tpu.memory_space<vmem>>, %arg33: memref<4x128x32xbf16, #tpu.memory_space<vmem>>, %arg34: memref<4x128x32xbf16, #tpu.memory_space<vmem>>, %arg35: memref<4x128x32xbf16, #tpu.memory_space<vmem>>, %arg36: memref<4x1x32xf32, #tpu.memory_space<vmem>>, %arg37: memref<4x1x32xf32, #tpu.memory_space<vmem>>, %arg38: memref<4x1x32xf32, #tpu.memory_space<vmem>>, %arg39: memref<1x32x128xf32, #tpu.memory_space<vmem>>, %arg40: memref<1x38x128xf32, #tpu.memory_space<vmem>>, %arg41: memref<32x128xbf16, #tpu.memory_space<vmem>>) attributes {dimension_semantics = [#tpu.dimension_semantics<parallel>], iteration_bounds = array<i64: 2>, scalar_prefetch = 1 : i64, scratch_operands = 2 : i64, tpu.core_type = #tpu.core_type<tc>, window_params = [{transform_indices = @transform_0, window_bounds = array<i64: 1, 32, 128>}, {pipeline_mode = #tpu.pipeline_mode<synchronous>, transform_indices = @transform_1, window_bounds = array<i64: 1, 128>}, {pipeline_mode = #tpu.pipeline_mode<synchronous>, transform_indices = @transform_2, window_bounds = array<i64: 1, 128>}, {pipeline_mode = #tpu.pipeline_mode<synchronous>, transform_indices = @transform_3, window_bounds = array<i64: 128, 256>}, {pipeline_mode = #tpu.pipeline_mode<synchronous>, transform_indices = @transform_4, window_bounds = array<i64: 1, 256>}, {pipeline_mode = #tpu.pipeline_mode<synchronous>, transform_indices = @transform_5, window_bounds = array<i64: 256, 128>}, {pipeline_mode = #tpu.pipeline_mode<synchronous>, transform_indices = @transform_6, window_bounds = array<i64: 1, 128>}, {pipeline_mode = #tpu.pipeline_mode<synchronous>, transform_indices = @transform_7, window_bounds = array<i64: 1, 128>}, {pipeline_mode = #tpu.pipeline_mode<synchronous>, transform_indices = @transform_8, window_bounds = array<i64: 1, 128>}, {pipeline_mode = #tpu.pipeline_mode<synchronous>, transform_indices = @transform_9, window_bounds = array<i64: 128, 256>}, {pipeline_mode = #tpu.pipeline_mode<synchronous>, transform_indices = @transform_10, window_bounds = array<i64: 1, 256>}, {pipeline_mode = #tpu.pipeline_mode<synchronous>, transform_indices = @transform_11, window_bounds = array<i64: 7, 128>}, {pipeline_mode = #tpu.pipeline_mode<synchronous>, transform_indices = @transform_12, window_bounds = array<i64: 1, 128>}, {pipeline_mode = #tpu.pipeline_mode<synchronous>, transform_indices = @transform_13, window_bounds = array<i64: 1, 128>}, {pipeline_mode = #tpu.pipeline_mode<synchronous>, transform_indices = @transform_14, window_bounds = array<i64: 1, 128>}, {pipeline_mode = #tpu.pipeline_mode<synchronous>, transform_indices = @transform_15, window_bounds = array<i64: 1, 128>}, {pipeline_mode = #tpu.pipeline_mode<synchronous>, transform_indices = @transform_16, window_bounds = array<i64: 1, 128>}, {pipeline_mode = #tpu.pipeline_mode<synchronous>, transform_indices = @transform_17, window_bounds = array<i64: 128, 128>}, {pipeline_mode = #tpu.pipeline_mode<synchronous>, transform_indices = @transform_18, window_bounds = array<i64: 1, 128>}, {pipeline_mode = #tpu.pipeline_mode<synchronous>, transform_indices = @transform_19, window_bounds = array<i64: 1, 128>}, {pipeline_mode = #tpu.pipeline_mode<synchronous>, transform_indices = @transform_20, window_bounds = array<i64: 1, 128>}, {pipeline_mode = #tpu.pipeline_mode<synchronous>, transform_indices = @transform_21, window_bounds = array<i64: 128, 128>}, {pipeline_mode = #tpu.pipeline_mode<synchronous>, transform_indices = @transform_22, window_bounds = array<i64: 1, 128>}, {pipeline_mode = #tpu.pipeline_mode<synchronous>, transform_indices = @transform_23, window_bounds = array<i64: 1, 128>}, {pipeline_mode = #tpu.pipeline_mode<synchronous>, transform_indices = @transform_24, window_bounds = array<i64: 1, 128>}, {pipeline_mode = #tpu.pipeline_mode<synchronous>, transform_indices = @transform_25, window_bounds = array<i64: 128, 256>}, {pipeline_mode = #tpu.pipeline_mode<synchronous>, transform_indices = @transform_26, window_bounds = array<i64: 1, 256>}, {pipeline_mode = #tpu.pipeline_mode<synchronous>, transform_indices = @transform_27, window_bounds = array<i64: 256, 128>}, {pipeline_mode = #tpu.pipeline_mode<synchronous>, transform_indices = @transform_28, window_bounds = array<i64: 1, 128>}, {pipeline_mode = #tpu.pipeline_mode<synchronous>, transform_indices = @transform_29, window_bounds = array<i64: 1, 128>}, {pipeline_mode = #tpu.pipeline_mode<synchronous>, transform_indices = @transform_30, window_bounds = array<i64: 1, 128>}, {pipeline_mode = #tpu.pipeline_mode<synchronous>, transform_indices = @transform_31, window_bounds = array<i64: 4, 128, 32>}, {pipeline_mode = #tpu.pipeline_mode<synchronous>, transform_indices = @transform_32, window_bounds = array<i64: 4, 128, 32>}, {pipeline_mode = #tpu.pipeline_mode<synchronous>, transform_indices = @transform_33, window_bounds = array<i64: 4, 128, 32>}, {pipeline_mode = #tpu.pipeline_mode<synchronous>, transform_indices = @transform_34, window_bounds = array<i64: 4, 1, 32>}, {pipeline_mode = #tpu.pipeline_mode<synchronous>, transform_indices = @transform_35, window_bounds = array<i64: 4, 1, 32>}, {pipeline_mode = #tpu.pipeline_mode<synchronous>, transform_indices = @transform_36, window_bounds = array<i64: 4, 1, 32>}, {transform_indices = @transform_37, window_bounds = array<i64: 1, 32, 128>}]} {
    %c0 = arith.constant 0 : index
    %c0_0 = arith.constant 0 : index
    %c0_1 = arith.constant 0 : index
    %0 = vector.load %arg2[%c0, %c0_0, %c0_1] : memref<1x32x128xf32, #tpu.memory_space<vmem>>, vector<1x32x128xf32>
    %1 = vector.shape_cast %0 : vector<1x32x128xf32> to vector<32x128xf32>
    %c0_2 = arith.constant 0 : index
    %c0_3 = arith.constant 0 : index
    %2 = vector.load %arg3[%c0_2, %c0_3] : memref<1x128xf32, #tpu.memory_space<vmem>>, vector<1x128xf32>
    %c0_4 = arith.constant 0 : index
    %c0_5 = arith.constant 0 : index
    %3 = vector.load %arg4[%c0_4, %c0_5] : memref<1x128xf32, #tpu.memory_space<vmem>>, vector<1x128xf32>
    %cst = arith.constant dense<0.000000e+00> : vector<32xf32>
    %4 = vector.multi_reduction <add>, %1, %cst [1] : vector<32x128xf32> to vector<32xf32>
    %5 = vector.shape_cast %4 : vector<32xf32> to vector<32x1xf32>
    %cst_6 = arith.constant 1.280000e+02 : f32
    %6 = vector.broadcast %cst_6 : f32 to vector<32x1xf32>
    %7 = arith.divf %5, %6 : vector<32x1xf32>
    %8 = vector.broadcast %7 : vector<32x1xf32> to vector<32x128xf32>
    %9 = arith.subf %1, %8 : vector<32x128xf32>
    %10 = arith.mulf %9, %9 : vector<32x128xf32>
    %cst_7 = arith.constant dense<0.000000e+00> : vector<32xf32>
    %11 = vector.multi_reduction <add>, %10, %cst_7 [1] : vector<32x128xf32> to vector<32xf32>
    %12 = vector.shape_cast %11 : vector<32xf32> to vector<32x1xf32>
    %cst_8 = arith.constant 1.280000e+02 : f32
    %13 = vector.broadcast %cst_8 : f32 to vector<32x1xf32>
    %14 = arith.divf %12, %13 : vector<32x1xf32>
    %15 = vector.broadcast %7 : vector<32x1xf32> to vector<32x128xf32>
    %16 = arith.subf %1, %15 : vector<32x128xf32>
    %cst_9 = arith.constant 9.99999974E-6 : f32
    %17 = vector.broadcast %cst_9 : f32 to vector<32x1xf32>
    %18 = arith.addf %14, %17 : vector<32x1xf32>
    %19 = math.rsqrt %18 : vector<32x1xf32>
    %20 = vector.broadcast %19 : vector<32x1xf32> to vector<32x128xf32>
    %21 = arith.mulf %16, %20 : vector<32x128xf32>
    %22 = vector.broadcast %2 : vector<1x128xf32> to vector<32x128xf32>
    %23 = arith.mulf %21, %22 : vector<32x128xf32>
    %24 = vector.broadcast %3 : vector<1x128xf32> to vector<32x128xf32>
    %25 = arith.addf %23, %24 : vector<32x128xf32>
    %c0_10 = arith.constant 0 : index
    %c0_11 = arith.constant 0 : index
    %26 = vector.load %arg5[%c0_10, %c0_11] : memref<128x256xbf16, #tpu.memory_space<vmem>>, vector<128x256xbf16>
    %27 = arith.truncf %25 : vector<32x128xf32> to vector<32x128xbf16>
    %cst_12 = arith.constant dense<0.000000e+00> : vector<32x256xf32>
    %28 = tpu.matmul %27, %26, %cst_12 {dimension_numbers = #tpu.dot_dimension_numbers<[1], [0], [0], [1], [0, 0, 1, 1], [], []>} : vector<32x128xbf16>, vector<128x256xbf16>, vector<32x256xf32> -> vector<32x256xf32>
    %c0_13 = arith.constant 0 : index
    %c0_14 = arith.constant 0 : index
    %29 = vector.load %arg6[%c0_13, %c0_14] : memref<1x256xf32, #tpu.memory_space<vmem>>, vector<1x256xf32>
    %30 = vector.broadcast %29 : vector<1x256xf32> to vector<32x256xf32>
    %31 = arith.addf %28, %30 : vector<32x256xf32>
    %32 = arith.negf %31 : vector<32x256xf32>
    %33 = math.exp %32 : vector<32x256xf32>
    %cst_15 = arith.constant 1.000000e+00 : f32
    %34 = vector.broadcast %cst_15 : f32 to vector<32x256xf32>
    %35 = arith.addf %34, %33 : vector<32x256xf32>
    %36 = arith.divf %34, %35 : vector<32x256xf32>
    %37 = arith.mulf %31, %36 : vector<32x256xf32>
    %c0_16 = arith.constant 0 : index
    %c0_17 = arith.constant 0 : index
    %38 = vector.load %arg7[%c0_16, %c0_17] : memref<256x128xbf16, #tpu.memory_space<vmem>>, vector<256x128xbf16>
    %39 = arith.truncf %37 : vector<32x256xf32> to vector<32x256xbf16>
    %cst_18 = arith.constant dense<0.000000e+00> : vector<32x128xf32>
    %40 = tpu.matmul %39, %38, %cst_18 {dimension_numbers = #tpu.dot_dimension_numbers<[1], [0], [0], [1], [0, 0, 1, 1], [], []>} : vector<32x256xbf16>, vector<256x128xbf16>, vector<32x128xf32> -> vector<32x128xf32>
    %c0_19 = arith.constant 0 : index
    %c0_20 = arith.constant 0 : index
    %41 = vector.load %arg8[%c0_19, %c0_20] : memref<1x128xf32, #tpu.memory_space<vmem>>, vector<1x128xf32>
    %42 = vector.broadcast %41 : vector<1x128xf32> to vector<32x128xf32>
    %43 = arith.addf %40, %42 : vector<32x128xf32>
    %cst_21 = arith.constant 5.000000e-01 : f32
    %44 = vector.broadcast %cst_21 : f32 to vector<32x128xf32>
    %45 = arith.mulf %44, %43 : vector<32x128xf32>
    %46 = arith.addf %45, %1 : vector<32x128xf32>
    %c0_22 = arith.constant 0 : index
    %c0_23 = arith.constant 0 : index
    %47 = vector.load %arg9[%c0_22, %c0_23] : memref<1x128xf32, #tpu.memory_space<vmem>>, vector<1x128xf32>
    %c0_24 = arith.constant 0 : index
    %c0_25 = arith.constant 0 : index
    %48 = vector.load %arg10[%c0_24, %c0_25] : memref<1x128xf32, #tpu.memory_space<vmem>>, vector<1x128xf32>
    %cst_26 = arith.constant dense<0.000000e+00> : vector<32xf32>
    %49 = vector.multi_reduction <add>, %46, %cst_26 [1] : vector<32x128xf32> to vector<32xf32>
    %50 = vector.shape_cast %49 : vector<32xf32> to vector<32x1xf32>
    %cst_27 = arith.constant 1.280000e+02 : f32
    %51 = vector.broadcast %cst_27 : f32 to vector<32x1xf32>
    %52 = arith.divf %50, %51 : vector<32x1xf32>
    %53 = vector.broadcast %52 : vector<32x1xf32> to vector<32x128xf32>
    %54 = arith.subf %46, %53 : vector<32x128xf32>
    %55 = arith.mulf %54, %54 : vector<32x128xf32>
    %cst_28 = arith.constant dense<0.000000e+00> : vector<32xf32>
    %56 = vector.multi_reduction <add>, %55, %cst_28 [1] : vector<32x128xf32> to vector<32xf32>
    %57 = vector.shape_cast %56 : vector<32xf32> to vector<32x1xf32>
    %cst_29 = arith.constant 1.280000e+02 : f32
    %58 = vector.broadcast %cst_29 : f32 to vector<32x1xf32>
    %59 = arith.divf %57, %58 : vector<32x1xf32>
    %60 = vector.broadcast %52 : vector<32x1xf32> to vector<32x128xf32>
    %61 = arith.subf %46, %60 : vector<32x128xf32>
    %cst_30 = arith.constant 9.99999974E-6 : f32
    %62 = vector.broadcast %cst_30 : f32 to vector<32x1xf32>
    %63 = arith.addf %59, %62 : vector<32x1xf32>
    %64 = math.rsqrt %63 : vector<32x1xf32>
    %65 = vector.broadcast %64 : vector<32x1xf32> to vector<32x128xf32>
    %66 = arith.mulf %61, %65 : vector<32x128xf32>
    %67 = vector.broadcast %47 : vector<1x128xf32> to vector<32x128xf32>
    %68 = arith.mulf %66, %67 : vector<32x128xf32>
    %69 = vector.broadcast %48 : vector<1x128xf32> to vector<32x128xf32>
    %70 = arith.addf %68, %69 : vector<32x128xf32>
    %c0_31 = arith.constant 0 : index
    %c0_32 = arith.constant 0 : index
    %71 = vector.load %arg11[%c0_31, %c0_32] : memref<128x256xbf16, #tpu.memory_space<vmem>>, vector<128x256xbf16>
    %72 = arith.truncf %70 : vector<32x128xf32> to vector<32x128xbf16>
    %cst_33 = arith.constant dense<0.000000e+00> : vector<32x256xf32>
    %73 = tpu.matmul %72, %71, %cst_33 {dimension_numbers = #tpu.dot_dimension_numbers<[1], [0], [0], [1], [0, 0, 1, 1], [], []>} : vector<32x128xbf16>, vector<128x256xbf16>, vector<32x256xf32> -> vector<32x256xf32>
    %c0_34 = arith.constant 0 : index
    %c0_35 = arith.constant 0 : index
    %74 = vector.load %arg12[%c0_34, %c0_35] : memref<1x256xf32, #tpu.memory_space<vmem>>, vector<1x256xf32>
    %75 = vector.broadcast %74 : vector<1x256xf32> to vector<32x256xf32>
    %76 = arith.addf %73, %75 : vector<32x256xf32>
    %77 = vector.extract_strided_slice %76 {offsets = [0, 0], sizes = [32, 128], strides = [1, 1]} : vector<32x256xf32> to vector<32x128xf32>
    %78 = vector.extract_strided_slice %76 {offsets = [0, 128], sizes = [32, 128], strides = [1, 1]} : vector<32x256xf32> to vector<32x128xf32>
    %79 = arith.negf %78 : vector<32x128xf32>
    %80 = math.exp %79 : vector<32x128xf32>
    %cst_36 = arith.constant 1.000000e+00 : f32
    %81 = vector.broadcast %cst_36 : f32 to vector<32x128xf32>
    %82 = arith.addf %81, %80 : vector<32x128xf32>
    %83 = arith.divf %81, %82 : vector<32x128xf32>
    %84 = arith.mulf %77, %83 : vector<32x128xf32>
    %cst_37 = arith.constant 0.000000e+00 : f32
    %85 = vector.broadcast %cst_37 : f32 to vector<1x3x128xf32>
    %c0_38 = arith.constant 0 : index
    %c0_39 = arith.constant 0 : index
    %c0_40 = arith.constant 0 : index
    %86 = vector.load %arg40[%c0_38, %c0_39, %c0_40] : memref<1x38x128xf32, #tpu.memory_space<vmem>>, vector<1x3x128xf32>
    tpu.vector_store %arg40[%c0_38, %c0_39, %c0_40], %85 {strides = array<i32>} : memref<1x38x128xf32, #tpu.memory_space<vmem>>, vector<1x3x128xf32>,
    %cst_41 = arith.constant 0.000000e+00 : f32
    %87 = vector.broadcast %cst_41 : f32 to vector<1x3x128xf32>
    %c0_42 = arith.constant 0 : index
    %c35 = arith.constant 35 : index
    %c0_43 = arith.constant 0 : index
    %88 = vector.load %arg40[%c0_42, %c35, %c0_43] : memref<1x38x128xf32, #tpu.memory_space<vmem>>, vector<1x3x128xf32>
    tpu.vector_store %arg40[%c0_42, %c35, %c0_43], %87 {strides = array<i32>} : memref<1x38x128xf32, #tpu.memory_space<vmem>>, vector<1x3x128xf32>,
    %89 = vector.shape_cast %84 : vector<32x128xf32> to vector<1x32x128xf32>
    %c0_44 = arith.constant 0 : index
    %c3 = arith.constant 3 : index
    %c0_45 = arith.constant 0 : index
    %90 = vector.load %arg40[%c0_44, %c3, %c0_45] : memref<1x38x128xf32, #tpu.memory_space<vmem>>, vector<1x32x128xf32>
    tpu.vector_store %arg40[%c0_44, %c3, %c0_45], %89 {strides = array<i32>} : memref<1x38x128xf32, #tpu.memory_space<vmem>>, vector<1x32x128xf32>,
    %c0_46 = arith.constant 0 : index
    %c0_47 = arith.constant 0 : index
    %91 = vector.load %arg13[%c0_46, %c0_47] : memref<7x128xf32, #tpu.memory_space<vmem>>, vector<7x128xf32>
    %cst_48 = arith.constant 0.000000e+00 : f32
    %92 = vector.broadcast %cst_48 : f32 to vector<1x32x128xf32>
    %c0_49 = arith.constant 0 : index
    %c0_50 = arith.constant 0 : index
    %c0_51 = arith.constant 0 : index
    %93 = vector.load %arg40[%c0_49, %c0_50, %c0_51] : memref<1x38x128xf32, #tpu.memory_space<vmem>>, vector<1x32x128xf32>
    %94 = vector.extract_strided_slice %91 {offsets = [0, 0], sizes = [1, 128], strides = [1, 1]} : vector<7x128xf32> to vector<1x128xf32>
    %95 = vector.shape_cast %94 : vector<1x128xf32> to vector<1x1x128xf32>
    %96 = vector.broadcast %95 : vector<1x1x128xf32> to vector<1x32x128xf32>
    %97 = arith.mulf %93, %96 : vector<1x32x128xf32>
    %98 = arith.addf %92, %97 : vector<1x32x128xf32>
    %c0_52 = arith.constant 0 : index
    %c1 = arith.constant 1 : index
    %c0_53 = arith.constant 0 : index
    %99 = vector.load %arg40[%c0_52, %c1, %c0_53] : memref<1x38x128xf32, #tpu.memory_space<vmem>>, vector<1x32x128xf32>
    %100 = vector.extract_strided_slice %91 {offsets = [1, 0], sizes = [1, 128], strides = [1, 1]} : vector<7x128xf32> to vector<1x128xf32>
    %101 = vector.shape_cast %100 : vector<1x128xf32> to vector<1x1x128xf32>
    %102 = vector.broadcast %101 : vector<1x1x128xf32> to vector<1x32x128xf32>
    %103 = arith.mulf %99, %102 : vector<1x32x128xf32>
    %104 = arith.addf %98, %103 : vector<1x32x128xf32>
    %c0_54 = arith.constant 0 : index
    %c2 = arith.constant 2 : index
    %c0_55 = arith.constant 0 : index
    %105 = vector.load %arg40[%c0_54, %c2, %c0_55] : memref<1x38x128xf32, #tpu.memory_space<vmem>>, vector<1x32x128xf32>
    %106 = vector.extract_strided_slice %91 {offsets = [2, 0], sizes = [1, 128], strides = [1, 1]} : vector<7x128xf32> to vector<1x128xf32>
    %107 = vector.shape_cast %106 : vector<1x128xf32> to vector<1x1x128xf32>
    %108 = vector.broadcast %107 : vector<1x1x128xf32> to vector<1x32x128xf32>
    %109 = arith.mulf %105, %108 : vector<1x32x128xf32>
    %110 = arith.addf %104, %109 : vector<1x32x128xf32>
    %c0_56 = arith.constant 0 : index
    %c3_57 = arith.constant 3 : index
    %c0_58 = arith.constant 0 : index
    %111 = vector.load %arg40[%c0_56, %c3_57, %c0_58] : memref<1x38x128xf32, #tpu.memory_space<vmem>>, vector<1x32x128xf32>
    %112 = vector.extract_strided_slice %91 {offsets = [3, 0], sizes = [1, 128], strides = [1, 1]} : vector<7x128xf32> to vector<1x128xf32>
    %113 = vector.shape_cast %112 : vector<1x128xf32> to vector<1x1x128xf32>
    %114 = vector.broadcast %113 : vector<1x1x128xf32> to vector<1x32x128xf32>
    %115 = arith.mulf %111, %114 : vector<1x32x128xf32>
    %116 = arith.addf %110, %115 : vector<1x32x128xf32>
    %c0_59 = arith.constant 0 : index
    %c4 = arith.constant 4 : index
    %c0_60 = arith.constant 0 : index
    %117 = vector.load %arg40[%c0_59, %c4, %c0_60] : memref<1x38x128xf32, #tpu.memory_space<vmem>>, vector<1x32x128xf32>
    %118 = vector.extract_strided_slice %91 {offsets = [4, 0], sizes = [1, 128], strides = [1, 1]} : vector<7x128xf32> to vector<1x128xf32>
    %119 = vector.shape_cast %118 : vector<1x128xf32> to vector<1x1x128xf32>
    %120 = vector.broadcast %119 : vector<1x1x128xf32> to vector<1x32x128xf32>
    %121 = arith.mulf %117, %120 : vector<1x32x128xf32>
    %122 = arith.addf %116, %121 : vector<1x32x128xf32>
    %c0_61 = arith.constant 0 : index
    %c5 = arith.constant 5 : index
    %c0_62 = arith.constant 0 : index
    %123 = vector.load %arg40[%c0_61, %c5, %c0_62] : memref<1x38x128xf32, #tpu.memory_space<vmem>>, vector<1x32x128xf32>
    %124 = vector.extract_strided_slice %91 {offsets = [5, 0], sizes = [1, 128], strides = [1, 1]} : vector<7x128xf32> to vector<1x128xf32>
    %125 = vector.shape_cast %124 : vector<1x128xf32> to vector<1x1x128xf32>
    %126 = vector.broadcast %125 : vector<1x1x128xf32> to vector<1x32x128xf32>
    %127 = arith.mulf %123, %126 : vector<1x32x128xf32>
    %128 = arith.addf %122, %127 : vector<1x32x128xf32>
    %c0_63 = arith.constant 0 : index
    %c6 = arith.constant 6 : index
    %c0_64 = arith.constant 0 : index
    %129 = vector.load %arg40[%c0_63, %c6, %c0_64] : memref<1x38x128xf32, #tpu.memory_space<vmem>>, vector<1x32x128xf32>
    %130 = vector.extract_strided_slice %91 {offsets = [6, 0], sizes = [1, 128], strides = [1, 1]} : vector<7x128xf32> to vector<1x128xf32>
    %131 = vector.shape_cast %130 : vector<1x128xf32> to vector<1x1x128xf32>
    %132 = vector.broadcast %131 : vector<1x1x128xf32> to vector<1x32x128xf32>
    %133 = arith.mulf %129, %132 : vector<1x32x128xf32>
    %134 = arith.addf %128, %133 : vector<1x32x128xf32>
    %135 = vector.shape_cast %134 : vector<1x32x128xf32> to vector<32x128xf32>
    %c0_65 = arith.constant 0 : index
    %c0_66 = arith.constant 0 : index
    %136 = vector.load %arg14[%c0_65, %c0_66] : memref<1x128xf32, #tpu.memory_space<vmem>>, vector<1x128xf32>
    %137 = vector.broadcast %136 : vector<1x128xf32> to vector<32x128xf32>
    %138 = arith.addf %135, %137 : vector<32x128xf32>
    %c0_67 = arith.constant 0 : index
    %c0_68 = arith.constant 0 : index
    %139 = vector.load %arg15[%c0_67, %c0_68] : memref<1x128xf32, #tpu.memory_space<vmem>>, vector<1x128xf32>
    %c0_69 = arith.constant 0 : index
    %c0_70 = arith.constant 0 : index
    %140 = vector.load %arg18[%c0_69, %c0_70] : memref<1x128xf32, #tpu.memory_space<vmem>>, vector<1x128xf32>
    %cst_71 = arith.constant 9.99999974E-6 : f32
    %141 = vector.broadcast %cst_71 : f32 to vector<1x128xf32>
    %142 = arith.addf %140, %141 : vector<1x128xf32>
    %143 = math.rsqrt %142 : vector<1x128xf32>
    %144 = arith.mulf %139, %143 : vector<1x128xf32>
    %c0_72 = arith.constant 0 : index
    %c0_73 = arith.constant 0 : index
    %145 = vector.load %arg17[%c0_72, %c0_73] : memref<1x128xf32, #tpu.memory_space<vmem>>, vector<1x128xf32>
    %146 = vector.broadcast %145 : vector<1x128xf32> to vector<32x128xf32>
    %147 = arith.subf %138, %146 : vector<32x128xf32>
    %148 = vector.broadcast %144 : vector<1x128xf32> to vector<32x128xf32>
    %149 = arith.mulf %147, %148 : vector<32x128xf32>
    %c0_74 = arith.constant 0 : index
    %c0_75 = arith.constant 0 : index
    %150 = vector.load %arg16[%c0_74, %c0_75] : memref<1x128xf32, #tpu.memory_space<vmem>>, vector<1x128xf32>
    %151 = vector.broadcast %150 : vector<1x128xf32> to vector<32x128xf32>
    %152 = arith.addf %149, %151 : vector<32x128xf32>
    %153 = arith.negf %152 : vector<32x128xf32>
    %154 = math.exp %153 : vector<32x128xf32>
    %cst_76 = arith.constant 1.000000e+00 : f32
    %155 = vector.broadcast %cst_76 : f32 to vector<32x128xf32>
    %156 = arith.addf %155, %154 : vector<32x128xf32>
    %157 = arith.divf %155, %156 : vector<32x128xf32>
    %158 = arith.mulf %152, %157 : vector<32x128xf32>
    %c0_77 = arith.constant 0 : index
    %c0_78 = arith.constant 0 : index
    %159 = vector.load %arg19[%c0_77, %c0_78] : memref<128x128xbf16, #tpu.memory_space<vmem>>, vector<128x128xbf16>
    %160 = arith.truncf %158 : vector<32x128xf32> to vector<32x128xbf16>
    %cst_79 = arith.constant dense<0.000000e+00> : vector<32x128xf32>
    %161 = tpu.matmul %160, %159, %cst_79 {dimension_numbers = #tpu.dot_dimension_numbers<[1], [0], [0], [1], [0, 0, 1, 1], [], []>} : vector<32x128xbf16>, vector<128x128xbf16>, vector<32x128xf32> -> vector<32x128xf32>
    %c0_80 = arith.constant 0 : index
    %c0_81 = arith.constant 0 : index
    %162 = vector.load %arg20[%c0_80, %c0_81] : memref<1x128xf32, #tpu.memory_space<vmem>>, vector<1x128xf32>
    %163 = vector.broadcast %162 : vector<1x128xf32> to vector<32x128xf32>
    %164 = arith.addf %161, %163 : vector<32x128xf32>
    %165 = arith.addf %164, %46 : vector<32x128xf32>
    %c0_82 = arith.constant 0 : index
    %c0_83 = arith.constant 0 : index
    %166 = vector.load %arg21[%c0_82, %c0_83] : memref<1x128xf32, #tpu.memory_space<vmem>>, vector<1x128xf32>
    %c0_84 = arith.constant 0 : index
    %c0_85 = arith.constant 0 : index
    %167 = vector.load %arg22[%c0_84, %c0_85] : memref<1x128xf32, #tpu.memory_space<vmem>>, vector<1x128xf32>
    %cst_86 = arith.constant dense<0.000000e+00> : vector<32xf32>
    %168 = vector.multi_reduction <add>, %165, %cst_86 [1] : vector<32x128xf32> to vector<32xf32>
    %169 = vector.shape_cast %168 : vector<32xf32> to vector<32x1xf32>
    %cst_87 = arith.constant 1.280000e+02 : f32
    %170 = vector.broadcast %cst_87 : f32 to vector<32x1xf32>
    %171 = arith.divf %169, %170 : vector<32x1xf32>
    %172 = vector.broadcast %171 : vector<32x1xf32> to vector<32x128xf32>
    %173 = arith.subf %165, %172 : vector<32x128xf32>
    %174 = arith.mulf %173, %173 : vector<32x128xf32>
    %cst_88 = arith.constant dense<0.000000e+00> : vector<32xf32>
    %175 = vector.multi_reduction <add>, %174, %cst_88 [1] : vector<32x128xf32> to vector<32xf32>
    %176 = vector.shape_cast %175 : vector<32xf32> to vector<32x1xf32>
    %cst_89 = arith.constant 1.280000e+02 : f32
    %177 = vector.broadcast %cst_89 : f32 to vector<32x1xf32>
    %178 = arith.divf %176, %177 : vector<32x1xf32>
    %179 = vector.broadcast %171 : vector<32x1xf32> to vector<32x128xf32>
    %180 = arith.subf %165, %179 : vector<32x128xf32>
    %cst_90 = arith.constant 9.99999974E-6 : f32
    %181 = vector.broadcast %cst_90 : f32 to vector<32x1xf32>
    %182 = arith.addf %178, %181 : vector<32x1xf32>
    %183 = math.rsqrt %182 : vector<32x1xf32>
    %184 = vector.broadcast %183 : vector<32x1xf32> to vector<32x128xf32>
    %185 = arith.mulf %180, %184 : vector<32x128xf32>
    %186 = vector.broadcast %166 : vector<1x128xf32> to vector<32x128xf32>
    %187 = arith.mulf %185, %186 : vector<32x128xf32>
    %188 = vector.broadcast %167 : vector<1x128xf32> to vector<32x128xf32>
    %189 = arith.addf %187, %188 : vector<32x128xf32>
    %190 = arith.truncf %189 : vector<32x128xf32> to vector<32x128xbf16>
    %191 = tpu.iota {dimensions = array<i32: 1>} : vector<1x32xi32>
    %c1_i32 = arith.constant 1 : i32
    %192 = arith.muli %arg0, %c1_i32 : i32
    %c0_i32 = arith.constant 0 : i32
    %193 = arith.addi %192, %c0_i32 : i32
    %194 = arith.index_cast %193 : i32 to index
    %195 = memref.load %arg1[%194] : memref<2xi32, #tpu.memory_space<smem>>
    %196 = vector.broadcast %195 : i32 to vector<1x32xi32>
    %197 = arith.cmpi slt, %191, %196 : vector<1x32xi32>
    %cst_91 = arith.constant 0.000000e+00 : f32
    %cst_92 = arith.constant -1.000000e+30 : f32
    %198 = vector.broadcast %cst_91 : f32 to vector<1x32xf32>
    %199 = vector.broadcast %cst_92 : f32 to vector<1x32xf32>
    %200 = arith.select %197, %198, %199 : vector<1x32xi1>, vector<1x32xf32>
    %c0_93 = arith.constant 0 : index
    %c0_94 = arith.constant 0 : index
    %c0_95 = arith.constant 0 : index
    %201 = vector.load %arg33[%c0_93, %c0_94, %c0_95] : memref<4x128x32xbf16, #tpu.memory_space<vmem>>, vector<1x128x32xbf16>
    %202 = vector.shape_cast %201 : vector<1x128x32xbf16> to vector<128x32xbf16>
    %cst_96 = arith.constant dense<0.000000e+00> : vector<32x32xf32>
    %203 = tpu.matmul %190, %202, %cst_96 {dimension_numbers = #tpu.dot_dimension_numbers<[1], [0], [0], [1], [0, 0, 1, 1], [], []>} : vector<32x128xbf16>, vector<128x32xbf16>, vector<32x32xf32> -> vector<32x32xf32>
    %c0_97 = arith.constant 0 : index
    %c0_98 = arith.constant 0 : index
    %c0_99 = arith.constant 0 : index
    %204 = vector.load %arg36[%c0_97, %c0_98, %c0_99] : memref<4x1x32xf32, #tpu.memory_space<vmem>>, vector<1x1x32xf32>
    %205 = vector.shape_cast %204 : vector<1x1x32xf32> to vector<1x32xf32>
    %206 = vector.broadcast %205 : vector<1x32xf32> to vector<32x32xf32>
    %207 = arith.addf %203, %206 : vector<32x32xf32>
    %208 = arith.truncf %207 : vector<32x32xf32> to vector<32x32xbf16>
    %c0_100 = arith.constant 0 : index
    %c0_101 = arith.constant 0 : index
    %c0_102 = arith.constant 0 : index
    %209 = vector.load %arg34[%c0_100, %c0_101, %c0_102] : memref<4x128x32xbf16, #tpu.memory_space<vmem>>, vector<1x128x32xbf16>
    %210 = vector.shape_cast %209 : vector<1x128x32xbf16> to vector<128x32xbf16>
    %cst_103 = arith.constant dense<0.000000e+00> : vector<32x32xf32>
    %211 = tpu.matmul %190, %210, %cst_103 {dimension_numbers = #tpu.dot_dimension_numbers<[1], [0], [0], [1], [0, 0, 1, 1], [], []>} : vector<32x128xbf16>, vector<128x32xbf16>, vector<32x32xf32> -> vector<32x32xf32>
    %c0_104 = arith.constant 0 : index
    %c0_105 = arith.constant 0 : index
    %c0_106 = arith.constant 0 : index
    %212 = vector.load %arg37[%c0_104, %c0_105, %c0_106] : memref<4x1x32xf32, #tpu.memory_space<vmem>>, vector<1x1x32xf32>
    %213 = vector.shape_cast %212 : vector<1x1x32xf32> to vector<1x32xf32>
    %214 = vector.broadcast %213 : vector<1x32xf32> to vector<32x32xf32>
    %215 = arith.addf %211, %214 : vector<32x32xf32>
    %216 = arith.truncf %215 : vector<32x32xf32> to vector<32x32xbf16>
    %c0_107 = arith.constant 0 : index
    %c0_108 = arith.constant 0 : index
    %c0_109 = arith.constant 0 : index
    %217 = vector.load %arg35[%c0_107, %c0_108, %c0_109] : memref<4x128x32xbf16, #tpu.memory_space<vmem>>, vector<1x128x32xbf16>
    %218 = vector.shape_cast %217 : vector<1x128x32xbf16> to vector<128x32xbf16>
    %cst_110 = arith.constant dense<0.000000e+00> : vector<32x32xf32>
    %219 = tpu.matmul %190, %218, %cst_110 {dimension_numbers = #tpu.dot_dimension_numbers<[1], [0], [0], [1], [0, 0, 1, 1], [], []>} : vector<32x128xbf16>, vector<128x32xbf16>, vector<32x32xf32> -> vector<32x32xf32>
    %c0_111 = arith.constant 0 : index
    %c0_112 = arith.constant 0 : index
    %c0_113 = arith.constant 0 : index
    %220 = vector.load %arg38[%c0_111, %c0_112, %c0_113] : memref<4x1x32xf32, #tpu.memory_space<vmem>>, vector<1x1x32xf32>
    %221 = vector.shape_cast %220 : vector<1x1x32xf32> to vector<1x32xf32>
    %222 = vector.broadcast %221 : vector<1x32xf32> to vector<32x32xf32>
    %223 = arith.addf %219, %222 : vector<32x32xf32>
    %224 = arith.truncf %223 : vector<32x32xf32> to vector<32x32xbf16>
    %cst_114 = arith.constant dense<0.000000e+00> : vector<32x32xf32>
    %225 = tpu.matmul %208, %216, %cst_114 {dimension_numbers = #tpu.dot_dimension_numbers<[1], [1], [0], [0], [0, 0, 1, 0], [], []>} : vector<32x32xbf16>, vector<32x32xbf16>, vector<32x32xf32> -> vector<32x32xf32>
    %226 = vector.broadcast %200 : vector<1x32xf32> to vector<32x32xf32>
    %227 = arith.addf %225, %226 : vector<32x32xf32>
    %cst_115 = arith.constant dense<0xFF800000> : vector<32xf32>
    %228 = vector.multi_reduction <maximumf>, %227, %cst_115 [1] : vector<32x32xf32> to vector<32xf32>
    %229 = vector.shape_cast %228 : vector<32xf32> to vector<32x1xf32>
    %230 = vector.broadcast %229 : vector<32x1xf32> to vector<32x32xf32>
    %231 = arith.subf %227, %230 : vector<32x32xf32>
    %232 = math.exp %231 : vector<32x32xf32>
    %cst_116 = arith.constant dense<0.000000e+00> : vector<32xf32>
    %233 = vector.multi_reduction <add>, %232, %cst_116 [1] : vector<32x32xf32> to vector<32xf32>
    %234 = vector.shape_cast %233 : vector<32xf32> to vector<32x1xf32>
    %235 = tpu.reciprocal %234 {approx = true} : vector<32x1xf32> -> vector<32x1xf32>
    %236 = vector.broadcast %235 : vector<32x1xf32> to vector<32x32xf32>
    %237 = arith.mulf %232, %236 : vector<32x32xf32>
    %238 = arith.truncf %237 : vector<32x32xf32> to vector<32x32xbf16>
    %cst_117 = arith.constant dense<0.000000e+00> : vector<32x32xf32>
    %239 = tpu.matmul %238, %224, %cst_117 {dimension_numbers = #tpu.dot_dimension_numbers<[1], [0], [0], [1], [0, 0, 1, 1], [], []>} : vector<32x32xbf16>, vector<32x32xbf16>, vector<32x32xf32> -> vector<32x32xf32>
    %240 = arith.truncf %239 : vector<32x32xf32> to vector<32x32xbf16>
    %c0_118 = arith.constant 0 : index
    %c0_119 = arith.constant 0 : index
    %241 = vector.load %arg41[%c0_118, %c0_119] : memref<32x128xbf16, #tpu.memory_space<vmem>>, vector<32x32xbf16>
    tpu.vector_store %arg41[%c0_118, %c0_119], %240 {strides = array<i32>} : memref<32x128xbf16, #tpu.memory_space<vmem>>, vector<32x32xbf16>,
    %c1_120 = arith.constant 1 : index
    %c0_121 = arith.constant 0 : index
    %c0_122 = arith.constant 0 : index
    %242 = vector.load %arg33[%c1_120, %c0_121, %c0_122] : memref<4x128x32xbf16, #tpu.memory_space<vmem>>, vector<1x128x32xbf16>
    %243 = vector.shape_cast %242 : vector<1x128x32xbf16> to vector<128x32xbf16>
    %cst_123 = arith.constant dense<0.000000e+00> : vector<32x32xf32>
    %244 = tpu.matmul %190, %243, %cst_123 {dimension_numbers = #tpu.dot_dimension_numbers<[1], [0], [0], [1], [0, 0, 1, 1], [], []>} : vector<32x128xbf16>, vector<128x32xbf16>, vector<32x32xf32> -> vector<32x32xf32>
    %c1_124 = arith.constant 1 : index
    %c0_125 = arith.constant 0 : index
    %c0_126 = arith.constant 0 : index
    %245 = vector.load %arg36[%c1_124, %c0_125, %c0_126] : memref<4x1x32xf32, #tpu.memory_space<vmem>>, vector<1x1x32xf32>
    %246 = vector.shape_cast %245 : vector<1x1x32xf32> to vector<1x32xf32>
    %247 = vector.broadcast %246 : vector<1x32xf32> to vector<32x32xf32>
    %248 = arith.addf %244, %247 : vector<32x32xf32>
    %249 = arith.truncf %248 : vector<32x32xf32> to vector<32x32xbf16>
    %c1_127 = arith.constant 1 : index
    %c0_128 = arith.constant 0 : index
    %c0_129 = arith.constant 0 : index
    %250 = vector.load %arg34[%c1_127, %c0_128, %c0_129] : memref<4x128x32xbf16, #tpu.memory_space<vmem>>, vector<1x128x32xbf16>
    %251 = vector.shape_cast %250 : vector<1x128x32xbf16> to vector<128x32xbf16>
    %cst_130 = arith.constant dense<0.000000e+00> : vector<32x32xf32>
    %252 = tpu.matmul %190, %251, %cst_130 {dimension_numbers = #tpu.dot_dimension_numbers<[1], [0], [0], [1], [0, 0, 1, 1], [], []>} : vector<32x128xbf16>, vector<128x32xbf16>, vector<32x32xf32> -> vector<32x32xf32>
    %c1_131 = arith.constant 1 : index
    %c0_132 = arith.constant 0 : index
    %c0_133 = arith.constant 0 : index
    %253 = vector.load %arg37[%c1_131, %c0_132, %c0_133] : memref<4x1x32xf32, #tpu.memory_space<vmem>>, vector<1x1x32xf32>
    %254 = vector.shape_cast %253 : vector<1x1x32xf32> to vector<1x32xf32>
    %255 = vector.broadcast %254 : vector<1x32xf32> to vector<32x32xf32>
    %256 = arith.addf %252, %255 : vector<32x32xf32>
    %257 = arith.truncf %256 : vector<32x32xf32> to vector<32x32xbf16>
    %c1_134 = arith.constant 1 : index
    %c0_135 = arith.constant 0 : index
    %c0_136 = arith.constant 0 : index
    %258 = vector.load %arg35[%c1_134, %c0_135, %c0_136] : memref<4x128x32xbf16, #tpu.memory_space<vmem>>, vector<1x128x32xbf16>
    %259 = vector.shape_cast %258 : vector<1x128x32xbf16> to vector<128x32xbf16>
    %cst_137 = arith.constant dense<0.000000e+00> : vector<32x32xf32>
    %260 = tpu.matmul %190, %259, %cst_137 {dimension_numbers = #tpu.dot_dimension_numbers<[1], [0], [0], [1], [0, 0, 1, 1], [], []>} : vector<32x128xbf16>, vector<128x32xbf16>, vector<32x32xf32> -> vector<32x32xf32>
    %c1_138 = arith.constant 1 : index
    %c0_139 = arith.constant 0 : index
    %c0_140 = arith.constant 0 : index
    %261 = vector.load %arg38[%c1_138, %c0_139, %c0_140] : memref<4x1x32xf32, #tpu.memory_space<vmem>>, vector<1x1x32xf32>
    %262 = vector.shape_cast %261 : vector<1x1x32xf32> to vector<1x32xf32>
    %263 = vector.broadcast %262 : vector<1x32xf32> to vector<32x32xf32>
    %264 = arith.addf %260, %263 : vector<32x32xf32>
    %265 = arith.truncf %264 : vector<32x32xf32> to vector<32x32xbf16>
    %cst_141 = arith.constant dense<0.000000e+00> : vector<32x32xf32>
    %266 = tpu.matmul %249, %257, %cst_141 {dimension_numbers = #tpu.dot_dimension_numbers<[1], [1], [0], [0], [0, 0, 1, 0], [], []>} : vector<32x32xbf16>, vector<32x32xbf16>, vector<32x32xf32> -> vector<32x32xf32>
    %267 = vector.broadcast %200 : vector<1x32xf32> to vector<32x32xf32>
    %268 = arith.addf %266, %267 : vector<32x32xf32>
    %cst_142 = arith.constant dense<0xFF800000> : vector<32xf32>
    %269 = vector.multi_reduction <maximumf>, %268, %cst_142 [1] : vector<32x32xf32> to vector<32xf32>
    %270 = vector.shape_cast %269 : vector<32xf32> to vector<32x1xf32>
    %271 = vector.broadcast %270 : vector<32x1xf32> to vector<32x32xf32>
    %272 = arith.subf %268, %271 : vector<32x32xf32>
    %273 = math.exp %272 : vector<32x32xf32>
    %cst_143 = arith.constant dense<0.000000e+00> : vector<32xf32>
    %274 = vector.multi_reduction <add>, %273, %cst_143 [1] : vector<32x32xf32> to vector<32xf32>
    %275 = vector.shape_cast %274 : vector<32xf32> to vector<32x1xf32>
    %276 = tpu.reciprocal %275 {approx = true} : vector<32x1xf32> -> vector<32x1xf32>
    %277 = vector.broadcast %276 : vector<32x1xf32> to vector<32x32xf32>
    %278 = arith.mulf %273, %277 : vector<32x32xf32>
    %279 = arith.truncf %278 : vector<32x32xf32> to vector<32x32xbf16>
    %cst_144 = arith.constant dense<0.000000e+00> : vector<32x32xf32>
    %280 = tpu.matmul %279, %265, %cst_144 {dimension_numbers = #tpu.dot_dimension_numbers<[1], [0], [0], [1], [0, 0, 1, 1], [], []>} : vector<32x32xbf16>, vector<32x32xbf16>, vector<32x32xf32> -> vector<32x32xf32>
    %281 = arith.truncf %280 : vector<32x32xf32> to vector<32x32xbf16>
    %c0_145 = arith.constant 0 : index
    %c32 = arith.constant 32 : index
    %282 = vector.load %arg41[%c0_145, %c32] : memref<32x128xbf16, #tpu.memory_space<vmem>>, vector<32x32xbf16>
    tpu.vector_store %arg41[%c0_145, %c32], %281 {strides = array<i32>} : memref<32x128xbf16, #tpu.memory_space<vmem>>, vector<32x32xbf16>,
    %c2_146 = arith.constant 2 : index
    %c0_147 = arith.constant 0 : index
    %c0_148 = arith.constant 0 : index
    %283 = vector.load %arg33[%c2_146, %c0_147, %c0_148] : memref<4x128x32xbf16, #tpu.memory_space<vmem>>, vector<1x128x32xbf16>
    %284 = vector.shape_cast %283 : vector<1x128x32xbf16> to vector<128x32xbf16>
    %cst_149 = arith.constant dense<0.000000e+00> : vector<32x32xf32>
    %285 = tpu.matmul %190, %284, %cst_149 {dimension_numbers = #tpu.dot_dimension_numbers<[1], [0], [0], [1], [0, 0, 1, 1], [], []>} : vector<32x128xbf16>, vector<128x32xbf16>, vector<32x32xf32> -> vector<32x32xf32>
    %c2_150 = arith.constant 2 : index
    %c0_151 = arith.constant 0 : index
    %c0_152 = arith.constant 0 : index
    %286 = vector.load %arg36[%c2_150, %c0_151, %c0_152] : memref<4x1x32xf32, #tpu.memory_space<vmem>>, vector<1x1x32xf32>
    %287 = vector.shape_cast %286 : vector<1x1x32xf32> to vector<1x32xf32>
    %288 = vector.broadcast %287 : vector<1x32xf32> to vector<32x32xf32>
    %289 = arith.addf %285, %288 : vector<32x32xf32>
    %290 = arith.truncf %289 : vector<32x32xf32> to vector<32x32xbf16>
    %c2_153 = arith.constant 2 : index
    %c0_154 = arith.constant 0 : index
    %c0_155 = arith.constant 0 : index
    %291 = vector.load %arg34[%c2_153, %c0_154, %c0_155] : memref<4x128x32xbf16, #tpu.memory_space<vmem>>, vector<1x128x32xbf16>
    %292 = vector.shape_cast %291 : vector<1x128x32xbf16> to vector<128x32xbf16>
    %cst_156 = arith.constant dense<0.000000e+00> : vector<32x32xf32>
    %293 = tpu.matmul %190, %292, %cst_156 {dimension_numbers = #tpu.dot_dimension_numbers<[1], [0], [0], [1], [0, 0, 1, 1], [], []>} : vector<32x128xbf16>, vector<128x32xbf16>, vector<32x32xf32> -> vector<32x32xf32>
    %c2_157 = arith.constant 2 : index
    %c0_158 = arith.constant 0 : index
    %c0_159 = arith.constant 0 : index
    %294 = vector.load %arg37[%c2_157, %c0_158, %c0_159] : memref<4x1x32xf32, #tpu.memory_space<vmem>>, vector<1x1x32xf32>
    %295 = vector.shape_cast %294 : vector<1x1x32xf32> to vector<1x32xf32>
    %296 = vector.broadcast %295 : vector<1x32xf32> to vector<32x32xf32>
    %297 = arith.addf %293, %296 : vector<32x32xf32>
    %298 = arith.truncf %297 : vector<32x32xf32> to vector<32x32xbf16>
    %c2_160 = arith.constant 2 : index
    %c0_161 = arith.constant 0 : index
    %c0_162 = arith.constant 0 : index
    %299 = vector.load %arg35[%c2_160, %c0_161, %c0_162] : memref<4x128x32xbf16, #tpu.memory_space<vmem>>, vector<1x128x32xbf16>
    %300 = vector.shape_cast %299 : vector<1x128x32xbf16> to vector<128x32xbf16>
    %cst_163 = arith.constant dense<0.000000e+00> : vector<32x32xf32>
    %301 = tpu.matmul %190, %300, %cst_163 {dimension_numbers = #tpu.dot_dimension_numbers<[1], [0], [0], [1], [0, 0, 1, 1], [], []>} : vector<32x128xbf16>, vector<128x32xbf16>, vector<32x32xf32> -> vector<32x32xf32>
    %c2_164 = arith.constant 2 : index
    %c0_165 = arith.constant 0 : index
    %c0_166 = arith.constant 0 : index
    %302 = vector.load %arg38[%c2_164, %c0_165, %c0_166] : memref<4x1x32xf32, #tpu.memory_space<vmem>>, vector<1x1x32xf32>
    %303 = vector.shape_cast %302 : vector<1x1x32xf32> to vector<1x32xf32>
    %304 = vector.broadcast %303 : vector<1x32xf32> to vector<32x32xf32>
    %305 = arith.addf %301, %304 : vector<32x32xf32>
    %306 = arith.truncf %305 : vector<32x32xf32> to vector<32x32xbf16>
    %cst_167 = arith.constant dense<0.000000e+00> : vector<32x32xf32>
    %307 = tpu.matmul %290, %298, %cst_167 {dimension_numbers = #tpu.dot_dimension_numbers<[1], [1], [0], [0], [0, 0, 1, 0], [], []>} : vector<32x32xbf16>, vector<32x32xbf16>, vector<32x32xf32> -> vector<32x32xf32>
    %308 = vector.broadcast %200 : vector<1x32xf32> to vector<32x32xf32>
    %309 = arith.addf %307, %308 : vector<32x32xf32>
    %cst_168 = arith.constant dense<0xFF800000> : vector<32xf32>
    %310 = vector.multi_reduction <maximumf>, %309, %cst_168 [1] : vector<32x32xf32> to vector<32xf32>
    %311 = vector.shape_cast %310 : vector<32xf32> to vector<32x1xf32>
    %312 = vector.broadcast %311 : vector<32x1xf32> to vector<32x32xf32>
    %313 = arith.subf %309, %312 : vector<32x32xf32>
    %314 = math.exp %313 : vector<32x32xf32>
    %cst_169 = arith.constant dense<0.000000e+00> : vector<32xf32>
    %315 = vector.multi_reduction <add>, %314, %cst_169 [1] : vector<32x32xf32> to vector<32xf32>
    %316 = vector.shape_cast %315 : vector<32xf32> to vector<32x1xf32>
    %317 = tpu.reciprocal %316 {approx = true} : vector<32x1xf32> -> vector<32x1xf32>
    %318 = vector.broadcast %317 : vector<32x1xf32> to vector<32x32xf32>
    %319 = arith.mulf %314, %318 : vector<32x32xf32>
    %320 = arith.truncf %319 : vector<32x32xf32> to vector<32x32xbf16>
    %cst_170 = arith.constant dense<0.000000e+00> : vector<32x32xf32>
    %321 = tpu.matmul %320, %306, %cst_170 {dimension_numbers = #tpu.dot_dimension_numbers<[1], [0], [0], [1], [0, 0, 1, 1], [], []>} : vector<32x32xbf16>, vector<32x32xbf16>, vector<32x32xf32> -> vector<32x32xf32>
    %322 = arith.truncf %321 : vector<32x32xf32> to vector<32x32xbf16>
    %c0_171 = arith.constant 0 : index
    %c64 = arith.constant 64 : index
    %323 = vector.load %arg41[%c0_171, %c64] : memref<32x128xbf16, #tpu.memory_space<vmem>>, vector<32x32xbf16>
    tpu.vector_store %arg41[%c0_171, %c64], %322 {strides = array<i32>} : memref<32x128xbf16, #tpu.memory_space<vmem>>, vector<32x32xbf16>,
    %c3_172 = arith.constant 3 : index
    %c0_173 = arith.constant 0 : index
    %c0_174 = arith.constant 0 : index
    %324 = vector.load %arg33[%c3_172, %c0_173, %c0_174] : memref<4x128x32xbf16, #tpu.memory_space<vmem>>, vector<1x128x32xbf16>
    %325 = vector.shape_cast %324 : vector<1x128x32xbf16> to vector<128x32xbf16>
    %cst_175 = arith.constant dense<0.000000e+00> : vector<32x32xf32>
    %326 = tpu.matmul %190, %325, %cst_175 {dimension_numbers = #tpu.dot_dimension_numbers<[1], [0], [0], [1], [0, 0, 1, 1], [], []>} : vector<32x128xbf16>, vector<128x32xbf16>, vector<32x32xf32> -> vector<32x32xf32>
    %c3_176 = arith.constant 3 : index
    %c0_177 = arith.constant 0 : index
    %c0_178 = arith.constant 0 : index
    %327 = vector.load %arg36[%c3_176, %c0_177, %c0_178] : memref<4x1x32xf32, #tpu.memory_space<vmem>>, vector<1x1x32xf32>
    %328 = vector.shape_cast %327 : vector<1x1x32xf32> to vector<1x32xf32>
    %329 = vector.broadcast %328 : vector<1x32xf32> to vector<32x32xf32>
    %330 = arith.addf %326, %329 : vector<32x32xf32>
    %331 = arith.truncf %330 : vector<32x32xf32> to vector<32x32xbf16>
    %c3_179 = arith.constant 3 : index
    %c0_180 = arith.constant 0 : index
    %c0_181 = arith.constant 0 : index
    %332 = vector.load %arg34[%c3_179, %c0_180, %c0_181] : memref<4x128x32xbf16, #tpu.memory_space<vmem>>, vector<1x128x32xbf16>
    %333 = vector.shape_cast %332 : vector<1x128x32xbf16> to vector<128x32xbf16>
    %cst_182 = arith.constant dense<0.000000e+00> : vector<32x32xf32>
    %334 = tpu.matmul %190, %333, %cst_182 {dimension_numbers = #tpu.dot_dimension_numbers<[1], [0], [0], [1], [0, 0, 1, 1], [], []>} : vector<32x128xbf16>, vector<128x32xbf16>, vector<32x32xf32> -> vector<32x32xf32>
    %c3_183 = arith.constant 3 : index
    %c0_184 = arith.constant 0 : index
    %c0_185 = arith.constant 0 : index
    %335 = vector.load %arg37[%c3_183, %c0_184, %c0_185] : memref<4x1x32xf32, #tpu.memory_space<vmem>>, vector<1x1x32xf32>
    %336 = vector.shape_cast %335 : vector<1x1x32xf32> to vector<1x32xf32>
    %337 = vector.broadcast %336 : vector<1x32xf32> to vector<32x32xf32>
    %338 = arith.addf %334, %337 : vector<32x32xf32>
    %339 = arith.truncf %338 : vector<32x32xf32> to vector<32x32xbf16>
    %c3_186 = arith.constant 3 : index
    %c0_187 = arith.constant 0 : index
    %c0_188 = arith.constant 0 : index
    %340 = vector.load %arg35[%c3_186, %c0_187, %c0_188] : memref<4x128x32xbf16, #tpu.memory_space<vmem>>, vector<1x128x32xbf16>
    %341 = vector.shape_cast %340 : vector<1x128x32xbf16> to vector<128x32xbf16>
    %cst_189 = arith.constant dense<0.000000e+00> : vector<32x32xf32>
    %342 = tpu.matmul %190, %341, %cst_189 {dimension_numbers = #tpu.dot_dimension_numbers<[1], [0], [0], [1], [0, 0, 1, 1], [], []>} : vector<32x128xbf16>, vector<128x32xbf16>, vector<32x32xf32> -> vector<32x32xf32>
    %c3_190 = arith.constant 3 : index
    %c0_191 = arith.constant 0 : index
    %c0_192 = arith.constant 0 : index
    %343 = vector.load %arg38[%c3_190, %c0_191, %c0_192] : memref<4x1x32xf32, #tpu.memory_space<vmem>>, vector<1x1x32xf32>
    %344 = vector.shape_cast %343 : vector<1x1x32xf32> to vector<1x32xf32>
    %345 = vector.broadcast %344 : vector<1x32xf32> to vector<32x32xf32>
    %346 = arith.addf %342, %345 : vector<32x32xf32>
    %347 = arith.truncf %346 : vector<32x32xf32> to vector<32x32xbf16>
    %cst_193 = arith.constant dense<0.000000e+00> : vector<32x32xf32>
    %348 = tpu.matmul %331, %339, %cst_193 {dimension_numbers = #tpu.dot_dimension_numbers<[1], [1], [0], [0], [0, 0, 1, 0], [], []>} : vector<32x32xbf16>, vector<32x32xbf16>, vector<32x32xf32> -> vector<32x32xf32>
    %349 = vector.broadcast %200 : vector<1x32xf32> to vector<32x32xf32>
    %350 = arith.addf %348, %349 : vector<32x32xf32>
    %cst_194 = arith.constant dense<0xFF800000> : vector<32xf32>
    %351 = vector.multi_reduction <maximumf>, %350, %cst_194 [1] : vector<32x32xf32> to vector<32xf32>
    %352 = vector.shape_cast %351 : vector<32xf32> to vector<32x1xf32>
    %353 = vector.broadcast %352 : vector<32x1xf32> to vector<32x32xf32>
    %354 = arith.subf %350, %353 : vector<32x32xf32>
    %355 = math.exp %354 : vector<32x32xf32>
    %cst_195 = arith.constant dense<0.000000e+00> : vector<32xf32>
    %356 = vector.multi_reduction <add>, %355, %cst_195 [1] : vector<32x32xf32> to vector<32xf32>
    %357 = vector.shape_cast %356 : vector<32xf32> to vector<32x1xf32>
    %358 = tpu.reciprocal %357 {approx = true} : vector<32x1xf32> -> vector<32x1xf32>
    %359 = vector.broadcast %358 : vector<32x1xf32> to vector<32x32xf32>
    %360 = arith.mulf %355, %359 : vector<32x32xf32>
    %361 = arith.truncf %360 : vector<32x32xf32> to vector<32x32xbf16>
    %cst_196 = arith.constant dense<0.000000e+00> : vector<32x32xf32>
    %362 = tpu.matmul %361, %347, %cst_196 {dimension_numbers = #tpu.dot_dimension_numbers<[1], [0], [0], [1], [0, 0, 1, 1], [], []>} : vector<32x32xbf16>, vector<32x32xbf16>, vector<32x32xf32> -> vector<32x32xf32>
    %363 = arith.truncf %362 : vector<32x32xf32> to vector<32x32xbf16>
    %c0_197 = arith.constant 0 : index
    %c96 = arith.constant 96 : index
    %364 = vector.load %arg41[%c0_197, %c96] : memref<32x128xbf16, #tpu.memory_space<vmem>>, vector<32x32xbf16>
    tpu.vector_store %arg41[%c0_197, %c96], %363 {strides = array<i32>} : memref<32x128xbf16, #tpu.memory_space<vmem>>, vector<32x32xbf16>,
    %c0_198 = arith.constant 0 : index
    %c0_199 = arith.constant 0 : index
    %365 = vector.load %arg41[%c0_198, %c0_199] : memref<32x128xbf16, #tpu.memory_space<vmem>>, vector<32x128xbf16>
    %c0_200 = arith.constant 0 : index
    %c0_201 = arith.constant 0 : index
    %366 = vector.load %arg23[%c0_200, %c0_201] : memref<128x128xbf16, #tpu.memory_space<vmem>>, vector<128x128xbf16>
    %cst_202 = arith.constant dense<0.000000e+00> : vector<32x128xf32>
    %367 = tpu.matmul %365, %366, %cst_202 {dimension_numbers = #tpu.dot_dimension_numbers<[1], [0], [0], [1], [0, 0, 1, 1], [], []>} : vector<32x128xbf16>, vector<128x128xbf16>, vector<32x128xf32> -> vector<32x128xf32>
    %c0_203 = arith.constant 0 : index
    %c0_204 = arith.constant 0 : index
    %368 = vector.load %arg24[%c0_203, %c0_204] : memref<1x128xf32, #tpu.memory_space<vmem>>, vector<1x128xf32>
    %369 = vector.broadcast %368 : vector<1x128xf32> to vector<32x128xf32>
    %370 = arith.addf %367, %369 : vector<32x128xf32>
    %371 = arith.addf %370, %165 : vector<32x128xf32>
    %c0_205 = arith.constant 0 : index
    %c0_206 = arith.constant 0 : index
    %372 = vector.load %arg25[%c0_205, %c0_206] : memref<1x128xf32, #tpu.memory_space<vmem>>, vector<1x128xf32>
    %c0_207 = arith.constant 0 : index
    %c0_208 = arith.constant 0 : index
    %373 = vector.load %arg26[%c0_207, %c0_208] : memref<1x128xf32, #tpu.memory_space<vmem>>, vector<1x128xf32>
    %cst_209 = arith.constant dense<0.000000e+00> : vector<32xf32>
    %374 = vector.multi_reduction <add>, %371, %cst_209 [1] : vector<32x128xf32> to vector<32xf32>
    %375 = vector.shape_cast %374 : vector<32xf32> to vector<32x1xf32>
    %cst_210 = arith.constant 1.280000e+02 : f32
    %376 = vector.broadcast %cst_210 : f32 to vector<32x1xf32>
    %377 = arith.divf %375, %376 : vector<32x1xf32>
    %378 = vector.broadcast %377 : vector<32x1xf32> to vector<32x128xf32>
    %379 = arith.subf %371, %378 : vector<32x128xf32>
    %380 = arith.mulf %379, %379 : vector<32x128xf32>
    %cst_211 = arith.constant dense<0.000000e+00> : vector<32xf32>
    %381 = vector.multi_reduction <add>, %380, %cst_211 [1] : vector<32x128xf32> to vector<32xf32>
    %382 = vector.shape_cast %381 : vector<32xf32> to vector<32x1xf32>
    %cst_212 = arith.constant 1.280000e+02 : f32
    %383 = vector.broadcast %cst_212 : f32 to vector<32x1xf32>
    %384 = arith.divf %382, %383 : vector<32x1xf32>
    %385 = vector.broadcast %377 : vector<32x1xf32> to vector<32x128xf32>
    %386 = arith.subf %371, %385 : vector<32x128xf32>
    %cst_213 = arith.constant 9.99999974E-6 : f32
    %387 = vector.broadcast %cst_213 : f32 to vector<32x1xf32>
    %388 = arith.addf %384, %387 : vector<32x1xf32>
    %389 = math.rsqrt %388 : vector<32x1xf32>
    %390 = vector.broadcast %389 : vector<32x1xf32> to vector<32x128xf32>
    %391 = arith.mulf %386, %390 : vector<32x128xf32>
    %392 = vector.broadcast %372 : vector<1x128xf32> to vector<32x128xf32>
    %393 = arith.mulf %391, %392 : vector<32x128xf32>
    %394 = vector.broadcast %373 : vector<1x128xf32> to vector<32x128xf32>
    %395 = arith.addf %393, %394 : vector<32x128xf32>
    %c0_214 = arith.constant 0 : index
    %c0_215 = arith.constant 0 : index
    %396 = vector.load %arg27[%c0_214, %c0_215] : memref<128x256xbf16, #tpu.memory_space<vmem>>, vector<128x256xbf16>
    %397 = arith.truncf %395 : vector<32x128xf32> to vector<32x128xbf16>
    %cst_216 = arith.constant dense<0.000000e+00> : vector<32x256xf32>
    %398 = tpu.matmul %397, %396, %cst_216 {dimension_numbers = #tpu.dot_dimension_numbers<[1], [0], [0], [1], [0, 0, 1, 1], [], []>} : vector<32x128xbf16>, vector<128x256xbf16>, vector<32x256xf32> -> vector<32x256xf32>
    %c0_217 = arith.constant 0 : index
    %c0_218 = arith.constant 0 : index
    %399 = vector.load %arg28[%c0_217, %c0_218] : memref<1x256xf32, #tpu.memory_space<vmem>>, vector<1x256xf32>
    %400 = vector.broadcast %399 : vector<1x256xf32> to vector<32x256xf32>
    %401 = arith.addf %398, %400 : vector<32x256xf32>
    %402 = arith.negf %401 : vector<32x256xf32>
    %403 = math.exp %402 : vector<32x256xf32>
    %cst_219 = arith.constant 1.000000e+00 : f32
    %404 = vector.broadcast %cst_219 : f32 to vector<32x256xf32>
    %405 = arith.addf %404, %403 : vector<32x256xf32>
    %406 = arith.divf %404, %405 : vector<32x256xf32>
    %407 = arith.mulf %401, %406 : vector<32x256xf32>
    %c0_220 = arith.constant 0 : index
    %c0_221 = arith.constant 0 : index
    %408 = vector.load %arg29[%c0_220, %c0_221] : memref<256x128xbf16, #tpu.memory_space<vmem>>, vector<256x128xbf16>
    %409 = arith.truncf %407 : vector<32x256xf32> to vector<32x256xbf16>
    %cst_222 = arith.constant dense<0.000000e+00> : vector<32x128xf32>
    %410 = tpu.matmul %409, %408, %cst_222 {dimension_numbers = #tpu.dot_dimension_numbers<[1], [0], [0], [1], [0, 0, 1, 1], [], []>} : vector<32x256xbf16>, vector<256x128xbf16>, vector<32x128xf32> -> vector<32x128xf32>
    %c0_223 = arith.constant 0 : index
    %c0_224 = arith.constant 0 : index
    %411 = vector.load %arg30[%c0_223, %c0_224] : memref<1x128xf32, #tpu.memory_space<vmem>>, vector<1x128xf32>
    %412 = vector.broadcast %411 : vector<1x128xf32> to vector<32x128xf32>
    %413 = arith.addf %410, %412 : vector<32x128xf32>
    %cst_225 = arith.constant 5.000000e-01 : f32
    %414 = vector.broadcast %cst_225 : f32 to vector<32x128xf32>
    %415 = arith.mulf %414, %413 : vector<32x128xf32>
    %416 = arith.addf %415, %371 : vector<32x128xf32>
    %c0_226 = arith.constant 0 : index
    %c0_227 = arith.constant 0 : index
    %417 = vector.load %arg31[%c0_226, %c0_227] : memref<1x128xf32, #tpu.memory_space<vmem>>, vector<1x128xf32>
    %c0_228 = arith.constant 0 : index
    %c0_229 = arith.constant 0 : index
    %418 = vector.load %arg32[%c0_228, %c0_229] : memref<1x128xf32, #tpu.memory_space<vmem>>, vector<1x128xf32>
    %cst_230 = arith.constant dense<0.000000e+00> : vector<32xf32>
    %419 = vector.multi_reduction <add>, %416, %cst_230 [1] : vector<32x128xf32> to vector<32xf32>
    %420 = vector.shape_cast %419 : vector<32xf32> to vector<32x1xf32>
    %cst_231 = arith.constant 1.280000e+02 : f32
    %421 = vector.broadcast %cst_231 : f32 to vector<32x1xf32>
    %422 = arith.divf %420, %421 : vector<32x1xf32>
    %423 = vector.broadcast %422 : vector<32x1xf32> to vector<32x128xf32>
    %424 = arith.subf %416, %423 : vector<32x128xf32>
    %425 = arith.mulf %424, %424 : vector<32x128xf32>
    %cst_232 = arith.constant dense<0.000000e+00> : vector<32xf32>
    %426 = vector.multi_reduction <add>, %425, %cst_232 [1] : vector<32x128xf32> to vector<32xf32>
    %427 = vector.shape_cast %426 : vector<32xf32> to vector<32x1xf32>
    %cst_233 = arith.constant 1.280000e+02 : f32
    %428 = vector.broadcast %cst_233 : f32 to vector<32x1xf32>
    %429 = arith.divf %427, %428 : vector<32x1xf32>
    %430 = vector.broadcast %422 : vector<32x1xf32> to vector<32x128xf32>
    %431 = arith.subf %416, %430 : vector<32x128xf32>
    %cst_234 = arith.constant 9.99999974E-6 : f32
    %432 = vector.broadcast %cst_234 : f32 to vector<32x1xf32>
    %433 = arith.addf %429, %432 : vector<32x1xf32>
    %434 = math.rsqrt %433 : vector<32x1xf32>
    %435 = vector.broadcast %434 : vector<32x1xf32> to vector<32x128xf32>
    %436 = arith.mulf %431, %435 : vector<32x128xf32>
    %437 = vector.broadcast %417 : vector<1x128xf32> to vector<32x128xf32>
    %438 = arith.mulf %436, %437 : vector<32x128xf32>
    %439 = vector.broadcast %418 : vector<1x128xf32> to vector<32x128xf32>
    %440 = arith.addf %438, %439 : vector<32x128xf32>
    %441 = vector.shape_cast %440 : vector<32x128xf32> to vector<1x32x128xf32>
    %c0_235 = arith.constant 0 : index
    %c0_236 = arith.constant 0 : index
    %c0_237 = arith.constant 0 : index
    %442 = vector.load %arg39[%c0_235, %c0_236, %c0_237] : memref<1x32x128xf32, #tpu.memory_space<vmem>>, vector<1x32x128xf32>
    tpu.vector_store %arg39[%c0_235, %c0_236, %c0_237], %441 {strides = array<i32>} : memref<1x32x128xf32, #tpu.memory_space<vmem>>, vector<1x32x128xf32>,
    return
  }
  func.func @transform_0(%arg0: i32, %arg1: memref<2xi32, #tpu.memory_space<smem>>) -> (i32, i32, i32) {
    %c0_i32 = arith.constant 0 : i32
    %c0_i32_0 = arith.constant 0 : i32
    %c0_i32_1 = arith.constant 0 : i32
    return %arg0, %c0_i32, %c0_i32_0 : i32, i32, i32
  }
  func.func @transform_1(%arg0: i32, %arg1: memref<2xi32, #tpu.memory_space<smem>>) -> (i32, i32) {
    %c0_i32 = arith.constant 0 : i32
    %c0_i32_0 = arith.constant 0 : i32
    %c0_i32_1 = arith.constant 0 : i32
    return %c0_i32, %c0_i32_0 : i32, i32
  }
  func.func @transform_2(%arg0: i32, %arg1: memref<2xi32, #tpu.memory_space<smem>>) -> (i32, i32) {
    %c0_i32 = arith.constant 0 : i32
    %c0_i32_0 = arith.constant 0 : i32
    %c0_i32_1 = arith.constant 0 : i32
    return %c0_i32, %c0_i32_0 : i32, i32
  }
  func.func @transform_3(%arg0: i32, %arg1: memref<2xi32, #tpu.memory_space<smem>>) -> (i32, i32) {
    %c0_i32 = arith.constant 0 : i32
    %c0_i32_0 = arith.constant 0 : i32
    %c0_i32_1 = arith.constant 0 : i32
    return %c0_i32, %c0_i32_0 : i32, i32
  }
  func.func @transform_4(%arg0: i32, %arg1: memref<2xi32, #tpu.memory_space<smem>>) -> (i32, i32) {
    %c0_i32 = arith.constant 0 : i32
    %c0_i32_0 = arith.constant 0 : i32
    %c0_i32_1 = arith.constant 0 : i32
    return %c0_i32, %c0_i32_0 : i32, i32
  }
  func.func @transform_5(%arg0: i32, %arg1: memref<2xi32, #tpu.memory_space<smem>>) -> (i32, i32) {
    %c0_i32 = arith.constant 0 : i32
    %c0_i32_0 = arith.constant 0 : i32
    %c0_i32_1 = arith.constant 0 : i32
    return %c0_i32, %c0_i32_0 : i32, i32
  }
  func.func @transform_6(%arg0: i32, %arg1: memref<2xi32, #tpu.memory_space<smem>>) -> (i32, i32) {
    %c0_i32 = arith.constant 0 : i32
    %c0_i32_0 = arith.constant 0 : i32
    %c0_i32_1 = arith.constant 0 : i32
    return %c0_i32, %c0_i32_0 : i32, i32
  }
  func.func @transform_7(%arg0: i32, %arg1: memref<2xi32, #tpu.memory_space<smem>>) -> (i32, i32) {
    %c0_i32 = arith.constant 0 : i32
    %c0_i32_0 = arith.constant 0 : i32
    %c0_i32_1 = arith.constant 0 : i32
    return %c0_i32, %c0_i32_0 : i32, i32
  }
  func.func @transform_8(%arg0: i32, %arg1: memref<2xi32, #tpu.memory_space<smem>>) -> (i32, i32) {
    %c0_i32 = arith.constant 0 : i32
    %c0_i32_0 = arith.constant 0 : i32
    %c0_i32_1 = arith.constant 0 : i32
    return %c0_i32, %c0_i32_0 : i32, i32
  }
  func.func @transform_9(%arg0: i32, %arg1: memref<2xi32, #tpu.memory_space<smem>>) -> (i32, i32) {
    %c0_i32 = arith.constant 0 : i32
    %c0_i32_0 = arith.constant 0 : i32
    %c0_i32_1 = arith.constant 0 : i32
    return %c0_i32, %c0_i32_0 : i32, i32
  }
  func.func @transform_10(%arg0: i32, %arg1: memref<2xi32, #tpu.memory_space<smem>>) -> (i32, i32) {
    %c0_i32 = arith.constant 0 : i32
    %c0_i32_0 = arith.constant 0 : i32
    %c0_i32_1 = arith.constant 0 : i32
    return %c0_i32, %c0_i32_0 : i32, i32
  }
  func.func @transform_11(%arg0: i32, %arg1: memref<2xi32, #tpu.memory_space<smem>>) -> (i32, i32) {
    %c0_i32 = arith.constant 0 : i32
    %c0_i32_0 = arith.constant 0 : i32
    %c0_i32_1 = arith.constant 0 : i32
    return %c0_i32, %c0_i32_0 : i32, i32
  }
  func.func @transform_12(%arg0: i32, %arg1: memref<2xi32, #tpu.memory_space<smem>>) -> (i32, i32) {
    %c0_i32 = arith.constant 0 : i32
    %c0_i32_0 = arith.constant 0 : i32
    %c0_i32_1 = arith.constant 0 : i32
    return %c0_i32, %c0_i32_0 : i32, i32
  }
  func.func @transform_13(%arg0: i32, %arg1: memref<2xi32, #tpu.memory_space<smem>>) -> (i32, i32) {
    %c0_i32 = arith.constant 0 : i32
    %c0_i32_0 = arith.constant 0 : i32
    %c0_i32_1 = arith.constant 0 : i32
    return %c0_i32, %c0_i32_0 : i32, i32
  }
  func.func @transform_14(%arg0: i32, %arg1: memref<2xi32, #tpu.memory_space<smem>>) -> (i32, i32) {
    %c0_i32 = arith.constant 0 : i32
    %c0_i32_0 = arith.constant 0 : i32
    %c0_i32_1 = arith.constant 0 : i32
    return %c0_i32, %c0_i32_0 : i32, i32
  }
  func.func @transform_15(%arg0: i32, %arg1: memref<2xi32, #tpu.memory_space<smem>>) -> (i32, i32) {
    %c0_i32 = arith.constant 0 : i32
    %c0_i32_0 = arith.constant 0 : i32
    %c0_i32_1 = arith.constant 0 : i32
    return %c0_i32, %c0_i32_0 : i32, i32
  }
  func.func @transform_16(%arg0: i32, %arg1: memref<2xi32, #tpu.memory_space<smem>>) -> (i32, i32) {
    %c0_i32 = arith.constant 0 : i32
    %c0_i32_0 = arith.constant 0 : i32
    %c0_i32_1 = arith.constant 0 : i32
    return %c0_i32, %c0_i32_0 : i32, i32
  }
  func.func @transform_17(%arg0: i32, %arg1: memref<2xi32, #tpu.memory_space<smem>>) -> (i32, i32) {
    %c0_i32 = arith.constant 0 : i32
    %c0_i32_0 = arith.constant 0 : i32
    %c0_i32_1 = arith.constant 0 : i32
    return %c0_i32, %c0_i32_0 : i32, i32
  }
  func.func @transform_18(%arg0: i32, %arg1: memref<2xi32, #tpu.memory_space<smem>>) -> (i32, i32) {
    %c0_i32 = arith.constant 0 : i32
    %c0_i32_0 = arith.constant 0 : i32
    %c0_i32_1 = arith.constant 0 : i32
    return %c0_i32, %c0_i32_0 : i32, i32
  }
  func.func @transform_19(%arg0: i32, %arg1: memref<2xi32, #tpu.memory_space<smem>>) -> (i32, i32) {
    %c0_i32 = arith.constant 0 : i32
    %c0_i32_0 = arith.constant 0 : i32
    %c0_i32_1 = arith.constant 0 : i32
    return %c0_i32, %c0_i32_0 : i32, i32
  }
  func.func @transform_20(%arg0: i32, %arg1: memref<2xi32, #tpu.memory_space<smem>>) -> (i32, i32) {
    %c0_i32 = arith.constant 0 : i32
    %c0_i32_0 = arith.constant 0 : i32
    %c0_i32_1 = arith.constant 0 : i32
    return %c0_i32, %c0_i32_0 : i32, i32
  }
  func.func @transform_21(%arg0: i32, %arg1: memref<2xi32, #tpu.memory_space<smem>>) -> (i32, i32) {
    %c0_i32 = arith.constant 0 : i32
    %c0_i32_0 = arith.constant 0 : i32
    %c0_i32_1 = arith.constant 0 : i32
    return %c0_i32, %c0_i32_0 : i32, i32
  }
  func.func @transform_22(%arg0: i32, %arg1: memref<2xi32, #tpu.memory_space<smem>>) -> (i32, i32) {
    %c0_i32 = arith.constant 0 : i32
    %c0_i32_0 = arith.constant 0 : i32
    %c0_i32_1 = arith.constant 0 : i32
    return %c0_i32, %c0_i32_0 : i32, i32
  }
  func.func @transform_23(%arg0: i32, %arg1: memref<2xi32, #tpu.memory_space<smem>>) -> (i32, i32) {
    %c0_i32 = arith.constant 0 : i32
    %c0_i32_0 = arith.constant 0 : i32
    %c0_i32_1 = arith.constant 0 : i32
    return %c0_i32, %c0_i32_0 : i32, i32
  }
  func.func @transform_24(%arg0: i32, %arg1: memref<2xi32, #tpu.memory_space<smem>>) -> (i32, i32) {
    %c0_i32 = arith.constant 0 : i32
    %c0_i32_0 = arith.constant 0 : i32
    %c0_i32_1 = arith.constant 0 : i32
    return %c0_i32, %c0_i32_0 : i32, i32
  }
  func.func @transform_25(%arg0: i32, %arg1: memref<2xi32, #tpu.memory_space<smem>>) -> (i32, i32) {
    %c0_i32 = arith.constant 0 : i32
    %c0_i32_0 = arith.constant 0 : i32
    %c0_i32_1 = arith.constant 0 : i32
    return %c0_i32, %c0_i32_0 : i32, i32
  }
  func.func @transform_26(%arg0: i32, %arg1: memref<2xi32, #tpu.memory_space<smem>>) -> (i32, i32) {
    %c0_i32 = arith.constant 0 : i32
    %c0_i32_0 = arith.constant 0 : i32
    %c0_i32_1 = arith.constant 0 : i32
    return %c0_i32, %c0_i32_0 : i32, i32
  }
  func.func @transform_27(%arg0: i32, %arg1: memref<2xi32, #tpu.memory_space<smem>>) -> (i32, i32) {
    %c0_i32 = arith.constant 0 : i32
    %c0_i32_0 = arith.constant 0 : i32
    %c0_i32_1 = arith.constant 0 : i32
    return %c0_i32, %c0_i32_0 : i32, i32
  }
  func.func @transform_28(%arg0: i32, %arg1: memref<2xi32, #tpu.memory_space<smem>>) -> (i32, i32) {
    %c0_i32 = arith.constant 0 : i32
    %c0_i32_0 = arith.constant 0 : i32
    %c0_i32_1 = arith.constant 0 : i32
    return %c0_i32, %c0_i32_0 : i32, i32
  }
  func.func @transform_29(%arg0: i32, %arg1: memref<2xi32, #tpu.memory_space<smem>>) -> (i32, i32) {
    %c0_i32 = arith.constant 0 : i32
    %c0_i32_0 = arith.constant 0 : i32
    %c0_i32_1 = arith.constant 0 : i32
    return %c0_i32, %c0_i32_0 : i32, i32
  }
  func.func @transform_30(%arg0: i32, %arg1: memref<2xi32, #tpu.memory_space<smem>>) -> (i32, i32) {
    %c0_i32 = arith.constant 0 : i32
    %c0_i32_0 = arith.constant 0 : i32
    %c0_i32_1 = arith.constant 0 : i32
    return %c0_i32, %c0_i32_0 : i32, i32
  }
  func.func @transform_31(%arg0: i32, %arg1: memref<2xi32, #tpu.memory_space<smem>>) -> (i32, i32, i32) {
    %c0_i32 = arith.constant 0 : i32
    %c0_i32_0 = arith.constant 0 : i32
    %c0_i32_1 = arith.constant 0 : i32
    %c0_i32_2 = arith.constant 0 : i32
    return %c0_i32, %c0_i32_0, %c0_i32_1 : i32, i32, i32
  }
  func.func @transform_32(%arg0: i32, %arg1: memref<2xi32, #tpu.memory_space<smem>>) -> (i32, i32, i32) {
    %c0_i32 = arith.constant 0 : i32
    %c0_i32_0 = arith.constant 0 : i32
    %c0_i32_1 = arith.constant 0 : i32
    %c0_i32_2 = arith.constant 0 : i32
    return %c0_i32, %c0_i32_0, %c0_i32_1 : i32, i32, i32
  }
  func.func @transform_33(%arg0: i32, %arg1: memref<2xi32, #tpu.memory_space<smem>>) -> (i32, i32, i32) {
    %c0_i32 = arith.constant 0 : i32
    %c0_i32_0 = arith.constant 0 : i32
    %c0_i32_1 = arith.constant 0 : i32
    %c0_i32_2 = arith.constant 0 : i32
    return %c0_i32, %c0_i32_0, %c0_i32_1 : i32, i32, i32
  }
  func.func @transform_34(%arg0: i32, %arg1: memref<2xi32, #tpu.memory_space<smem>>) -> (i32, i32, i32) {
    %c0_i32 = arith.constant 0 : i32
    %c0_i32_0 = arith.constant 0 : i32
    %c0_i32_1 = arith.constant 0 : i32
    %c0_i32_2 = arith.constant 0 : i32
    return %c0_i32, %c0_i32_0, %c0_i32_1 : i32, i32, i32
  }
  func.func @transform_35(%arg0: i32, %arg1: memref<2xi32, #tpu.memory_space<smem>>) -> (i32, i32, i32) {
    %c0_i32 = arith.constant 0 : i32
    %c0_i32_0 = arith.constant 0 : i32
    %c0_i32_1 = arith.constant 0 : i32
    %c0_i32_2 = arith.constant 0 : i32
    return %c0_i32, %c0_i32_0, %c0_i32_1 : i32, i32, i32
  }
  func.func @transform_36(%arg0: i32, %arg1: memref<2xi32, #tpu.memory_space<smem>>) -> (i32, i32, i32) {
    %c0_i32 = arith.constant 0 : i32
    %c0_i32_0 = arith.constant 0 : i32
    %c0_i32_1 = arith.constant 0 : i32
    %c0_i32_2 = arith.constant 0 : i32
    return %c0_i32, %c0_i32_0, %c0_i32_1 : i32, i32, i32
  }
  func.func @transform_37(%arg0: i32, %arg1: memref<2xi32, #tpu.memory_space<smem>>) -> (i32, i32, i32) {
    %c0_i32 = arith.constant 0 : i32
    %c0_i32_0 = arith.constant 0 : i32
    %c0_i32_1 = arith.constant 0 : i32
    return %arg0, %c0_i32, %c0_i32_0 : i32, i32, i32
  }
}

</mosaic_0001>

<llo_original>
// kernel: tpu_custom_call.1
$region0: #{tpu_custom_call.1}
  #allocation0 [shape = 'u32[]', space=smem, size = 0x4, offset = 0x4, fixed_abs, tag = 'smem constant byte address 0x4 - core index']
  #allocation1 [shape = 'u32[144,128]{1,0:T(1,128)}', space=vmem, size = 0x12000, scoped, tag = 'internal scratch']
  #allocation2 [shape = 'f32[1,38,128]{2,1,0:T(8,128)}', space=vmem, size = 0x5000, scoped, tag = 'scratch operand']
  #allocation3 [shape = 'bf16[32,128]{1,0:T(8,128)(2,1)}', space=vmem, size = 0x2000, scoped, tag = 'scratch operand']
  #allocation4 [shape = 's32[1]{0}', space=sflag, size = 0x4, scoped, tag = 'scoped memory for tpu_custom_call.1']
  #allocation5 [shape = 'u8[512]{0}', space=smem, size = 0x200, scoped, tag = 'prefetched SMEM operand 0']
  %s0 = inlined_call_operand.smem [shape: u32[39], index: -1, kind: input, shape index: {}]
  %s1 = sld [smem:[%s0]]
  %s2 = scalar_lea.smem %s0, 1
  %s3 = sld [smem:[%s2]]
  %s4 = scalar_lea.smem %s0, 2
  %s5 = sld [smem:[%s4]]
  %s6 = scalar_lea.smem %s0, 3
  %s7 = sld [smem:[%s6]]
  %s8 = scalar_lea.smem %s0, 4
  %s9 = sld [smem:[%s8]]
  %s10 = scalar_lea.smem %s0, 5
  %s11 = sld [smem:[%s10]]
  %s12 = scalar_lea.smem %s0, 6
  %s13 = sld [smem:[%s12]]
  %s14 = scalar_lea.smem %s0, 7
  %s15 = sld [smem:[%s14]]
  %s16 = scalar_lea.smem %s0, 8
  %s17 = sld [smem:[%s16]]
  %s18 = scalar_lea.smem %s0, 9
  %s19 = sld [smem:[%s18]]
  %s20 = scalar_lea.smem %s0, 10
  %s21 = sld [smem:[%s20]]
  %s22 = scalar_lea.smem %s0, 11
  %s23 = sld [smem:[%s22]]
  %s24 = scalar_lea.smem %s0, 12
  %s25 = sld [smem:[%s24]]
  %s26 = scalar_lea.smem %s0, 13
  %s27 = sld [smem:[%s26]]
  %s28 = scalar_lea.smem %s0, 14
  %s29 = sld [smem:[%s28]]
  %s30 = scalar_lea.smem %s0, 15
  %s31 = sld [smem:[%s30]]
  %s32 = scalar_lea.smem %s0, 16
  %s33 = sld [smem:[%s32]]
  %s34 = scalar_lea.smem %s0, 17
  %s35 = sld [smem:[%s34]]
  %s36 = scalar_lea.smem %s0, 18
  %s37 = sld [smem:[%s36]]
  %s38 = scalar_lea.smem %s0, 19
  %s39 = sld [smem:[%s38]]
  %s40 = scalar_lea.smem %s0, 20
  %s41 = sld [smem:[%s40]]
  %s42 = scalar_lea.smem %s0, 21
  %s43 = sld [smem:[%s42]]
  %s44 = scalar_lea.smem %s0, 22
  %s45 = sld [smem:[%s44]]
  %s46 = scalar_lea.smem %s0, 23
  %s47 = sld [smem:[%s46]]
  %s48 = scalar_lea.smem %s0, 24
  %s49 = sld [smem:[%s48]]
  %s50 = scalar_lea.smem %s0, 25
  %s51 = sld [smem:[%s50]]
  %s52 = scalar_lea.smem %s0, 26
  %s53 = sld [smem:[%s52]]
  %s54 = scalar_lea.smem %s0, 27
  %s55 = sld [smem:[%s54]]
  %s56 = scalar_lea.smem %s0, 28
  %s57 = sld [smem:[%s56]]
  %s58 = scalar_lea.smem %s0, 29
  %s59 = sld [smem:[%s58]]
  %s60 = scalar_lea.smem %s0, 30
  %s61 = sld [smem:[%s60]]
  %s62 = scalar_lea.smem %s0, 31
  %s63 = sld [smem:[%s62]]
  %s64 = scalar_lea.smem %s0, 32
  %s65 = sld [smem:[%s64]]
  %s66 = scalar_lea.smem %s0, 33
  %s67 = sld [smem:[%s66]]
  %s68 = scalar_lea.smem %s0, 34
  %s69 = sld [smem:[%s68]]
  %s70 = scalar_lea.smem %s0, 35
  %s71 = sld [smem:[%s70]]
  %s72 = scalar_lea.smem %s0, 36
  %s73 = sld [smem:[%s72]]
  %s74 = scalar_lea.smem %s0, 37
  %s75 = sld [smem:[%s74]]
  %s76 = scalar_lea.smem %s0, 38
  %s77 = sld [smem:[%s76]]
  %s78 = sld [smem:[#allocation0]]
  $region225: #{tpu_custom_call.1} parent=0
    _
  %s80 = ssub.s32 1, %s78
  %s81 = scalar_select 0, %s80, %s78
  %83 = dma.hbm_to_smem %s1, 16, [#allocation5], [#allocation4]
  %84 = dma.done [#allocation4], 16
  %85 = sfence
  $region1: #{tpu_custom_call.1} parent=0
    #allocation6 [shape = 'u8[512]{0}', space=vmem, size = 0x400, scoped, tag = 'input window, operand 2, single buffered']
    #allocation7 [shape = 's32[2]{0}', space=sflag, size = 0x8, scoped, tag = 'scoped memory for tpu_custom_call.1']
    #allocation8 [shape = 's32[2]{0}', space=sflag, size = 0x8, scoped, tag = 'scoped memory for tpu_custom_call.1']
    #allocation9 [shape = 'u8[512]{0}', space=vmem, size = 0x400, scoped, tag = 'input window, operand 3, single buffered']
    #allocation10 [shape = 's32[1]{0}', space=sflag, size = 0x4, scoped, tag = 'scoped memory for tpu_custom_call.1']
    #allocation11 [shape = 'u8[1024]{0}', space=vmem, size = 0x400, scoped, tag = 'input window, operand 5, single buffered']
    #allocation12 [shape = 'u8[512]{0}', space=vmem, size = 0x400, scoped, tag = 'input window, operand 8, single buffered']
    #allocation13 [shape = 's32[1]{0}', space=sflag, size = 0x4, scoped, tag = 'scoped memory for tpu_custom_call.1']
    #allocation14 [shape = 'u8[512]{0}', space=vmem, size = 0x400, scoped, tag = 'input window, operand 9, single buffered']
    #allocation15 [shape = 'u8[1024]{0}', space=vmem, size = 0x400, scoped, tag = 'input window, operand 11, single buffered']
    #allocation16 [shape = 's32[1]{0}', space=sflag, size = 0x4, scoped, tag = 'scoped memory for tpu_custom_call.1']
    #allocation17 [shape = 'u8[512]{0}', space=vmem, size = 0x400, scoped, tag = 'input window, operand 13, single buffered']
    #allocation18 [shape = 'u8[512]{0}', space=vmem, size = 0x400, scoped, tag = 'input window, operand 14, single buffered']
    #allocation19 [shape = 's32[1]{0}', space=sflag, size = 0x4, scoped, tag = 'scoped memory for tpu_custom_call.1']
    #allocation20 [shape = 'u8[512]{0}', space=vmem, size = 0x400, scoped, tag = 'input window, operand 15, single buffered']
    #allocation21 [shape = 'u8[512]{0}', space=vmem, size = 0x400, scoped, tag = 'input window, operand 16, single buffered']
    #allocation22 [shape = 's32[1]{0}', space=sflag, size = 0x4, scoped, tag = 'scoped memory for tpu_custom_call.1']
    #allocation23 [shape = 'u8[512]{0}', space=vmem, size = 0x400, scoped, tag = 'input window, operand 17, single buffered']
    #allocation24 [shape = 'u8[32768]{0}', space=vmem, size = 0x8000, scoped, tag = 'output window, operand 0']
    %86 = vsyncpa [#allocation7], 0
    %87 = vsyncpa [#allocation10], 0
    %88 = vsyncpa [#allocation13], 0
    %89 = vsyncpa [#allocation16], 0
    %90 = vsyncpa [#allocation19], 0
    %91 = vsyncpa [#allocation22], 0
    %92 = vsyncpa [#allocation8], 0
    %s93 = scalar_lea.sflag [#allocation8], 1
    %94 = vsyncpa %s93, 0
    loop: start=0, step=1, limit=4
    $region2: #{tpu_custom_call.1} parent=1 // loop_pre_header
      _
    $region3: #{tpu_custom_call.1} parent=1 // loop_header
      %s96 = sphi 0, %s100
      %p97 = scmp.ge.s32.totalorder %s96, 4
      %s106 = sphi 0, %s108
      %s109 = sphi 0, %s106
      %s110 = sphi 0, %s109
      %s126 = sphi 0, %s110
      %s130 = sphi 0, %s130
      %s132 = sphi 0, %s130
      %s133 = sphi 0, %s132
      %s147 = sphi 0, %s133
      %s151 = sphi 0, %s151
      %s153 = sphi 0, %s151
      %s154 = sphi 0, %s153
      %s168 = sphi 0, %s154
      %s172 = sphi 0, %s172
      %s174 = sphi 0, %s172
      %s175 = sphi 0, %s174
      %s189 = sphi 0, %s175
      %s193 = sphi 0, %s193
      %s195 = sphi 0, %s193
      %s196 = sphi 0, %s195
      %s210 = sphi 0, %s196
      %s214 = sphi 0, %s214
      %s216 = sphi 0, %s214
      %s217 = sphi 0, %s216
      %s231 = sphi 0, %s217
      %s235 = sphi 0, %s235
      %s237 = sphi 0, %s235
      %s238 = sphi 0, %s237
      %s252 = sphi 0, %s238
      %s256 = sphi 0, %s256
      %s258 = sphi 0, %s256
      %s259 = sphi 0, %s258
      %s273 = sphi 0, %s259
      %s277 = sphi 0, %s277
      %s279 = sphi 0, %s277
      %s280 = sphi 0, %s279
      %s294 = sphi 0, %s280
      %s298 = sphi 0, %s298
      %s300 = sphi 0, %s298
      %s301 = sphi 0, %s300
      %s315 = sphi 0, %s301
      %s319 = sphi 0, %s319
      %s321 = sphi 0, %s319
      %s322 = sphi 0, %s321
      %s336 = sphi 0, %s322
      %s340 = sphi 0, %s340
      %s342 = sphi 0, %s340
      %s343 = sphi 0, %s342
      %s357 = sphi 0, %s343
      %s361 = sphi 0, %s361
      %s363 = sphi 0, %s361
      %s364 = sphi 0, %s363
      %s378 = sphi 0, %s364
      %s382 = sphi 0, %s382
      %s384 = sphi 0, %s382
      %s385 = sphi 0, %s384
      %s399 = sphi 0, %s385
      %s403 = sphi 0, %s403
      %s405 = sphi 0, %s403
      %s406 = sphi 0, %s405
      %s420 = sphi 0, %s406
      %s424 = sphi 0, %s424
      %s426 = sphi 0, %s424
      %s427 = sphi 0, %s426
      %s441 = sphi 0, %s427
      %s445 = sphi 0, %s445
      %s447 = sphi 0, %s445
      %s448 = sphi 0, %s447
      %s462 = sphi 0, %s448
      %s466 = sphi 0, %s466
      %s468 = sphi 0, %s466
      %s469 = sphi 0, %s468
      %s483 = sphi 0, %s469
      %s487 = sphi 0, %s487
      %s489 = sphi 0, %s487
      %s490 = sphi 0, %s489
      %s504 = sphi 0, %s490
      %s508 = sphi 0, %s508
      %s510 = sphi 0, %s508
      %s511 = sphi 0, %s510
      %s525 = sphi 0, %s511
      %s529 = sphi 0, %s529
      %s531 = sphi 0, %s529
      %s532 = sphi 0, %s531
      %s546 = sphi 0, %s532
      %s550 = sphi 0, %s550
      %s552 = sphi 0, %s550
      %s553 = sphi 0, %s552
      %s567 = sphi 0, %s553
      %s571 = sphi 0, %s571
      %s573 = sphi 0, %s571
      %s574 = sphi 0, %s573
      %s588 = sphi 0, %s574
      %s592 = sphi 0, %s592
      %s594 = sphi 0, %s592
      %s595 = sphi 0, %s594
      %s609 = sphi 0, %s595
      %s613 = sphi 0, %s613
      %s615 = sphi 0, %s613
      %s616 = sphi 0, %s615
      %s630 = sphi 0, %s616
      %s634 = sphi 0, %s634
      %s636 = sphi 0, %s634
      %s637 = sphi 0, %s636
      %s651 = sphi 0, %s637
      %s655 = sphi 0, %s655
      %s657 = sphi 0, %s655
      %s658 = sphi 0, %s657
      %s672 = sphi 0, %s658
      %s676 = sphi 0, %s676
      %s678 = sphi 0, %s676
      %s679 = sphi 0, %s678
      %s693 = sphi 0, %s679
      %s697 = sphi 0, %s697
      %s699 = sphi 0, %s697
      %s700 = sphi 0, %s699
      %s714 = sphi 0, %s700
      %s718 = sphi 0, %s718
      %s720 = sphi 0, %s718
      %s721 = sphi 0, %s720
      %s735 = sphi 0, %s721
      %s739 = sphi 0, %s739
      %s741 = sphi 0, %s739
      %s742 = sphi 0, %s741
      %s756 = sphi 0, %s742
      %s760 = sphi 0, %s760
      %s762 = sphi 0, %s760
      %s763 = sphi 0, %s762
      %s777 = sphi 0, %s763
      %s781 = sphi 0, %s781
      %s783 = sphi 0, %s781
      %s784 = sphi 0, %s783
      %s798 = sphi 0, %s784
      %s802 = sphi 0, %s802
      %s804 = sphi 0, %s802
      %s805 = sphi 0, %s804
      %s819 = sphi 0, %s805
      %s823 = sphi 0, %s823
      %s825 = sphi 0, %s823
      %s826 = sphi 0, %s825
      %s840 = sphi 0, %s826
      %s844 = sphi 0, %s844
      %s846 = sphi 0, %s844
      %s847 = sphi 0, %s846
      %s861 = sphi 0, %s847
      %s865 = sphi 0, %s865
      %s867 = sphi 0, %s865
      %s868 = sphi 0, %s867
      %s882 = sphi 0, %s868
      %s888 = sphi 0, %s890
      %s891 = sphi 0, %s888
      %s892 = sphi 0, %s891
      %s908 = sphi 0, %s892
    $region4: #{tpu_custom_call.1} parent=1 // loop_header_branch
      %99 = sbr.rel (%p97) target = $region8
    $region5: #{tpu_custom_call.1} parent=1 // loop_body
      %s101 = ssub.s32 %s96, 1
      %s102 = ssub.s32 %s96, 2
      %s103 = sadd.s32 %s96, 1
      %s104 = ssub.s32 %s96, %s103
      %p105 = scmp.eq.s32.totalorder %s104, 0
      %s107 = sadd.s32 %s106, 1
      %s108 = scalar_select %p105, %s106, %s107
      %p111 = pneg %p105
      %p112 = scmp.eq.s32.totalorder %s96, 1
      %p113 = por %p111, %p112
      %p114 = scmp.ne.s32.totalorder %s106, %s109
      %p115 = scmp.eq.s32.totalorder %s96, 0
      %p116 = por %p114, %p115
      %p117 = scmp.ne.s32.totalorder %s106, %s109
      %p118 = scmp.eq.s32.totalorder %s101, 1
      %p119 = por %p117, %p118
      %p120 = scmp.ne.s32.totalorder %s109, %s110
      %p121 = scmp.eq.s32.totalorder %s101, 0
      %p122 = por %p120, %p121
      %p123 = scmp.ne.s32.totalorder %s109, %s110
      %p124 = scmp.eq.s32.totalorder %s102, 1
      %p125 = por %p123, %p124
      %p127 = scmp.ne.s32.totalorder %s110, %s126
      %p128 = scmp.eq.s32.totalorder %s102, 0
      %p129 = por %p127, %p128
      %s131 = sadd.s32 %s130, 1
      %p134 = scmp.eq.s32.totalorder %s96, 1
      %p135 = scmp.ne.s32.totalorder %s130, %s132
      %p136 = scmp.eq.s32.totalorder %s96, 0
      %p137 = por %p135, %p136
      %p138 = scmp.ne.s32.totalorder %s130, %s132
      %p139 = scmp.eq.s32.totalorder %s101, 1
      %p140 = por %p138, %p139
      %p141 = scmp.ne.s32.totalorder %s132, %s133
      %p142 = scmp.eq.s32.totalorder %s101, 0
      %p143 = por %p141, %p142
      %p144 = scmp.ne.s32.totalorder %s132, %s133
      %p145 = scmp.eq.s32.totalorder %s102, 1
      %p146 = por %p144, %p145
      %p148 = scmp.ne.s32.totalorder %s133, %s147
      %p149 = scmp.eq.s32.totalorder %s102, 0
      %p150 = por %p148, %p149
      %s152 = sadd.s32 %s151, 1
      %p155 = scmp.eq.s32.totalorder %s96, 1
      %p156 = scmp.ne.s32.totalorder %s151, %s153
      %p157 = scmp.eq.s32.totalorder %s96, 0
      %p158 = por %p156, %p157
      %p159 = scmp.ne.s32.totalorder %s151, %s153
      %p160 = scmp.eq.s32.totalorder %s101, 1
      %p161 = por %p159, %p160
      %p162 = scmp.ne.s32.totalorder %s153, %s154
      %p163 = scmp.eq.s32.totalorder %s101, 0
      %p164 = por %p162, %p163
      %p165 = scmp.ne.s32.totalorder %s153, %s154
      %p166 = scmp.eq.s32.totalorder %s102, 1
      %p167 = por %p165, %p166
      %p169 = scmp.ne.s32.totalorder %s154, %s168
      %p170 = scmp.eq.s32.totalorder %s102, 0
      %p171 = por %p169, %p170
      %s173 = sadd.s32 %s172, 1
      %p176 = scmp.eq.s32.totalorder %s96, 1
      %p177 = scmp.ne.s32.totalorder %s172, %s174
      %p178 = scmp.eq.s32.totalorder %s96, 0
      %p179 = por %p177, %p178
      %p180 = scmp.ne.s32.totalorder %s172, %s174
      %p181 = scmp.eq.s32.totalorder %s101, 1
      %p182 = por %p180, %p181
      %p183 = scmp.ne.s32.totalorder %s174, %s175
      %p184 = scmp.eq.s32.totalorder %s101, 0
      %p185 = por %p183, %p184
      %p186 = scmp.ne.s32.totalorder %s174, %s175
      %p187 = scmp.eq.s32.totalorder %s102, 1
      %p188 = por %p186, %p187
      %p190 = scmp.ne.s32.totalorder %s175, %s189
      %p191 = scmp.eq.s32.totalorder %s102, 0
      %p192 = por %p190, %p191
      %s194 = sadd.s32 %s193, 1
      %p197 = scmp.eq.s32.totalorder %s96, 1
      %p198 = scmp.ne.s32.totalorder %s193, %s195
      %p199 = scmp.eq.s32.totalorder %s96, 0
      %p200 = por %p198, %p199
      %p201 = scmp.ne.s32.totalorder %s193, %s195
      %p202 = scmp.eq.s32.totalorder %s101, 1
      %p203 = por %p201, %p202
      %p204 = scmp.ne.s32.totalorder %s195, %s196
      %p205 = scmp.eq.s32.totalorder %s101, 0
      %p206 = por %p204, %p205
      %p207 = scmp.ne.s32.totalorder %s195, %s196
      %p208 = scmp.eq.s32.totalorder %s102, 1
      %p209 = por %p207, %p208
      %p211 = scmp.ne.s32.totalorder %s196, %s210
      %p212 = scmp.eq.s32.totalorder %s102, 0
      %p213 = por %p211, %p212
      %s215 = sadd.s32 %s214, 1
      %p218 = scmp.eq.s32.totalorder %s96, 1
      %p219 = scmp.ne.s32.totalorder %s214, %s216
      %p220 = scmp.eq.s32.totalorder %s96, 0
      %p221 = por %p219, %p220
      %p222 = scmp.ne.s32.totalorder %s214, %s216
      %p223 = scmp.eq.s32.totalorder %s101, 1
      %p224 = por %p222, %p223
      %p225 = scmp.ne.s32.totalorder %s216, %s217
      %p226 = scmp.eq.s32.totalorder %s101, 0
      %p227 = por %p225, %p226
      %p228 = scmp.ne.s32.totalorder %s216, %s217
      %p229 = scmp.eq.s32.totalorder %s102, 1
      %p230 = por %p228, %p229
      %p232 = scmp.ne.s32.totalorder %s217, %s231
      %p233 = scmp.eq.s32.totalorder %s102, 0
      %p234 = por %p232, %p233
      %s236 = sadd.s32 %s235, 1
      %p239 = scmp.eq.s32.totalorder %s96, 1
      %p240 = scmp.ne.s32.totalorder %s235, %s237
      %p241 = scmp.eq.s32.totalorder %s96, 0
      %p242 = por %p240, %p241
      %p243 = scmp.ne.s32.totalorder %s235, %s237
      %p244 = scmp.eq.s32.totalorder %s101, 1
      %p245 = por %p243, %p244
      %p246 = scmp.ne.s32.totalorder %s237, %s238
      %p247 = scmp.eq.s32.totalorder %s101, 0
      %p248 = por %p246, %p247
      %p249 = scmp.ne.s32.totalorder %s237, %s238
      %p250 = scmp.eq.s32.totalorder %s102, 1
      %p251 = por %p249, %p250
      %p253 = scmp.ne.s32.totalorder %s238, %s252
      %p254 = scmp.eq.s32.totalorder %s102, 0
      %p255 = por %p253, %p254
      %s257 = sadd.s32 %s256, 1
      %p260 = scmp.eq.s32.totalorder %s96, 1
      %p261 = scmp.ne.s32.totalorder %s256, %s258
      %p262 = scmp.eq.s32.totalorder %s96, 0
      %p263 = por %p261, %p262
      %p264 = scmp.ne.s32.totalorder %s256, %s258
      %p265 = scmp.eq.s32.totalorder %s101, 1
      %p266 = por %p264, %p265
      %p267 = scmp.ne.s32.totalorder %s258, %s259
      %p268 = scmp.eq.s32.totalorder %s101, 0
      %p269 = por %p267, %p268
      %p270 = scmp.ne.s32.totalorder %s258, %s259
      %p271 = scmp.eq.s32.totalorder %s102, 1
      %p272 = por %p270, %p271
      %p274 = scmp.ne.s32.totalorder %s259, %s273
      %p275 = scmp.eq.s32.totalorder %s102, 0
      %p276 = por %p274, %p275
      %s278 = sadd.s32 %s277, 1
      %p281 = scmp.eq.s32.totalorder %s96, 1
      %p282 = scmp.ne.s32.totalorder %s277, %s279
      %p283 = scmp.eq.s32.totalorder %s96, 0
      %p284 = por %p282, %p283
      %p285 = scmp.ne.s32.totalorder %s277, %s279
      %p286 = scmp.eq.s32.totalorder %s101, 1
      %p287 = por %p285, %p286
      %p288 = scmp.ne.s32.totalorder %s279, %s280
      %p289 = scmp.eq.s32.totalorder %s101, 0
      %p290 = por %p288, %p289
      %p291 = scmp.ne.s32.totalorder %s279, %s280
      %p292 = scmp.eq.s32.totalorder %s102, 1
      %p293 = por %p291, %p292
      %p295 = scmp.ne.s32.totalorder %s280, %s294
      %p296 = scmp.eq.s32.totalorder %s102, 0
      %p297 = por %p295, %p296
      %s299 = sadd.s32 %s298, 1
      %p302 = scmp.eq.s32.totalorder %s96, 1
      %p303 = scmp.ne.s32.totalorder %s298, %s300
      %p304 = scmp.eq.s32.totalorder %s96, 0
      %p305 = por %p303, %p304
      %p306 = scmp.ne.s32.totalorder %s298, %s300
      %p307 = scmp.eq.s32.totalorder %s101, 1
      %p308 = por %p306, %p307
      %p309 = scmp.ne.s32.totalorder %s300, %s301
      %p310 = scmp.eq.s32.totalorder %s101, 0
      %p311 = por %p309, %p310
      %p312 = scmp.ne.s32.totalorder %s300, %s301
      %p313 = scmp.eq.s32.totalorder %s102, 1
      %p314 = por %p312, %p313
      %p316 = scmp.ne.s32.totalorder %s301, %s315
      %p317 = scmp.eq.s32.totalorder %s102, 0
      %p318 = por %p316, %p317
      %s320 = sadd.s32 %s319, 1
      %p323 = scmp.eq.s32.totalorder %s96, 1
      %p324 = scmp.ne.s32.totalorder %s319, %s321
      %p325 = scmp.eq.s32.totalorder %s96, 0
      %p326 = por %p324, %p325
      %p327 = scmp.ne.s32.totalorder %s319, %s321
      %p328 = scmp.eq.s32.totalorder %s101, 1
      %p329 = por %p327, %p328
      %p330 = scmp.ne.s32.totalorder %s321, %s322
      %p331 = scmp.eq.s32.totalorder %s101, 0
      %p332 = por %p330, %p331
      %p333 = scmp.ne.s32.totalorder %s321, %s322
      %p334 = scmp.eq.s32.totalorder %s102, 1
      %p335 = por %p333, %p334
      %p337 = scmp.ne.s32.totalorder %s322, %s336
      %p338 = scmp.eq.s32.totalorder %s102, 0
      %p339 = por %p337, %p338
      %s341 = sadd.s32 %s340, 1
      %p344 = scmp.eq.s32.totalorder %s96, 1
      %p345 = scmp.ne.s32.totalorder %s340, %s342
      %p346 = scmp.eq.s32.totalorder %s96, 0
      %p347 = por %p345, %p346
      %p348 = scmp.ne.s32.totalorder %s340, %s342
      %p349 = scmp.eq.s32.totalorder %s101, 1
      %p350 = por %p348, %p349
      %p351 = scmp.ne.s32.totalorder %s342, %s343
      %p352 = scmp.eq.s32.totalorder %s101, 0
      %p353 = por %p351, %p352
      %p354 = scmp.ne.s32.totalorder %s342, %s343
      %p355 = scmp.eq.s32.totalorder %s102, 1
      %p356 = por %p354, %p355
      %p358 = scmp.ne.s32.totalorder %s343, %s357
      %p359 = scmp.eq.s32.totalorder %s102, 0
      %p360 = por %p358, %p359
      %s362 = sadd.s32 %s361, 1
      %p365 = scmp.eq.s32.totalorder %s96, 1
      %p366 = scmp.ne.s32.totalorder %s361, %s363
      %p367 = scmp.eq.s32.totalorder %s96, 0
      %p368 = por %p366, %p367
      %p369 = scmp.ne.s32.totalorder %s361, %s363
      %p370 = scmp.eq.s32.totalorder %s101, 1
      %p371 = por %p369, %p370
      %p372 = scmp.ne.s32.totalorder %s363, %s364
      %p373 = scmp.eq.s32.totalorder %s101, 0
      %p374 = por %p372, %p373
      %p375 = scmp.ne.s32.totalorder %s363, %s364
      %p376 = scmp.eq.s32.totalorder %s102, 1
      %p377 = por %p375, %p376
      %p379 = scmp.ne.s32.totalorder %s364, %s378
      %p380 = scmp.eq.s32.totalorder %s102, 0
      %p381 = por %p379, %p380
      %s383 = sadd.s32 %s382, 1
      %p386 = scmp.eq.s32.totalorder %s96, 1
      %p387 = scmp.ne.s32.totalorder %s382, %s384
      %p388 = scmp.eq.s32.totalorder %s96, 0
      %p389 = por %p387, %p388
      %p390 = scmp.ne.s32.totalorder %s382, %s384
      %p391 = scmp.eq.s32.totalorder %s101, 1
      %p392 = por %p390, %p391
      %p393 = scmp.ne.s32.totalorder %s384, %s385
      %p394 = scmp.eq.s32.totalorder %s101, 0
      %p395 = por %p393, %p394
      %p396 = scmp.ne.s32.totalorder %s384, %s385
      %p397 = scmp.eq.s32.totalorder %s102, 1
      %p398 = por %p396, %p397
      %p400 = scmp.ne.s32.totalorder %s385, %s399
      %p401 = scmp.eq.s32.totalorder %s102, 0
      %p402 = por %p400, %p401
      %s404 = sadd.s32 %s403, 1
      %p407 = scmp.eq.s32.totalorder %s96, 1
      %p408 = scmp.ne.s32.totalorder %s403, %s405
      %p409 = scmp.eq.s32.totalorder %s96, 0
      %p410 = por %p408, %p409
      %p411 = scmp.ne.s32.totalorder %s403, %s405
      %p412 = scmp.eq.s32.totalorder %s101, 1
      %p413 = por %p411, %p412
      %p414 = scmp.ne.s32.totalorder %s405, %s406
      %p415 = scmp.eq.s32.totalorder %s101, 0
      %p416 = por %p414, %p415
      %p417 = scmp.ne.s32.totalorder %s405, %s406
      %p418 = scmp.eq.s32.totalorder %s102, 1
      %p419 = por %p417, %p418
      %p421 = scmp.ne.s32.totalorder %s406, %s420
      %p422 = scmp.eq.s32.totalorder %s102, 0
      %p423 = por %p421, %p422
      %s425 = sadd.s32 %s424, 1
      %p428 = scmp.eq.s32.totalorder %s96, 1
      %p429 = scmp.ne.s32.totalorder %s424, %s426
      %p430 = scmp.eq.s32.totalorder %s96, 0
      %p431 = por %p429, %p430
      %p432 = scmp.ne.s32.totalorder %s424, %s426
      %p433 = scmp.eq.s32.totalorder %s101, 1
      %p434 = por %p432, %p433
      %p435 = scmp.ne.s32.totalorder %s426, %s427
      %p436 = scmp.eq.s32.totalorder %s101, 0
      %p437 = por %p435, %p436
      %p438 = scmp.ne.s32.totalorder %s426, %s427
      %p439 = scmp.eq.s32.totalorder %s102, 1
      %p440 = por %p438, %p439
      %p442 = scmp.ne.s32.totalorder %s427, %s441
      %p443 = scmp.eq.s32.totalorder %s102, 0
      %p444 = por %p442, %p443
      %s446 = sadd.s32 %s445, 1
      %p449 = scmp.eq.s32.totalorder %s96, 1
      %p450 = scmp.ne.s32.totalorder %s445, %s447
      %p451 = scmp.eq.s32.totalorder %s96, 0
      %p452 = por %p450, %p451
      %p453 = scmp.ne.s32.totalorder %s445, %s447
      %p454 = scmp.eq.s32.totalorder %s101, 1
      %p455 = por %p453, %p454
      %p456 = scmp.ne.s32.totalorder %s447, %s448
      %p457 = scmp.eq.s32.totalorder %s101, 0
      %p458 = por %p456, %p457
      %p459 = scmp.ne.s32.totalorder %s447, %s448
      %p460 = scmp.eq.s32.totalorder %s102, 1
      %p461 = por %p459, %p460
      %p463 = scmp.ne.s32.totalorder %s448, %s462
      %p464 = scmp.eq.s32.totalorder %s102, 0
      %p465 = por %p463, %p464
      %s467 = sadd.s32 %s466, 1
      %p470 = scmp.eq.s32.totalorder %s96, 1
      %p471 = scmp.ne.s32.totalorder %s466, %s468
      %p472 = scmp.eq.s32.totalorder %s96, 0
      %p473 = por %p471, %p472
      %p474 = scmp.ne.s32.totalorder %s466, %s468
      %p475 = scmp.eq.s32.totalorder %s101, 1
      %p476 = por %p474, %p475
      %p477 = scmp.ne.s32.totalorder %s468, %s469
      %p478 = scmp.eq.s32.totalorder %s101, 0
      %p479 = por %p477, %p478
      %p480 = scmp.ne.s32.totalorder %s468, %s469
      %p481 = scmp.eq.s32.totalorder %s102, 1
      %p482 = por %p480, %p481
      %p484 = scmp.ne.s32.totalorder %s469, %s483
      %p485 = scmp.eq.s32.totalorder %s102, 0
      %p486 = por %p484, %p485
      %s488 = sadd.s32 %s487, 1
      %p491 = scmp.eq.s32.totalorder %s96, 1
      %p492 = scmp.ne.s32.totalorder %s487, %s489
      %p493 = scmp.eq.s32.totalorder %s96, 0
      %p494 = por %p492, %p493
      %p495 = scmp.ne.s32.totalorder %s487, %s489
      %p496 = scmp.eq.s32.totalorder %s101, 1
      %p497 = por %p495, %p496
      %p498 = scmp.ne.s32.totalorder %s489, %s490
      %p499 = scmp.eq.s32.totalorder %s101, 0
      %p500 = por %p498, %p499
      %p501 = scmp.ne.s32.totalorder %s489, %s490
      %p502 = scmp.eq.s32.totalorder %s102, 1
      %p503 = por %p501, %p502
      %p505 = scmp.ne.s32.totalorder %s490, %s504
      %p506 = scmp.eq.s32.totalorder %s102, 0
      %p507 = por %p505, %p506
      %s509 = sadd.s32 %s508, 1
      %p512 = scmp.eq.s32.totalorder %s96, 1
      %p513 = scmp.ne.s32.totalorder %s508, %s510
      %p514 = scmp.eq.s32.totalorder %s96, 0
      %p515 = por %p513, %p514
      %p516 = scmp.ne.s32.totalorder %s508, %s510
      %p517 = scmp.eq.s32.totalorder %s101, 1
      %p518 = por %p516, %p517
      %p519 = scmp.ne.s32.totalorder %s510, %s511
      %p520 = scmp.eq.s32.totalorder %s101, 0
      %p521 = por %p519, %p520
      %p522 = scmp.ne.s32.totalorder %s510, %s511
      %p523 = scmp.eq.s32.totalorder %s102, 1
      %p524 = por %p522, %p523
      %p526 = scmp.ne.s32.totalorder %s511, %s525
      %p527 = scmp.eq.s32.totalorder %s102, 0
      %p528 = por %p526, %p527
      %s530 = sadd.s32 %s529, 1
      %p533 = scmp.eq.s32.totalorder %s96, 1
      %p534 = scmp.ne.s32.totalorder %s529, %s531
      %p535 = scmp.eq.s32.totalorder %s96, 0
      %p536 = por %p534, %p535
      %p537 = scmp.ne.s32.totalorder %s529, %s531
      %p538 = scmp.eq.s32.totalorder %s101, 1
      %p539 = por %p537, %p538
      %p540 = scmp.ne.s32.totalorder %s531, %s532
      %p541 = scmp.eq.s32.totalorder %s101, 0
      %p542 = por %p540, %p541
      %p543 = scmp.ne.s32.totalorder %s531, %s532
      %p544 = scmp.eq.s32.totalorder %s102, 1
      %p545 = por %p543, %p544
      %p547 = scmp.ne.s32.totalorder %s532, %s546
      %p548 = scmp.eq.s32.totalorder %s102, 0
      %p549 = por %p547, %p548
      %s551 = sadd.s32 %s550, 1
      %p554 = scmp.eq.s32.totalorder %s96, 1
      %p555 = scmp.ne.s32.totalorder %s550, %s552
      %p556 = scmp.eq.s32.totalorder %s96, 0
      %p557 = por %p555, %p556
      %p558 = scmp.ne.s32.totalorder %s550, %s552
      %p559 = scmp.eq.s32.totalorder %s101, 1
      %p560 = por %p558, %p559
      %p561 = scmp.ne.s32.totalorder %s552, %s553
      %p562 = scmp.eq.s32.totalorder %s101, 0
      %p563 = por %p561, %p562
      %p564 = scmp.ne.s32.totalorder %s552, %s553
      %p565 = scmp.eq.s32.totalorder %s102, 1
      %p566 = por %p564, %p565
      %p568 = scmp.ne.s32.totalorder %s553, %s567
      %p569 = scmp.eq.s32.totalorder %s102, 0
      %p570 = por %p568, %p569
      %s572 = sadd.s32 %s571, 1
      %p575 = scmp.eq.s32.totalorder %s96, 1
      %p576 = scmp.ne.s32.totalorder %s571, %s573
      %p577 = scmp.eq.s32.totalorder %s96, 0
      %p578 = por %p576, %p577
      %p579 = scmp.ne.s32.totalorder %s571, %s573
      %p580 = scmp.eq.s32.totalorder %s101, 1
      %p581 = por %p579, %p580
      %p582 = scmp.ne.s32.totalorder %s573, %s574
      %p583 = scmp.eq.s32.totalorder %s101, 0
      %p584 = por %p582, %p583
      %p585 = scmp.ne.s32.totalorder %s573, %s574
      %p586 = scmp.eq.s32.totalorder %s102, 1
      %p587 = por %p585, %p586
      %p589 = scmp.ne.s32.totalorder %s574, %s588
      %p590 = scmp.eq.s32.totalorder %s102, 0
      %p591 = por %p589, %p590
      %s593 = sadd.s32 %s592, 1
      %p596 = scmp.eq.s32.totalorder %s96, 1
      %p597 = scmp.ne.s32.totalorder %s592, %s594
      %p598 = scmp.eq.s32.totalorder %s96, 0
      %p599 = por %p597, %p598
      %p600 = scmp.ne.s32.totalorder %s592, %s594
      %p601 = scmp.eq.s32.totalorder %s101, 1
      %p602 = por %p600, %p601
      %p603 = scmp.ne.s32.totalorder %s594, %s595
      %p604 = scmp.eq.s32.totalorder %s101, 0
      %p605 = por %p603, %p604
      %p606 = scmp.ne.s32.totalorder %s594, %s595
      %p607 = scmp.eq.s32.totalorder %s102, 1
      %p608 = por %p606, %p607
      %p610 = scmp.ne.s32.totalorder %s595, %s609
      %p611 = scmp.eq.s32.totalorder %s102, 0
      %p612 = por %p610, %p611
      %s614 = sadd.s32 %s613, 1
      %p617 = scmp.eq.s32.totalorder %s96, 1
      %p618 = scmp.ne.s32.totalorder %s613, %s615
      %p619 = scmp.eq.s32.totalorder %s96, 0
      %p620 = por %p618, %p619
      %p621 = scmp.ne.s32.totalorder %s613, %s615
      %p622 = scmp.eq.s32.totalorder %s101, 1
      %p623 = por %p621, %p622
      %p624 = scmp.ne.s32.totalorder %s615, %s616
      %p625 = scmp.eq.s32.totalorder %s101, 0
      %p626 = por %p624, %p625
      %p627 = scmp.ne.s32.totalorder %s615, %s616
      %p628 = scmp.eq.s32.totalorder %s102, 1
      %p629 = por %p627, %p628
      %p631 = scmp.ne.s32.totalorder %s616, %s630
      %p632 = scmp.eq.s32.totalorder %s102, 0
      %p633 = por %p631, %p632
      %s635 = sadd.s32 %s634, 1
      %p638 = scmp.eq.s32.totalorder %s96, 1
      %p639 = scmp.ne.s32.totalorder %s634, %s636
      %p640 = scmp.eq.s32.totalorder %s96, 0
      %p641 = por %p639, %p640
      %p642 = scmp.ne.s32.totalorder %s634, %s636
      %p643 = scmp.eq.s32.totalorder %s101, 1
      %p644 = por %p642, %p643
      %p645 = scmp.ne.s32.totalorder %s636, %s637
      %p646 = scmp.eq.s32.totalorder %s101, 0
      %p647 = por %p645, %p646
      %p648 = scmp.ne.s32.totalorder %s636, %s637
      %p649 = scmp.eq.s32.totalorder %s102, 1
      %p650 = por %p648, %p649
      %p652 = scmp.ne.s32.totalorder %s637, %s651
      %p653 = scmp.eq.s32.totalorder %s102, 0
      %p654 = por %p652, %p653
      %s656 = sadd.s32 %s655, 1
      %p659 = scmp.eq.s32.totalorder %s96, 1
      %p660 = scmp.ne.s32.totalorder %s655, %s657
      %p661 = scmp.eq.s32.totalorder %s96, 0
      %p662 = por %p660, %p661
      %p663 = scmp.ne.s32.totalorder %s655, %s657
      %p664 = scmp.eq.s32.totalorder %s101, 1
      %p665 = por %p663, %p664
      %p666 = scmp.ne.s32.totalorder %s657, %s658
      %p667 = scmp.eq.s32.totalorder %s101, 0
      %p668 = por %p666, %p667
      %p669 = scmp.ne.s32.totalorder %s657, %s658
      %p670 = scmp.eq.s32.totalorder %s102, 1
      %p671 = por %p669, %p670
      %p673 = scmp.ne.s32.totalorder %s658, %s672
      %p674 = scmp.eq.s32.totalorder %s102, 0
      %p675 = por %p673, %p674
      %s677 = sadd.s32 %s676, 1
      %p680 = scmp.eq.s32.totalorder %s96, 1
      %p681 = scmp.ne.s32.totalorder %s676, %s678
      %p682 = scmp.eq.s32.totalorder %s96, 0
      %p683 = por %p681, %p682
      %p684 = scmp.ne.s32.totalorder %s676, %s678
      %p685 = scmp.eq.s32.totalorder %s101, 1
      %p686 = por %p684, %p685
      %p687 = scmp.ne.s32.totalorder %s678, %s679
      %p688 = scmp.eq.s32.totalorder %s101, 0
      %p689 = por %p687, %p688
      %p690 = scmp.ne.s32.totalorder %s678, %s679
      %p691 = scmp.eq.s32.totalorder %s102, 1
      %p692 = por %p690, %p691
      %p694 = scmp.ne.s32.totalorder %s679, %s693
      %p695 = scmp.eq.s32.totalorder %s102, 0
      %p696 = por %p694, %p695
      %s698 = sadd.s32 %s697, 1
      %p701 = scmp.eq.s32.totalorder %s96, 1
      %p702 = scmp.ne.s32.totalorder %s697, %s699
      %p703 = scmp.eq.s32.totalorder %s96, 0
      %p704 = por %p702, %p703
      %p705 = scmp.ne.s32.totalorder %s697, %s699
      %p706 = scmp.eq.s32.totalorder %s101, 1
      %p707 = por %p705, %p706
      %p708 = scmp.ne.s32.totalorder %s699, %s700
      %p709 = scmp.eq.s32.totalorder %s101, 0
      %p710 = por %p708, %p709
      %p711 = scmp.ne.s32.totalorder %s699, %s700
      %p712 = scmp.eq.s32.totalorder %s102, 1
      %p713 = por %p711, %p712
      %p715 = scmp.ne.s32.totalorder %s700, %s714
      %p716 = scmp.eq.s32.totalorder %s102, 0
      %p717 = por %p715, %p716
      %s719 = sadd.s32 %s718, 1
      %p722 = scmp.eq.s32.totalorder %s96, 1
      %p723 = scmp.ne.s32.totalorder %s718, %s720
      %p724 = scmp.eq.s32.totalorder %s96, 0
      %p725 = por %p723, %p724
      %p726 = scmp.ne.s32.totalorder %s718, %s720
      %p727 = scmp.eq.s32.totalorder %s101, 1
      %p728 = por %p726, %p727
      %p729 = scmp.ne.s32.totalorder %s720, %s721
      %p730 = scmp.eq.s32.totalorder %s101, 0
      %p731 = por %p729, %p730
      %p732 = scmp.ne.s32.totalorder %s720, %s721
      %p733 = scmp.eq.s32.totalorder %s102, 1
      %p734 = por %p732, %p733
      %p736 = scmp.ne.s32.totalorder %s721, %s735
      %p737 = scmp.eq.s32.totalorder %s102, 0
      %p738 = por %p736, %p737
      %s740 = sadd.s32 %s739, 1
      %p743 = scmp.eq.s32.totalorder %s96, 1
      %p744 = scmp.ne.s32.totalorder %s739, %s741
      %p745 = scmp.eq.s32.totalorder %s96, 0
      %p746 = por %p744, %p745
      %p747 = scmp.ne.s32.totalorder %s739, %s741
      %p748 = scmp.eq.s32.totalorder %s101, 1
      %p749 = por %p747, %p748
      %p750 = scmp.ne.s32.totalorder %s741, %s742
      %p751 = scmp.eq.s32.totalorder %s101, 0
      %p752 = por %p750, %p751
      %p753 = scmp.ne.s32.totalorder %s741, %s742
      %p754 = scmp.eq.s32.totalorder %s102, 1
      %p755 = por %p753, %p754
      %p757 = scmp.ne.s32.totalorder %s742, %s756
      %p758 = scmp.eq.s32.totalorder %s102, 0
      %p759 = por %p757, %p758
      %s761 = sadd.s32 %s760, 1
      %p764 = scmp.eq.s32.totalorder %s96, 1
      %p765 = scmp.ne.s32.totalorder %s760, %s762
      %p766 = scmp.eq.s32.totalorder %s96, 0
      %p767 = por %p765, %p766
      %p768 = scmp.ne.s32.totalorder %s760, %s762
      %p769 = scmp.eq.s32.totalorder %s101, 1
      %p770 = por %p768, %p769
      %p771 = scmp.ne.s32.totalorder %s762, %s763
      %p772 = scmp.eq.s32.totalorder %s101, 0
      %p773 = por %p771, %p772
      %p774 = scmp.ne.s32.totalorder %s762, %s763
      %p775 = scmp.eq.s32.totalorder %s102, 1
      %p776 = por %p774, %p775
      %p778 = scmp.ne.s32.totalorder %s763, %s777
      %p779 = scmp.eq.s32.totalorder %s102, 0
      %p780 = por %p778, %p779
      %s782 = sadd.s32 %s781, 1
      %p785 = scmp.eq.s32.totalorder %s96, 1
      %p786 = scmp.ne.s32.totalorder %s781, %s783
      %p787 = scmp.eq.s32.totalorder %s96, 0
      %p788 = por %p786, %p787
      %p789 = scmp.ne.s32.totalorder %s781, %s783
      %p790 = scmp.eq.s32.totalorder %s101, 1
      %p791 = por %p789, %p790
      %p792 = scmp.ne.s32.totalorder %s783, %s784
      %p793 = scmp.eq.s32.totalorder %s101, 0
      %p794 = por %p792, %p793
      %p795 = scmp.ne.s32.totalorder %s783, %s784
      %p796 = scmp.eq.s32.totalorder %s102, 1
      %p797 = por %p795, %p796
      %p799 = scmp.ne.s32.totalorder %s784, %s798
      %p800 = scmp.eq.s32.totalorder %s102, 0
      %p801 = por %p799, %p800
      %s803 = sadd.s32 %s802, 1
      %p806 = scmp.eq.s32.totalorder %s96, 1
      %p807 = scmp.ne.s32.totalorder %s802, %s804
      %p808 = scmp.eq.s32.totalorder %s96, 0
      %p809 = por %p807, %p808
      %p810 = scmp.ne.s32.totalorder %s802, %s804
      %p811 = scmp.eq.s32.totalorder %s101, 1
      %p812 = por %p810, %p811
      %p813 = scmp.ne.s32.totalorder %s804, %s805
      %p814 = scmp.eq.s32.totalorder %s101, 0
      %p815 = por %p813, %p814
      %p816 = scmp.ne.s32.totalorder %s804, %s805
      %p817 = scmp.eq.s32.totalorder %s102, 1
      %p818 = por %p816, %p817
      %p820 = scmp.ne.s32.totalorder %s805, %s819
      %p821 = scmp.eq.s32.totalorder %s102, 0
      %p822 = por %p820, %p821
      %s824 = sadd.s32 %s823, 1
      %p827 = scmp.eq.s32.totalorder %s96, 1
      %p828 = scmp.ne.s32.totalorder %s823, %s825
      %p829 = scmp.eq.s32.totalorder %s96, 0
      %p830 = por %p828, %p829
      %p831 = scmp.ne.s32.totalorder %s823, %s825
      %p832 = scmp.eq.s32.totalorder %s101, 1
      %p833 = por %p831, %p832
      %p834 = scmp.ne.s32.totalorder %s825, %s826
      %p835 = scmp.eq.s32.totalorder %s101, 0
      %p836 = por %p834, %p835
      %p837 = scmp.ne.s32.totalorder %s825, %s826
      %p838 = scmp.eq.s32.totalorder %s102, 1
      %p839 = por %p837, %p838
      %p841 = scmp.ne.s32.totalorder %s826, %s840
      %p842 = scmp.eq.s32.totalorder %s102, 0
      %p843 = por %p841, %p842
      %s845 = sadd.s32 %s844, 1
      %p848 = scmp.eq.s32.totalorder %s96, 1
      %p849 = scmp.ne.s32.totalorder %s844, %s846
      %p850 = scmp.eq.s32.totalorder %s96, 0
      %p851 = por %p849, %p850
      %p852 = scmp.ne.s32.totalorder %s844, %s846
      %p853 = scmp.eq.s32.totalorder %s101, 1
      %p854 = por %p852, %p853
      %p855 = scmp.ne.s32.totalorder %s846, %s847
      %p856 = scmp.eq.s32.totalorder %s101, 0
      %p857 = por %p855, %p856
      %p858 = scmp.ne.s32.totalorder %s846, %s847
      %p859 = scmp.eq.s32.totalorder %s102, 1
      %p860 = por %p858, %p859
      %p862 = scmp.ne.s32.totalorder %s847, %s861
      %p863 = scmp.eq.s32.totalorder %s102, 0
      %p864 = por %p862, %p863
      %s866 = sadd.s32 %s865, 1
      %p869 = scmp.eq.s32.totalorder %s96, 1
      %p870 = scmp.ne.s32.totalorder %s865, %s867
      %p871 = scmp.eq.s32.totalorder %s96, 0
      %p872 = por %p870, %p871
      %p873 = scmp.ne.s32.totalorder %s865, %s867
      %p874 = scmp.eq.s32.totalorder %s101, 1
      %p875 = por %p873, %p874
      %p876 = scmp.ne.s32.totalorder %s867, %s868
      %p877 = scmp.eq.s32.totalorder %s101, 0
      %p878 = por %p876, %p877
      %p879 = scmp.ne.s32.totalorder %s867, %s868
      %p880 = scmp.eq.s32.totalorder %s102, 1
      %p881 = por %p879, %p880
      %p883 = scmp.ne.s32.totalorder %s868, %s882
      %p884 = scmp.eq.s32.totalorder %s102, 0
      %p885 = por %p883, %p884
      %s886 = ssub.s32 %s96, %s103
      %p887 = scmp.eq.s32.totalorder %s886, 0
      %s889 = sadd.s32 %s888, 1
      %s890 = scalar_select %p887, %s888, %s889
      %p893 = pneg %p887
      %p894 = scmp.eq.s32.totalorder %s96, 1
      %p895 = por %p893, %p894
      %p896 = scmp.ne.s32.totalorder %s888, %s891
      %p897 = scmp.eq.s32.totalorder %s96, 0
      %p898 = por %p896, %p897
      %p899 = scmp.ne.s32.totalorder %s888, %s891
      %p900 = scmp.eq.s32.totalorder %s101, 1
      %p901 = por %p899, %p900
      %p902 = scmp.ne.s32.totalorder %s891, %s892
      %p903 = scmp.eq.s32.totalorder %s101, 0
      %p904 = por %p902, %p903
      %p905 = scmp.ne.s32.totalorder %s891, %s892
      %p906 = scmp.eq.s32.totalorder %s102, 1
      %p907 = por %p905, %p906
      %p909 = scmp.ne.s32.totalorder %s892, %s908
      %p910 = scmp.eq.s32.totalorder %s102, 0
      %p911 = por %p909, %p910
      %p912 = scmp.le.s32.totalorder 1, %s96
      %p913 = scmp.lt.s32.totalorder %s96, 3
      %p914 = pnand %p912, %p913
      %p915 = pneg %p914
      // Predicated region
      $region9: #{tpu_custom_call.1} parent=5 // pred_check
        _
      $region10: #{tpu_custom_call.1} parent=5 // pred_check_branch
        %917 = sbr.rel (%p914) target = $region12
      $region11: #{tpu_custom_call.1} parent=5 // pred_region
        %s918 = ssub.s32 %s96, 1
        // Predicated region
        $region13: #{tpu_custom_call.1} parent=11 // pred_check
          %p919 = pneg %p143
        $region14: #{tpu_custom_call.1} parent=11 // pred_check_branch
          %921 = sbr.rel (%p919) target = $region16
        $region15: #{tpu_custom_call.1} parent=11 // pred_region
          %s923 = ssub.s32 16, 16
          %924 = vsyncadd [#allocation7], %s923
          %s926 = sshll.u32 [#allocation6], 4
          %s927 = int_to_ptr.vmem [resolvable:$true] %s926
          %929 = dma.hbm_to_vmem [thread:$0]  %s5, 16, %s927, [#allocation7]
        $region16: #{tpu_custom_call.1} parent=11 // pred_fallthru
          _
        // Predicated region
        $region17: #{tpu_custom_call.1} parent=11 // pred_check
          %p930 = pneg %p164
        $region18: #{tpu_custom_call.1} parent=11 // pred_check_branch
          %932 = sbr.rel (%p930) target = $region20
        $region19: #{tpu_custom_call.1} parent=11 // pred_region
          %s934 = ssub.s32 16, 16
          %935 = vsyncadd [#allocation10], %s934
          %s937 = sshll.u32 [#allocation9], 4
          %s938 = int_to_ptr.vmem [resolvable:$true] %s937
          %940 = dma.hbm_to_vmem [thread:$0]  %s7, 16, %s938, [#allocation10]
        $region20: #{tpu_custom_call.1} parent=11 // pred_fallthru
          _
        // Predicated region
        $region21: #{tpu_custom_call.1} parent=11 // pred_check
          %p941 = pneg %p185
        $region22: #{tpu_custom_call.1} parent=11 // pred_check_branch
          %943 = sbr.rel (%p941) target = $region24
        $region23: #{tpu_custom_call.1} parent=11 // pred_region
          _
        $region24: #{tpu_custom_call.1} parent=11 // pred_fallthru
          _
        // Predicated region
        $region25: #{tpu_custom_call.1} parent=11 // pred_check
          %p944 = pneg %p206
        $region26: #{tpu_custom_call.1} parent=11 // pred_check_branch
          %946 = sbr.rel (%p944) target = $region28
        $region27: #{tpu_custom_call.1} parent=11 // pred_region
          %s948 = ssub.s32 32, 32
          %949 = vsyncadd [#allocation10], %s948
          %s951 = sshll.u32 [#allocation11], 4
          %s952 = int_to_ptr.vmem [resolvable:$true] %s951
          %954 = dma.hbm_to_vmem [thread:$0]  %s11, 32, %s952, [#allocation10]
        $region28: #{tpu_custom_call.1} parent=11 // pred_fallthru
          _
        // Predicated region
        $region29: #{tpu_custom_call.1} parent=11 // pred_check
          %p955 = pneg %p227
        $region30: #{tpu_custom_call.1} parent=11 // pred_check_branch
          %957 = sbr.rel (%p955) target = $region32
        $region31: #{tpu_custom_call.1} parent=11 // pred_region
          _
        $region32: #{tpu_custom_call.1} parent=11 // pred_fallthru
          _
        // Predicated region
        $region33: #{tpu_custom_call.1} parent=11 // pred_check
          %p958 = pneg %p248
        $region34: #{tpu_custom_call.1} parent=11 // pred_check_branch
          %960 = sbr.rel (%p958) target = $region36
        $region35: #{tpu_custom_call.1} parent=11 // pred_region
          _
        $region36: #{tpu_custom_call.1} parent=11 // pred_fallthru
          _
        // Predicated region
        $region37: #{tpu_custom_call.1} parent=11 // pred_check
          %p961 = pneg %p269
        $region38: #{tpu_custom_call.1} parent=11 // pred_check_branch
          %963 = sbr.rel (%p961) target = $region40
        $region39: #{tpu_custom_call.1} parent=11 // pred_region
          %s965 = ssub.s32 16, 16
          %966 = vsyncadd [#allocation13], %s965
          %s968 = sshll.u32 [#allocation12], 4
          %s969 = int_to_ptr.vmem [resolvable:$true] %s968
          %971 = dma.hbm_to_vmem [thread:$0]  %s17, 16, %s969, [#allocation13]
        $region40: #{tpu_custom_call.1} parent=11 // pred_fallthru
          _
        // Predicated region
        $region41: #{tpu_custom_call.1} parent=11 // pred_check
          %p972 = pneg %p290
        $region42: #{tpu_custom_call.1} parent=11 // pred_check_branch
          %974 = sbr.rel (%p972) target = $region44
        $region43: #{tpu_custom_call.1} parent=11 // pred_region
          %s976 = ssub.s32 16, 16
          %977 = vsyncadd [#allocation13], %s976
          %s979 = sshll.u32 [#allocation14], 4
          %s980 = int_to_ptr.vmem [resolvable:$true] %s979
          %982 = dma.hbm_to_vmem [thread:$0]  %s19, 16, %s980, [#allocation13]
        $region44: #{tpu_custom_call.1} parent=11 // pred_fallthru
          _
        // Predicated region
        $region45: #{tpu_custom_call.1} parent=11 // pred_check
          %p983 = pneg %p311
        $region46: #{tpu_custom_call.1} parent=11 // pred_check_branch
          %985 = sbr.rel (%p983) target = $region48
        $region47: #{tpu_custom_call.1} parent=11 // pred_region
          _
        $region48: #{tpu_custom_call.1} parent=11 // pred_fallthru
          _
        // Predicated region
        $region49: #{tpu_custom_call.1} parent=11 // pred_check
          %p986 = pneg %p332
        $region50: #{tpu_custom_call.1} parent=11 // pred_check_branch
          %988 = sbr.rel (%p986) target = $region52
        $region51: #{tpu_custom_call.1} parent=11 // pred_region
          %s990 = ssub.s32 32, 32
          %991 = vsyncadd [#allocation16], %s990
          %s993 = sshll.u32 [#allocation15], 4
          %s994 = int_to_ptr.vmem [resolvable:$true] %s993
          %996 = dma.hbm_to_vmem [thread:$0]  %s23, 32, %s994, [#allocation16]
        $region52: #{tpu_custom_call.1} parent=11 // pred_fallthru
          _
        // Predicated region
        $region53: #{tpu_custom_call.1} parent=11 // pred_check
          %p997 = pneg %p353
        $region54: #{tpu_custom_call.1} parent=11 // pred_check_branch
          %999 = sbr.rel (%p997) target = $region56
        $region55: #{tpu_custom_call.1} parent=11 // pred_region
          _
        $region56: #{tpu_custom_call.1} parent=11 // pred_fallthru
          _
        // Predicated region
        $region57: #{tpu_custom_call.1} parent=11 // pred_check
          %p1000 = pneg %p374
        $region58: #{tpu_custom_call.1} parent=11 // pred_check_branch
          %1002 = sbr.rel (%p1000) target = $region60
        $region59: #{tpu_custom_call.1} parent=11 // pred_region
          %s1004 = ssub.s32 16, 16
          %1005 = vsyncadd [#allocation16], %s1004
          %s1007 = sshll.u32 [#allocation17], 4
          %s1008 = int_to_ptr.vmem [resolvable:$true] %s1007
          %1010 = dma.hbm_to_vmem [thread:$0]  %s27, 16, %s1008, [#allocation16]
        $region60: #{tpu_custom_call.1} parent=11 // pred_fallthru
          _
        // Predicated region
        $region61: #{tpu_custom_call.1} parent=11 // pred_check
          %p1011 = pneg %p395
        $region62: #{tpu_custom_call.1} parent=11 // pred_check_branch
          %1013 = sbr.rel (%p1011) target = $region64
        $region63: #{tpu_custom_call.1} parent=11 // pred_region
          %s1015 = ssub.s32 16, 16
          %1016 = vsyncadd [#allocation19], %s1015
          %s1018 = sshll.u32 [#allocation18], 4
          %s1019 = int_to_ptr.vmem [resolvable:$true] %s1018
          %1021 = dma.hbm_to_vmem [thread:$0]  %s29, 16, %s1019, [#allocation19]
        $region64: #{tpu_custom_call.1} parent=11 // pred_fallthru
          _
        // Predicated region
        $region65: #{tpu_custom_call.1} parent=11 // pred_check
          %p1022 = pneg %p416
        $region66: #{tpu_custom_call.1} parent=11 // pred_check_branch
          %1024 = sbr.rel (%p1022) target = $region68
        $region67: #{tpu_custom_call.1} parent=11 // pred_region
          %s1026 = ssub.s32 16, 16
          %1027 = vsyncadd [#allocation19], %s1026
          %s1029 = sshll.u32 [#allocation20], 4
          %s1030 = int_to_ptr.vmem [resolvable:$true] %s1029
          %1032 = dma.hbm_to_vmem [thread:$0]  %s31, 16, %s1030, [#allocation19]
        $region68: #{tpu_custom_call.1} parent=11 // pred_fallthru
          _
        // Predicated region
        $region69: #{tpu_custom_call.1} parent=11 // pred_check
          %p1033 = pneg %p437
        $region70: #{tpu_custom_call.1} parent=11 // pred_check_branch
          %1035 = sbr.rel (%p1033) target = $region72
        $region71: #{tpu_custom_call.1} parent=11 // pred_region
          %s1037 = ssub.s32 16, 16
          %1038 = vsyncadd [#allocation22], %s1037
          %s1040 = sshll.u32 [#allocation21], 4
          %s1041 = int_to_ptr.vmem [resolvable:$true] %s1040
          %1043 = dma.hbm_to_vmem [thread:$0]  %s33, 16, %s1041, [#allocation22]
        $region72: #{tpu_custom_call.1} parent=11 // pred_fallthru
          _
        // Predicated region
        $region73: #{tpu_custom_call.1} parent=11 // pred_check
          %p1044 = pneg %p458
        $region74: #{tpu_custom_call.1} parent=11 // pred_check_branch
          %1046 = sbr.rel (%p1044) target = $region76
        $region75: #{tpu_custom_call.1} parent=11 // pred_region
          %s1048 = ssub.s32 16, 16
          %1049 = vsyncadd [#allocation22], %s1048
          %s1051 = sshll.u32 [#allocation23], 4
          %s1052 = int_to_ptr.vmem [resolvable:$true] %s1051
          %1054 = dma.hbm_to_vmem [thread:$0]  %s35, 16, %s1052, [#allocation22]
        $region76: #{tpu_custom_call.1} parent=11 // pred_fallthru
          _
        // Predicated region
        $region77: #{tpu_custom_call.1} parent=11 // pred_check
          %p1055 = pneg %p479
        $region78: #{tpu_custom_call.1} parent=11 // pred_check_branch
          %1057 = sbr.rel (%p1055) target = $region80
        $region79: #{tpu_custom_call.1} parent=11 // pred_region
          _
        $region80: #{tpu_custom_call.1} parent=11 // pred_fallthru
          _
        // Predicated region
        $region81: #{tpu_custom_call.1} parent=11 // pred_check
          %p1058 = pneg %p500
        $region82: #{tpu_custom_call.1} parent=11 // pred_check_branch
          %1060 = sbr.rel (%p1058) target = $region84
        $region83: #{tpu_custom_call.1} parent=11 // pred_region
          _
        $region84: #{tpu_custom_call.1} parent=11 // pred_fallthru
          _
        // Predicated region
        $region85: #{tpu_custom_call.1} parent=11 // pred_check
          %p1061 = pneg %p521
        $region86: #{tpu_custom_call.1} parent=11 // pred_check_branch
          %1063 = sbr.rel (%p1061) target = $region88
        $region87: #{tpu_custom_call.1} parent=11 // pred_region
          _
        $region88: #{tpu_custom_call.1} parent=11 // pred_fallthru
          _
        // Predicated region
        $region89: #{tpu_custom_call.1} parent=11 // pred_check
          %p1064 = pneg %p542
        $region90: #{tpu_custom_call.1} parent=11 // pred_check_branch
          %1066 = sbr.rel (%p1064) target = $region92
        $region91: #{tpu_custom_call.1} parent=11 // pred_region
          _
        $region92: #{tpu_custom_call.1} parent=11 // pred_fallthru
          _
        // Predicated region
        $region93: #{tpu_custom_call.1} parent=11 // pred_check
          %p1067 = pneg %p563
        $region94: #{tpu_custom_call.1} parent=11 // pred_check_branch
          %1069 = sbr.rel (%p1067) target = $region96
        $region95: #{tpu_custom_call.1} parent=11 // pred_region
          _
        $region96: #{tpu_custom_call.1} parent=11 // pred_fallthru
          _
        // Predicated region
        $region97: #{tpu_custom_call.1} parent=11 // pred_check
          %p1070 = pneg %p584
        $region98: #{tpu_custom_call.1} parent=11 // pred_check_branch
          %1072 = sbr.rel (%p1070) target = $region100
        $region99: #{tpu_custom_call.1} parent=11 // pred_region
          _
        $region100: #{tpu_custom_call.1} parent=11 // pred_fallthru
          _
        // Predicated region
        $region101: #{tpu_custom_call.1} parent=11 // pred_check
          %p1073 = pneg %p605
        $region102: #{tpu_custom_call.1} parent=11 // pred_check_branch
          %1075 = sbr.rel (%p1073) target = $region104
        $region103: #{tpu_custom_call.1} parent=11 // pred_region
          _
        $region104: #{tpu_custom_call.1} parent=11 // pred_fallthru
          _
        // Predicated region
        $region105: #{tpu_custom_call.1} parent=11 // pred_check
          %p1076 = pneg %p626
        $region106: #{tpu_custom_call.1} parent=11 // pred_check_branch
          %1078 = sbr.rel (%p1076) target = $region108
        $region107: #{tpu_custom_call.1} parent=11 // pred_region
          _
        $region108: #{tpu_custom_call.1} parent=11 // pred_fallthru
          _
        // Predicated region
        $region109: #{tpu_custom_call.1} parent=11 // pred_check
          %p1079 = pneg %p647
        $region110: #{tpu_custom_call.1} parent=11 // pred_check_branch
          %1081 = sbr.rel (%p1079) target = $region112
        $region111: #{tpu_custom_call.1} parent=11 // pred_region
          _
        $region112: #{tpu_custom_call.1} parent=11 // pred_fallthru
          _
        // Predicated region
        $region113: #{tpu_custom_call.1} parent=11 // pred_check
          %p1082 = pneg %p668
        $region114: #{tpu_custom_call.1} parent=11 // pred_check_branch
          %1084 = sbr.rel (%p1082) target = $region116
        $region115: #{tpu_custom_call.1} parent=11 // pred_region
          _
        $region116: #{tpu_custom_call.1} parent=11 // pred_fallthru
          _
        // Predicated region
        $region117: #{tpu_custom_call.1} parent=11 // pred_check
          %p1085 = pneg %p689
        $region118: #{tpu_custom_call.1} parent=11 // pred_check_branch
          %1087 = sbr.rel (%p1085) target = $region120
        $region119: #{tpu_custom_call.1} parent=11 // pred_region
          _
        $region120: #{tpu_custom_call.1} parent=11 // pred_fallthru
          _
        // Predicated region
        $region121: #{tpu_custom_call.1} parent=11 // pred_check
          %p1088 = pneg %p710
        $region122: #{tpu_custom_call.1} parent=11 // pred_check_branch
          %1090 = sbr.rel (%p1088) target = $region124
        $region123: #{tpu_custom_call.1} parent=11 // pred_region
          _
        $region124: #{tpu_custom_call.1} parent=11 // pred_fallthru
          _
        // Predicated region
        $region125: #{tpu_custom_call.1} parent=11 // pred_check
          %p1091 = pneg %p731
        $region126: #{tpu_custom_call.1} parent=11 // pred_check_branch
          %1093 = sbr.rel (%p1091) target = $region128
        $region127: #{tpu_custom_call.1} parent=11 // pred_region
          _
        $region128: #{tpu_custom_call.1} parent=11 // pred_fallthru
          _
        // Predicated region
        $region129: #{tpu_custom_call.1} parent=11 // pred_check
          %p1094 = pneg %p752
        $region130: #{tpu_custom_call.1} parent=11 // pred_check_branch
          %1096 = sbr.rel (%p1094) target = $region132
        $region131: #{tpu_custom_call.1} parent=11 // pred_region
          _
        $region132: #{tpu_custom_call.1} parent=11 // pred_fallthru
          _
        // Predicated region
        $region133: #{tpu_custom_call.1} parent=11 // pred_check
          %p1097 = pneg %p773
        $region134: #{tpu_custom_call.1} parent=11 // pred_check_branch
          %1099 = sbr.rel (%p1097) target = $region136
        $region135: #{tpu_custom_call.1} parent=11 // pred_region
          _
        $region136: #{tpu_custom_call.1} parent=11 // pred_fallthru
          _
        // Predicated region
        $region137: #{tpu_custom_call.1} parent=11 // pred_check
          %p1100 = pneg %p794
        $region138: #{tpu_custom_call.1} parent=11 // pred_check_branch
          %1102 = sbr.rel (%p1100) target = $region140
        $region139: #{tpu_custom_call.1} parent=11 // pred_region
          _
        $region140: #{tpu_custom_call.1} parent=11 // pred_fallthru
          _
        // Predicated region
        $region141: #{tpu_custom_call.1} parent=11 // pred_check
          %p1103 = pneg %p815
        $region142: #{tpu_custom_call.1} parent=11 // pred_check_branch
          %1105 = sbr.rel (%p1103) target = $region144
        $region143: #{tpu_custom_call.1} parent=11 // pred_region
          _
        $region144: #{tpu_custom_call.1} parent=11 // pred_fallthru
          _
        // Predicated region
        $region145: #{tpu_custom_call.1} parent=11 // pred_check
          %p1106 = pneg %p836
        $region146: #{tpu_custom_call.1} parent=11 // pred_check_branch
          %1108 = sbr.rel (%p1106) target = $region148
        $region147: #{tpu_custom_call.1} parent=11 // pred_region
          _
        $region148: #{tpu_custom_call.1} parent=11 // pred_fallthru
          _
        // Predicated region
        $region149: #{tpu_custom_call.1} parent=11 // pred_check
          %p1109 = pneg %p857
        $region150: #{tpu_custom_call.1} parent=11 // pred_check_branch
          %1111 = sbr.rel (%p1109) target = $region152
        $region151: #{tpu_custom_call.1} parent=11 // pred_region
          _
        $region152: #{tpu_custom_call.1} parent=11 // pred_fallthru
          _
        // Predicated region
        $region153: #{tpu_custom_call.1} parent=11 // pred_check
          %p1112 = pneg %p878
        $region154: #{tpu_custom_call.1} parent=11 // pred_check_branch
          %1114 = sbr.rel (%p1112) target = $region156
        $region155: #{tpu_custom_call.1} parent=11 // pred_region
          _
        $region156: #{tpu_custom_call.1} parent=11 // pred_fallthru
          _
      $region12: #{tpu_custom_call.1} parent=5 // pred_fallthru
        _
      %p1115 = scmp.lt.s32.totalorder %s96, 2
      // Predicated region
      $region157: #{tpu_custom_call.1} parent=5 // pred_check
        %p1116 = pneg %p1115
      $region158: #{tpu_custom_call.1} parent=5 // pred_check_branch
        %1118 = sbr.rel (%p1116) target = $region160
      $region159: #{tpu_custom_call.1} parent=5 // pred_region
        // Predicated region
        $region161: #{tpu_custom_call.1} parent=159 // pred_check
          %p1119 = pneg %p116
        $region162: #{tpu_custom_call.1} parent=159 // pred_check_branch
          %1121 = sbr.rel (%p1119) target = $region164
        $region163: #{tpu_custom_call.1} parent=159 // pred_region
          %p1122 = scmp.lt.s32.totalorder %s96, 1
          %s1123 = scalar_select %p1122, %s96, 1
          %s1124 = smul.addr %s1123, 4
          %s1125 = smul.addr %s1124, 8
          %s1126 = scalar_lea.vmem %s3, %s1125
        $region164: #{tpu_custom_call.1} parent=159 // pred_fallthru
          _
      $region160: #{tpu_custom_call.1} parent=5 // pred_fallthru
        _
      %p1127 = scmp.le.s32.totalorder 1, %s96
      %p1128 = scmp.lt.s32.totalorder %s96, 3
      %p1129 = pnand %p1127, %p1128
      %p1130 = pneg %p1129
      // Predicated region
      $region165: #{tpu_custom_call.1} parent=5 // pred_check
        _
      $region166: #{tpu_custom_call.1} parent=5 // pred_check_branch
        %1132 = sbr.rel (%p1129) target = $region168
      $region167: #{tpu_custom_call.1} parent=5 // pred_region
        %s1133 = ssub.s32 %s96, 1
        // Predicated region
        $region169: #{tpu_custom_call.1} parent=167 // pred_check
          %p1134 = pneg %p143
        $region170: #{tpu_custom_call.1} parent=167 // pred_check_branch
          %1136 = sbr.rel (%p1134) target = $region172
        $region171: #{tpu_custom_call.1} parent=167 // pred_region
          %1137 = dma.done [#allocation7], 16
        $region172: #{tpu_custom_call.1} parent=167 // pred_fallthru
          _
        // Predicated region
        $region173: #{tpu_custom_call.1} parent=167 // pred_check
          %p1138 = pneg %p164
        $region174: #{tpu_custom_call.1} parent=167 // pred_check_branch
          %1140 = sbr.rel (%p1138) target = $region176
        $region175: #{tpu_custom_call.1} parent=167 // pred_region
          %1141 = dma.done [#allocation10], 16
        $region176: #{tpu_custom_call.1} parent=167 // pred_fallthru
          _
        // Predicated region
        $region177: #{tpu_custom_call.1} parent=167 // pred_check
          %p1142 = pneg %p206
        $region178: #{tpu_custom_call.1} parent=167 // pred_check_branch
          %1144 = sbr.rel (%p1142) target = $region180
        $region179: #{tpu_custom_call.1} parent=167 // pred_region
          %1145 = dma.done [#allocation10], 32
        $region180: #{tpu_custom_call.1} parent=167 // pred_fallthru
          _
        // Predicated region
        $region181: #{tpu_custom_call.1} parent=167 // pred_check
          %p1146 = pneg %p269
        $region182: #{tpu_custom_call.1} parent=167 // pred_check_branch
          %1148 = sbr.rel (%p1146) target = $region184
        $region183: #{tpu_custom_call.1} parent=167 // pred_region
          %1149 = dma.done [#allocation13], 16
        $region184: #{tpu_custom_call.1} parent=167 // pred_fallthru
          _
        // Predicated region
        $region185: #{tpu_custom_call.1} parent=167 // pred_check
          %p1150 = pneg %p290
        $region186: #{tpu_custom_call.1} parent=167 // pred_check_branch
          %1152 = sbr.rel (%p1150) target = $region188
        $region187: #{tpu_custom_call.1} parent=167 // pred_region
          %1153 = dma.done [#allocation13], 16
        $region188: #{tpu_custom_call.1} parent=167 // pred_fallthru
          _
        // Predicated region
        $region189: #{tpu_custom_call.1} parent=167 // pred_check
          %p1154 = pneg %p332
        $region190: #{tpu_custom_call.1} parent=167 // pred_check_branch
          %1156 = sbr.rel (%p1154) target = $region192
        $region191: #{tpu_custom_call.1} parent=167 // pred_region
          %1157 = dma.done [#allocation16], 32
        $region192: #{tpu_custom_call.1} parent=167 // pred_fallthru
          _
        // Predicated region
        $region193: #{tpu_custom_call.1} parent=167 // pred_check
          %p1158 = pneg %p374
        $region194: #{tpu_custom_call.1} parent=167 // pred_check_branch
          %1160 = sbr.rel (%p1158) target = $region196
        $region195: #{tpu_custom_call.1} parent=167 // pred_region
          %1161 = dma.done [#allocation16], 16
        $region196: #{tpu_custom_call.1} parent=167 // pred_fallthru
          _
        // Predicated region
        $region197: #{tpu_custom_call.1} parent=167 // pred_check
          %p1162 = pneg %p395
        $region198: #{tpu_custom_call.1} parent=167 // pred_check_branch
          %1164 = sbr.rel (%p1162) target = $region200
        $region199: #{tpu_custom_call.1} parent=167 // pred_region
          %1165 = dma.done [#allocation19], 16
        $region200: #{tpu_custom_call.1} parent=167 // pred_fallthru
          _
        // Predicated region
        $region201: #{tpu_custom_call.1} parent=167 // pred_check
          %p1166 = pneg %p416
        $region202: #{tpu_custom_call.1} parent=167 // pred_check_branch
          %1168 = sbr.rel (%p1166) target = $region204
        $region203: #{tpu_custom_call.1} parent=167 // pred_region
          %1169 = dma.done [#allocation19], 16
        $region204: #{tpu_custom_call.1} parent=167 // pred_fallthru
          _
        // Predicated region
        $region205: #{tpu_custom_call.1} parent=167 // pred_check
          %p1170 = pneg %p437
        $region206: #{tpu_custom_call.1} parent=167 // pred_check_branch
          %1172 = sbr.rel (%p1170) target = $region208
        $region207: #{tpu_custom_call.1} parent=167 // pred_region
          %1173 = dma.done [#allocation22], 16
        $region208: #{tpu_custom_call.1} parent=167 // pred_fallthru
          _
        // Predicated region
        $region209: #{tpu_custom_call.1} parent=167 // pred_check
          %p1174 = pneg %p458
        $region210: #{tpu_custom_call.1} parent=167 // pred_check_branch
          %1176 = sbr.rel (%p1174) target = $region212
        $region211: #{tpu_custom_call.1} parent=167 // pred_region
          %1177 = dma.done [#allocation22], 16
        $region212: #{tpu_custom_call.1} parent=167 // pred_fallthru
          _
        %p1178 = scmp.lt.s32.totalorder %s101, 1
        %s1179 = scalar_select %p1178, %s101, 1
        %s1180 = smul.addr %s1179, 4
        %s1181 = smul.addr %s1180, 8
        %s1182 = scalar_lea.vmem %s3, %s1181
        %p1183 = pneg %p122
        %p1184 = pneg %p119
        %p1185 = pneg %p143
        %p1186 = pneg %p140
        %p1187 = pneg %p164
        %p1188 = pneg %p161
        %p1189 = pneg %p185
        %p1190 = pneg %p182
        %p1191 = pneg %p206
        %p1192 = pneg %p203
        %p1193 = pneg %p227
        %p1194 = pneg %p224
        %p1195 = pneg %p248
        %p1196 = pneg %p245
        %p1197 = pneg %p269
        %p1198 = pneg %p266
        %p1199 = pneg %p290
        %p1200 = pneg %p287
        %p1201 = pneg %p311
        %p1202 = pneg %p308
        %p1203 = pneg %p332
        %p1204 = pneg %p329
        %p1205 = pneg %p353
        %p1206 = pneg %p350
        %p1207 = pneg %p374
        %p1208 = pneg %p371
        %p1209 = pneg %p395
        %p1210 = pneg %p392
        %p1211 = pneg %p416
        %p1212 = pneg %p413
        %p1213 = pneg %p437
        %p1214 = pneg %p434
        %p1215 = pneg %p458
        %p1216 = pneg %p455
        %p1217 = pneg %p479
        %p1218 = pneg %p476
        %p1219 = pneg %p500
        %p1220 = pneg %p497
        %p1221 = pneg %p521
        %p1222 = pneg %p518
        %p1223 = pneg %p542
        %p1224 = pneg %p539
        %p1225 = pneg %p563
        %p1226 = pneg %p560
        %p1227 = pneg %p584
        %p1228 = pneg %p581
        %p1229 = pneg %p605
        %p1230 = pneg %p602
        %p1231 = pneg %p626
        %p1232 = pneg %p623
        %p1233 = pneg %p647
        %p1234 = pneg %p644
        %p1235 = pneg %p668
        %p1236 = pneg %p665
        %p1237 = pneg %p689
        %p1238 = pneg %p686
        %p1239 = pneg %p710
        %p1240 = pneg %p707
        %p1241 = pneg %p731
        %p1242 = pneg %p728
        %p1243 = pneg %p752
        %p1244 = pneg %p749
        %p1245 = pneg %p773
        %p1246 = pneg %p770
        %p1247 = pneg %p794
        %p1248 = pneg %p791
        %p1249 = pneg %p815
        %p1250 = pneg %p812
        %p1251 = pneg %p836
        %p1252 = pneg %p833
        %p1253 = pneg %p857
        %p1254 = pneg %p854
        %p1255 = pneg %p878
        %p1256 = pneg %p875
        %p1257 = pneg %p904
        %p1258 = pneg %p901
        %s1259 = sand.u32 %s891, 1
        %s1260 = scalar_lea.sflag [#allocation8], %s1259
        %s1261 = sand.u32 %s891, 1
        %s1262 = smul.addr %s1261, 32
        %s1263 = scalar_lea.vmem [#allocation24], %s1262
        %p1264 = scmp.lt.s32.totalorder %s101, 1
        %s1265 = scalar_select %p1264, %s101, 1
        %s1266 = smul.addr %s1265, 4
        %s1267 = smul.addr %s1266, 8
        %s1268 = scalar_lea.vmem %s3, %s1267
        %v1270 = vld [vmem:[%s1268] sm:$0xff]
        %v1271 = vld [vmem:[%s1268 + $0x8] sm:$0xff]
        %v1272 = vld [vmem:[%s1268 + $0x10] sm:$0xff]
        %v1273 = vld [vmem:[%s1268 + $0x18] sm:$0xff]
        %v1274 = vld [vmem:[#allocation6] sm:$0x1]
        %v1275 = vld [vmem:[#allocation9] sm:$0x1]
        %1276 = vadd.xlane.f32.xlu0 %v1270
        %v1277 = vpop.xlane.xlu0 %1276
        %1278 = vadd.xlane.f32.xlu0 %v1271
        %v1279 = vpop.xlane.xlu0 %1278
        %1280 = vadd.xlane.f32.xlu0 %v1272
        %v1281 = vpop.xlane.xlu0 %1280
        %1282 = vadd.xlane.f32.xlu0 %v1273
        %v1283 = vpop.xlane.xlu0 %1282
        %v1284 = vrcp.pop 128.0
        %v1285 = vmul.f32 %v1277, %v1284
        %v1286 = vmul.f32 %v1279, %v1284
        %v1287 = vmul.f32 %v1281, %v1284
        %v1288 = vmul.f32 %v1283, %v1284
        %v1289 = vsub.f32 %v1270, %v1285
        %v1290 = vsub.f32 %v1271, %v1286
        %v1291 = vsub.f32 %v1272, %v1287
        %v1292 = vsub.f32 %v1273, %v1288
        %v1293 = vmul.f32 %v1289, %v1289
        %v1294 = vmul.f32 %v1290, %v1290
        %v1295 = vmul.f32 %v1291, %v1291
        %v1296 = vmul.f32 %v1292, %v1292
        %1297 = vadd.xlane.f32.xlu0 %v1293
        %v1298 = vpop.xlane.xlu0 %1297
        %1299 = vadd.xlane.f32.xlu0 %v1294
        %v1300 = vpop.xlane.xlu0 %1299
        %1301 = vadd.xlane.f32.xlu0 %v1295
        %v1302 = vpop.xlane.xlu0 %1301
        %1303 = vadd.xlane.f32.xlu0 %v1296
        %v1304 = vpop.xlane.xlu0 %1303
        %v1305 = vmul.f32 %v1298, %v1284
        %v1306 = vmul.f32 %v1300, %v1284
        %v1307 = vmul.f32 %v1302, %v1284
        %v1308 = vmul.f32 %v1304, %v1284
        %v1309 = vadd.f32 %v1305, 1e-05
        %v1310 = vadd.f32 %v1306, 1e-05
        %v1311 = vadd.f32 %v1307, 1e-05
        %v1312 = vadd.f32 %v1308, 1e-05
        %v1313 = vrsqrt.pop %v1309
        %v1314 = vrsqrt.pop %v1310
        %v1315 = vrsqrt.pop %v1311
        %v1316 = vrsqrt.pop %v1312
        %v1317 = vmul.f32 %v1289, %v1313
        %v1318 = vmul.f32 %v1290, %v1314
        %v1319 = vmul.f32 %v1291, %v1315
        %v1320 = vmul.f32 %v1292, %v1316
        %v1322 = vlaneseq
        %v1323 = vshrl.u32 %v1322, 7
        %v1324 = vsub.s32 0, %v1323
        %v1325 = vrot.slane %v1274, %v1324
        %v1327 = vmul.f32 %v1317, %v1325
        %v1328 = vmul.f32 %v1318, %v1325
        %v1329 = vmul.f32 %v1319, %v1325
        %v1330 = vmul.f32 %v1320, %v1325
        %v1332 = vlaneseq
        %v1333 = vshrl.u32 %v1332, 7
        %v1334 = vsub.s32 0, %v1333
        %v1335 = vrot.slane %v1275, %v1334
        %v1337 = vadd.f32 %v1327, %v1335
        %v1338 = vadd.f32 %v1328, %v1335
        %v1339 = vadd.f32 %v1329, %v1335
        %v1340 = vadd.f32 %v1330, %v1335
        %v1341 = vld [vmem:[%s9] sm:$0xff]
        %v1342 = vld [vmem:[%s9 + $0x8] sm:$0xff]
        %v1343 = vld [vmem:[%s9 + $0x10] sm:$0xff]
        %v1344 = vld [vmem:[%s9 + $0x18] sm:$0xff]
        %v1345 = vld [vmem:[%s9 + $0x20] sm:$0xff]
        %v1346 = vld [vmem:[%s9 + $0x28] sm:$0xff]
        %v1347 = vld [vmem:[%s9 + $0x30] sm:$0xff]
        %v1348 = vld [vmem:[%s9 + $0x38] sm:$0xff]
        %v1349 = vld [vmem:[%s9 + $0x40] sm:$0xff]
        %v1350 = vld [vmem:[%s9 + $0x48] sm:$0xff]
        %v1351 = vld [vmem:[%s9 + $0x50] sm:$0xff]
        %v1352 = vld [vmem:[%s9 + $0x58] sm:$0xff]
        %v1353 = vld [vmem:[%s9 + $0x60] sm:$0xff]
        %v1354 = vld [vmem:[%s9 + $0x68] sm:$0xff]
        %v1355 = vld [vmem:[%s9 + $0x70] sm:$0xff]
        %v1356 = vld [vmem:[%s9 + $0x78] sm:$0xff]
        %v1357 = vpack.c.bf16 %v1338, %v1337
        %v1358 = vpack.c.bf16 %v1340, %v1339
        %v1359 = vld [vmem:[#allocation11] sm:$0x3]
        %v1361 = vlaneseq
        %v1362 = vshrl.u32 %v1361, 7
        %v1363 = vsub.s32 0, %v1362
        %v1364 = vrot.slane %v1359, %v1363
        %v1365 = vlaneseq
        %v1366 = vshrl.u32 %v1365, 7
        %v1367 = vsub.s32 1, %v1366
        %v1368 = vrot.slane %v1359, %v1367
        %v1387 = vunpack.c.l.b16 %v1341
        %v1388 = vunpack.c.h.b16 %v1341
        %v1389 = vunpack.c.l.b16 %v1342
        %v1390 = vunpack.c.h.b16 %v1342
        %v1391 = vunpack.c.l.b16 %v1343
        %v1392 = vunpack.c.h.b16 %v1343
        %v1393 = vunpack.c.l.b16 %v1344
        %v1394 = vunpack.c.h.b16 %v1344
        %v1395 = vunpack.c.l.b16 %v1345
        %v1396 = vunpack.c.h.b16 %v1345
        %v1397 = vunpack.c.l.b16 %v1346
        %v1398 = vunpack.c.h.b16 %v1346
        %v1399 = vunpack.c.l.b16 %v1347
        %v1400 = vunpack.c.h.b16 %v1347
        %v1401 = vunpack.c.l.b16 %v1348
        %v1402 = vunpack.c.h.b16 %v1348
        %v1403 = vunpack.c.l.b16 %v1349
        %v1404 = vunpack.c.h.b16 %v1349
        %v1405 = vunpack.c.l.b16 %v1350
        %v1406 = vunpack.c.h.b16 %v1350
        %v1407 = vunpack.c.l.b16 %v1351
        %v1408 = vunpack.c.h.b16 %v1351
        %v1409 = vunpack.c.l.b16 %v1352
        %v1410 = vunpack.c.h.b16 %v1352
        %v1411 = vunpack.c.l.b16 %v1353
        %v1412 = vunpack.c.h.b16 %v1353
        %v1413 = vunpack.c.l.b16 %v1354
        %v1414 = vunpack.c.h.b16 %v1354
        %v1415 = vunpack.c.l.b16 %v1355
        %v1416 = vunpack.c.h.b16 %v1355
        %v1417 = vunpack.c.l.b16 %v1356
        %v1418 = vunpack.c.h.b16 %v1356
        %v1419 = vpack.c.b16 %v1389, %v1387
        %v1420 = vpack.c.b16 %v1390, %v1388
        %v1421 = vpack.c.b16 %v1393, %v1391
        %v1422 = vpack.c.b16 %v1394, %v1392
        %v1423 = vpack.c.b16 %v1397, %v1395
        %v1424 = vpack.c.b16 %v1398, %v1396
        %v1425 = vpack.c.b16 %v1401, %v1399
        %v1426 = vpack.c.b16 %v1402, %v1400
        %v1427 = vpack.c.b16 %v1405, %v1403
        %v1428 = vpack.c.b16 %v1406, %v1404
        %v1429 = vpack.c.b16 %v1409, %v1407
        %v1430 = vpack.c.b16 %v1410, %v1408
        %v1431 = vpack.c.b16 %v1413, %v1411
        %v1432 = vpack.c.b16 %v1414, %v1412
        %v1433 = vpack.c.b16 %v1417, %v1415
        %v1434 = vpack.c.b16 %v1418, %v1416
        %1451 = vmatprep.subr.bf16.mxu0 %v1434
        %1452 = vmatpush1.bf16.msra.mxu0 %v1433
        %1453 = vmatprep.subr.bf16.mxu0 %v1432
        %1454 = vmatpush1.bf16.msra.mxu0 %v1431
        %1455 = vmatprep.subr.bf16.mxu0 %v1430
        %1456 = vmatpush1.bf16.msra.mxu0 %v1429
        %1457 = vmatprep.subr.bf16.mxu0 %v1428
        %1458 = vmatpush1.bf16.msra.mxu0 %v1427
        %1459 = vmatprep.subr.bf16.mxu0 %v1426
        %1460 = vmatpush1.bf16.msra.mxu0 %v1425
        %1461 = vmatprep.subr.bf16.mxu0 %v1424
        %1462 = vmatpush1.bf16.msra.mxu0 %v1423
        %1463 = vmatprep.subr.bf16.mxu0 %v1422
        %1464 = vmatpush1.bf16.msra.mxu0 %v1421
        %1465 = vmatprep.subr.bf16.mxu0 %v1420
        %1466 = vmatpush1.bf16.msra.mxu0 %v1419
        %1467 = vmatprep.subr.bf16.mxu0 0
        %1468 = vmatpush2.bf16.msra.mxu0 0
        %1469 = vmatprep.subr.bf16.mxu0 0
        %1470 = vmatpush2.bf16.msra.mxu0 0
        %1471 = vmatprep.subr.bf16.mxu0 0
        %1472 = vmatpush2.bf16.msra.mxu0 0
        %1473 = vmatprep.subr.bf16.mxu0 0
        %1474 = vmatpush2.bf16.msra.mxu0 0
        %1475 = vmatprep.subr.bf16.mxu0 0
        %1476 = vmatpush2.bf16.msra.mxu0 0
        %1477 = vmatprep.subr.bf16.mxu0 0
        %1478 = vmatpush2.bf16.msra.mxu0 0
        %1479 = vmatprep.subr.bf16.mxu0 0
        %1480 = vmatpush2.bf16.msra.mxu0 0
        %1481 = vmatprep.subr.bf16.mxu0 0
        %1482 = vmatpush2.bf16.msra.mxu0 0
        %1483 = vmatprep.mubr.bf16.mxu0 0
        %1484 = vmatmul.mubr.bf16.gmra.mxu0 %v1357
        %v1485 = vpop.f32.mrf.mxu0
        %v1486 = vadd.f32 %v1364, %v1485
        %v1487 = vpop.f32.mrf.mxu0
        %v1488 = vadd.f32 %v1368, %v1487
        %v1489 = vpop.f32.mrf.mxu0
        %v1490 = vadd.f32 %v1364, %v1489
        %v1491 = vpop.f32.mrf.mxu0
        %v1492 = vadd.f32 %v1368, %v1491
        %1493 = vmatprep.mubr.bf16.mxu0 0
        %1494 = vmatmul.mubr.bf16.gmra.mxu0 %v1358
        %v1495 = vpop.f32.mrf.mxu0
        %v1496 = vadd.f32 %v1364, %v1495
        %v1497 = vpop.f32.mrf.mxu0
        %v1498 = vadd.f32 %v1368, %v1497
        %v1499 = vpop.f32.mrf.mxu0
        %v1500 = vadd.f32 %v1364, %v1499
        %v1501 = vpop.f32.mrf.mxu0
        %v1502 = vadd.f32 %v1368, %v1501
        %1503 = vdwg.mxu0
        %v1504 = vxor.u32 %v1486, 2147483648
        %v1505 = vxor.u32 %v1488, 2147483648
        %v1506 = vxor.u32 %v1490, 2147483648
        %v1507 = vxor.u32 %v1492, 2147483648
        %v1508 = vxor.u32 %v1496, 2147483648
        %v1509 = vxor.u32 %v1498, 2147483648
        %v1510 = vxor.u32 %v1500, 2147483648
        %v1511 = vxor.u32 %v1502, 2147483648
        %v1512 = vmul.f32 %v1504, 1.442695
        %v1513 = vpow.pop %v1512
        %v1514 = vmul.f32 %v1505, 1.442695
        %v1515 = vpow.pop %v1514
        %v1516 = vmul.f32 %v1506, 1.442695
        %v1517 = vpow.pop %v1516
        %v1518 = vmul.f32 %v1507, 1.442695
        %v1519 = vpow.pop %v1518
        %v1520 = vmul.f32 %v1508, 1.442695
        %v1521 = vpow.pop %v1520
        %v1522 = vmul.f32 %v1509, 1.442695
        %v1523 = vpow.pop %v1522
        %v1524 = vmul.f32 %v1510, 1.442695
        %v1525 = vpow.pop %v1524
        %v1526 = vmul.f32 %v1511, 1.442695
        %v1527 = vpow.pop %v1526
        %v1528 = vadd.f32 %v1513, 1.0
        %v1529 = vadd.f32 %v1515, 1.0
        %v1530 = vadd.f32 %v1517, 1.0
        %v1531 = vadd.f32 %v1519, 1.0
        %v1532 = vadd.f32 %v1521, 1.0
        %v1533 = vadd.f32 %v1523, 1.0
        %v1534 = vadd.f32 %v1525, 1.0
        %v1535 = vadd.f32 %v1527, 1.0
        %v1536 = vrcp.pop %v1528
        %v1537 = vmul.f32 1.0, %v1536
        %v1538 = vrcp.pop %v1529
        %v1539 = vmul.f32 1.0, %v1538
        %v1540 = vrcp.pop %v1530
        %v1541 = vmul.f32 1.0, %v1540
        %v1542 = vrcp.pop %v1531
        %v1543 = vmul.f32 1.0, %v1542
        %v1544 = vrcp.pop %v1532
        %v1545 = vmul.f32 1.0, %v1544
        %v1546 = vrcp.pop %v1533
        %v1547 = vmul.f32 1.0, %v1546
        %v1548 = vrcp.pop %v1534
        %v1549 = vmul.f32 1.0, %v1548
        %v1550 = vrcp.pop %v1535
        %v1551 = vmul.f32 1.0, %v1550
        %v1552 = vmul.f32 %v1486, %v1537
        %v1553 = vmul.f32 %v1488, %v1539
        %v1554 = vmul.f32 %v1490, %v1541
        %v1555 = vmul.f32 %v1492, %v1543
        %v1556 = vmul.f32 %v1496, %v1545
        %v1557 = vmul.f32 %v1498, %v1547
        %v1558 = vmul.f32 %v1500, %v1549
        %v1559 = vmul.f32 %v1502, %v1551
        %v1560 = vld [vmem:[%s13] sm:$0xf]
        %v1561 = vld [vmem:[%s13 + $0x4] sm:$0xf]
        %v1562 = vld [vmem:[%s13 + $0x8] sm:$0xf]
        %v1563 = vld [vmem:[%s13 + $0xc] sm:$0xf]
        %v1564 = vld [vmem:[%s13 + $0x10] sm:$0xf]
        %v1565 = vld [vmem:[%s13 + $0x14] sm:$0xf]
        %v1566 = vld [vmem:[%s13 + $0x18] sm:$0xf]
        %v1567 = vld [vmem:[%s13 + $0x1c] sm:$0xf]
        %v1568 = vld [vmem:[%s13 + $0x20] sm:$0xf]
        %v1569 = vld [vmem:[%s13 + $0x24] sm:$0xf]
        %v1570 = vld [vmem:[%s13 + $0x28] sm:$0xf]
        %v1571 = vld [vmem:[%s13 + $0x2c] sm:$0xf]
        %v1572 = vld [vmem:[%s13 + $0x30] sm:$0xf]
        %v1573 = vld [vmem:[%s13 + $0x34] sm:$0xf]
        %v1574 = vld [vmem:[%s13 + $0x38] sm:$0xf]
        %v1575 = vld [vmem:[%s13 + $0x3c] sm:$0xf]
        %v1576 = vld [vmem:[%s13 + $0x40] sm:$0xf]
        %v1577 = vld [vmem:[%s13 + $0x44] sm:$0xf]
        %v1578 = vld [vmem:[%s13 + $0x48] sm:$0xf]
        %v1579 = vld [vmem:[%s13 + $0x4c] sm:$0xf]
        %v1580 = vld [vmem:[%s13 + $0x50] sm:$0xf]
        %v1581 = vld [vmem:[%s13 + $0x54] sm:$0xf]
        %v1582 = vld [vmem:[%s13 + $0x58] sm:$0xf]
        %v1583 = vld [vmem:[%s13 + $0x5c] sm:$0xf]
        %v1584 = vld [vmem:[%s13 + $0x60] sm:$0xf]
        %v1585 = vld [vmem:[%s13 + $0x64] sm:$0xf]
        %v1586 = vld [vmem:[%s13 + $0x68] sm:$0xf]
        %v1587 = vld [vmem:[%s13 + $0x6c] sm:$0xf]
        %v1588 = vld [vmem:[%s13 + $0x70] sm:$0xf]
        %v1589 = vld [vmem:[%s13 + $0x74] sm:$0xf]
        %v1590 = vld [vmem:[%s13 + $0x78] sm:$0xf]
        %v1591 = vld [vmem:[%s13 + $0x7c] sm:$0xf]
        %v1592 = vpack.c.bf16 %v1554, %v1552
        %v1593 = vpack.c.bf16 %v1555, %v1553
        %v1594 = vpack.c.bf16 %v1558, %v1556
        %v1595 = vpack.c.bf16 %v1559, %v1557
        %v1596 = vld [vmem:[%s15] sm:$0x1]
        %v1598 = vlaneseq
        %v1599 = vshrl.u32 %v1598, 7
        %v1600 = vsub.s32 0, %v1599
        %v1601 = vrot.slane %v1596, %v1600
        %v1635 = vunpack.c.l.b16 %v1560
        %v1636 = vunpack.c.l.b16 %v1561
        %v1637 = vunpack.c.l.b16 %v1562
        %v1638 = vunpack.c.l.b16 %v1563
        %v1639 = vunpack.c.l.b16 %v1564
        %v1640 = vunpack.c.l.b16 %v1565
        %v1641 = vunpack.c.l.b16 %v1566
        %v1642 = vunpack.c.l.b16 %v1567
        %v1643 = vunpack.c.l.b16 %v1568
        %v1644 = vunpack.c.l.b16 %v1569
        %v1645 = vunpack.c.l.b16 %v1570
        %v1646 = vunpack.c.l.b16 %v1571
        %v1647 = vunpack.c.l.b16 %v1572
        %v1648 = vunpack.c.l.b16 %v1573
        %v1649 = vunpack.c.l.b16 %v1574
        %v1650 = vunpack.c.l.b16 %v1575
        %v1651 = vunpack.c.l.b16 %v1576
        %v1652 = vunpack.c.l.b16 %v1577
        %v1653 = vunpack.c.l.b16 %v1578
        %v1654 = vunpack.c.l.b16 %v1579
        %v1655 = vunpack.c.l.b16 %v1580
        %v1656 = vunpack.c.l.b16 %v1581
        %v1657 = vunpack.c.l.b16 %v1582
        %v1658 = vunpack.c.l.b16 %v1583
        %v1659 = vunpack.c.l.b16 %v1584
        %v1660 = vunpack.c.l.b16 %v1585
        %v1661 = vunpack.c.l.b16 %v1586
        %v1662 = vunpack.c.l.b16 %v1587
        %v1663 = vunpack.c.l.b16 %v1588
        %v1664 = vunpack.c.l.b16 %v1589
        %v1665 = vunpack.c.l.b16 %v1590
        %v1666 = vunpack.c.l.b16 %v1591
        %v1667 = vpack.c.b16 %v1636, %v1635
        %v1668 = vpack.c.b16 %v1638, %v1637
        %v1669 = vpack.c.b16 %v1640, %v1639
        %v1670 = vpack.c.b16 %v1642, %v1641
        %v1671 = vpack.c.b16 %v1644, %v1643
        %v1672 = vpack.c.b16 %v1646, %v1645
        %v1673 = vpack.c.b16 %v1648, %v1647
        %v1674 = vpack.c.b16 %v1650, %v1649
        %v1675 = vpack.c.b16 %v1652, %v1651
        %v1676 = vpack.c.b16 %v1654, %v1653
        %v1677 = vpack.c.b16 %v1656, %v1655
        %v1678 = vpack.c.b16 %v1658, %v1657
        %v1679 = vpack.c.b16 %v1660, %v1659
        %v1680 = vpack.c.b16 %v1662, %v1661
        %v1681 = vpack.c.b16 %v1664, %v1663
        %v1682 = vpack.c.b16 %v1666, %v1665
        %1699 = vmatprep.subr.bf16.mxu0 0
        %1700 = vmatpush1.bf16.msra.mxu0 %v1674
        %1701 = vmatprep.subr.bf16.mxu0 0
        %1702 = vmatpush1.bf16.msra.mxu0 %v1673
        %1703 = vmatprep.subr.bf16.mxu0 0
        %1704 = vmatpush1.bf16.msra.mxu0 %v1672
        %1705 = vmatprep.subr.bf16.mxu0 0
        %1706 = vmatpush1.bf16.msra.mxu0 %v1671
        %1707 = vmatprep.subr.bf16.mxu0 0
        %1708 = vmatpush1.bf16.msra.mxu0 %v1670
        %1709 = vmatprep.subr.bf16.mxu0 0
        %1710 = vmatpush1.bf16.msra.mxu0 %v1669
        %1711 = vmatprep.subr.bf16.mxu0 0
        %1712 = vmatpush1.bf16.msra.mxu0 %v1668
        %1713 = vmatprep.subr.bf16.mxu0 0
        %1714 = vmatpush1.bf16.msra.mxu0 %v1667
        %1715 = vmatprep.subr.bf16.mxu0 0
        %1716 = vmatpush2.bf16.msra.mxu0 %v1682
        %1717 = vmatprep.subr.bf16.mxu0 0
        %1718 = vmatpush2.bf16.msra.mxu0 %v1681
        %1719 = vmatprep.subr.bf16.mxu0 0
        %1720 = vmatpush2.bf16.msra.mxu0 %v1680
        %1721 = vmatprep.subr.bf16.mxu0 0
        %1722 = vmatpush2.bf16.msra.mxu0 %v1679
        %1723 = vmatprep.subr.bf16.mxu0 0
        %1724 = vmatpush2.bf16.msra.mxu0 %v1678
        %1725 = vmatprep.subr.bf16.mxu0 0
        %1726 = vmatpush2.bf16.msra.mxu0 %v1677
        %1727 = vmatprep.subr.bf16.mxu0 0
        %1728 = vmatpush2.bf16.msra.mxu0 %v1676
        %1729 = vmatprep.subr.bf16.mxu0 0
        %1730 = vmatpush2.bf16.msra.mxu0 %v1675
        %1731 = vmatprep.mubr.bf16.mxu0 %v1593
        %1732 = vmatmul.mubr.bf16.gmra.mxu0 %v1592
        %v1733 = vpop.f32.mrf.mxu0
        %v1734 = vadd.f32 %v1601, %v1733
        %v1735 = vpop.f32.mrf.mxu0
        %v1736 = vpop.f32.mrf.mxu0
        %v1737 = vadd.f32 %v1601, %v1736
        %v1738 = vpop.f32.mrf.mxu0
        %1739 = vmatprep.mubr.bf16.mxu0 %v1595
        %1740 = vmatmul.mubr.bf16.gmra.mxu0 %v1594
        %v1741 = vpop.f32.mrf.mxu0
        %v1742 = vadd.f32 %v1601, %v1741
        %v1743 = vpop.f32.mrf.mxu0
        %v1744 = vpop.f32.mrf.mxu0
        %v1745 = vadd.f32 %v1601, %v1744
        %v1746 = vpop.f32.mrf.mxu0
        %1747 = vdwg.mxu0
        %v1748 = vmul.f32 %v1734, 0.5
        %v1749 = vmul.f32 %v1737, 0.5
        %v1750 = vmul.f32 %v1742, 0.5
        %v1751 = vmul.f32 %v1745, 0.5
        %v1752 = vadd.f32 %v1748, %v1270
        %v1753 = vadd.f32 %v1749, %v1271
        %v1754 = vadd.f32 %v1750, %v1272
        %v1755 = vadd.f32 %v1751, %v1273
        %v1756 = vld [vmem:[#allocation12] sm:$0x1]
        %v1757 = vld [vmem:[#allocation14] sm:$0x1]
        %1758 = vadd.xlane.f32.xlu0 %v1752
        %v1759 = vpop.xlane.xlu0 %1758
        %1760 = vadd.xlane.f32.xlu0 %v1753
        %v1761 = vpop.xlane.xlu0 %1760
        %1762 = vadd.xlane.f32.xlu0 %v1754
        %v1763 = vpop.xlane.xlu0 %1762
        %1764 = vadd.xlane.f32.xlu0 %v1755
        %v1765 = vpop.xlane.xlu0 %1764
        %v1766 = vmul.f32 %v1759, %v1284
        %v1767 = vmul.f32 %v1761, %v1284
        %v1768 = vmul.f32 %v1763, %v1284
        %v1769 = vmul.f32 %v1765, %v1284
        %v1770 = vsub.f32 %v1752, %v1766
        %v1771 = vsub.f32 %v1753, %v1767
        %v1772 = vsub.f32 %v1754, %v1768
        %v1773 = vsub.f32 %v1755, %v1769
        %v1774 = vmul.f32 %v1770, %v1770
        %v1775 = vmul.f32 %v1771, %v1771
        %v1776 = vmul.f32 %v1772, %v1772
        %v1777 = vmul.f32 %v1773, %v1773
        %1778 = vadd.xlane.f32.xlu0 %v1774
        %v1779 = vpop.xlane.xlu0 %1778
        %1780 = vadd.xlane.f32.xlu0 %v1775
        %v1781 = vpop.xlane.xlu0 %1780
        %1782 = vadd.xlane.f32.xlu0 %v1776
        %v1783 = vpop.xlane.xlu0 %1782
        %1784 = vadd.xlane.f32.xlu0 %v1777
        %v1785 = vpop.xlane.xlu0 %1784
        %v1786 = vmul.f32 %v1779, %v1284
        %v1787 = vmul.f32 %v1781, %v1284
        %v1788 = vmul.f32 %v1783, %v1284
        %v1789 = vmul.f32 %v1785, %v1284
        %v1790 = vadd.f32 %v1786, 1e-05
        %v1791 = vadd.f32 %v1787, 1e-05
        %v1792 = vadd.f32 %v1788, 1e-05
        %v1793 = vadd.f32 %v1789, 1e-05
        %v1794 = vrsqrt.pop %v1790
        %v1795 = vrsqrt.pop %v1791
        %v1796 = vrsqrt.pop %v1792
        %v1797 = vrsqrt.pop %v1793
        %v1798 = vmul.f32 %v1770, %v1794
        %v1799 = vmul.f32 %v1771, %v1795
        %v1800 = vmul.f32 %v1772, %v1796
        %v1801 = vmul.f32 %v1773, %v1797
        %v1803 = vlaneseq
        %v1804 = vshrl.u32 %v1803, 7
        %v1805 = vsub.s32 0, %v1804
        %v1806 = vrot.slane %v1756, %v1805
        %v1808 = vmul.f32 %v1798, %v1806
        %v1809 = vmul.f32 %v1799, %v1806
        %v1810 = vmul.f32 %v1800, %v1806
        %v1811 = vmul.f32 %v1801, %v1806
        %v1813 = vlaneseq
        %v1814 = vshrl.u32 %v1813, 7
        %v1815 = vsub.s32 0, %v1814
        %v1816 = vrot.slane %v1757, %v1815
        %v1818 = vadd.f32 %v1808, %v1816
        %v1819 = vadd.f32 %v1809, %v1816
        %v1820 = vadd.f32 %v1810, %v1816
        %v1821 = vadd.f32 %v1811, %v1816
        %v1822 = vld [vmem:[%s21] sm:$0xff]
        %v1823 = vld [vmem:[%s21 + $0x8] sm:$0xff]
        %v1824 = vld [vmem:[%s21 + $0x10] sm:$0xff]
        %v1825 = vld [vmem:[%s21 + $0x18] sm:$0xff]
        %v1826 = vld [vmem:[%s21 + $0x20] sm:$0xff]
        %v1827 = vld [vmem:[%s21 + $0x28] sm:$0xff]
        %v1828 = vld [vmem:[%s21 + $0x30] sm:$0xff]
        %v1829 = vld [vmem:[%s21 + $0x38] sm:$0xff]
        %v1830 = vld [vmem:[%s21 + $0x40] sm:$0xff]
        %v1831 = vld [vmem:[%s21 + $0x48] sm:$0xff]
        %v1832 = vld [vmem:[%s21 + $0x50] sm:$0xff]
        %v1833 = vld [vmem:[%s21 + $0x58] sm:$0xff]
        %v1834 = vld [vmem:[%s21 + $0x60] sm:$0xff]
        %v1835 = vld [vmem:[%s21 + $0x68] sm:$0xff]
        %v1836 = vld [vmem:[%s21 + $0x70] sm:$0xff]
        %v1837 = vld [vmem:[%s21 + $0x78] sm:$0xff]
        %v1838 = vpack.c.bf16 %v1819, %v1818
        %v1839 = vpack.c.bf16 %v1821, %v1820
        %v1840 = vld [vmem:[#allocation15] sm:$0x3]
        %v1842 = vlaneseq
        %v1843 = vshrl.u32 %v1842, 7
        %v1844 = vsub.s32 0, %v1843
        %v1845 = vrot.slane %v1840, %v1844
        %v1846 = vlaneseq
        %v1847 = vshrl.u32 %v1846, 7
        %v1848 = vsub.s32 1, %v1847
        %v1849 = vrot.slane %v1840, %v1848
        %v1868 = vunpack.c.l.b16 %v1822
        %v1869 = vunpack.c.h.b16 %v1822
        %v1870 = vunpack.c.l.b16 %v1823
        %v1871 = vunpack.c.h.b16 %v1823
        %v1872 = vunpack.c.l.b16 %v1824
        %v1873 = vunpack.c.h.b16 %v1824
        %v1874 = vunpack.c.l.b16 %v1825
        %v1875 = vunpack.c.h.b16 %v1825
        %v1876 = vunpack.c.l.b16 %v1826
        %v1877 = vunpack.c.h.b16 %v1826
        %v1878 = vunpack.c.l.b16 %v1827
        %v1879 = vunpack.c.h.b16 %v1827
        %v1880 = vunpack.c.l.b16 %v1828
        %v1881 = vunpack.c.h.b16 %v1828
        %v1882 = vunpack.c.l.b16 %v1829
        %v1883 = vunpack.c.h.b16 %v1829
        %v1884 = vunpack.c.l.b16 %v1830
        %v1885 = vunpack.c.h.b16 %v1830
        %v1886 = vunpack.c.l.b16 %v1831
        %v1887 = vunpack.c.h.b16 %v1831
        %v1888 = vunpack.c.l.b16 %v1832
        %v1889 = vunpack.c.h.b16 %v1832
        %v1890 = vunpack.c.l.b16 %v1833
        %v1891 = vunpack.c.h.b16 %v1833
        %v1892 = vunpack.c.l.b16 %v1834
        %v1893 = vunpack.c.h.b16 %v1834
        %v1894 = vunpack.c.l.b16 %v1835
        %v1895 = vunpack.c.h.b16 %v1835
        %v1896 = vunpack.c.l.b16 %v1836
        %v1897 = vunpack.c.h.b16 %v1836
        %v1898 = vunpack.c.l.b16 %v1837
        %v1899 = vunpack.c.h.b16 %v1837
        %v1900 = vpack.c.b16 %v1870, %v1868
        %v1901 = vpack.c.b16 %v1871, %v1869
        %v1902 = vpack.c.b16 %v1874, %v1872
        %v1903 = vpack.c.b16 %v1875, %v1873
        %v1904 = vpack.c.b16 %v1878, %v1876
        %v1905 = vpack.c.b16 %v1879, %v1877
        %v1906 = vpack.c.b16 %v1882, %v1880
        %v1907 = vpack.c.b16 %v1883, %v1881
        %v1908 = vpack.c.b16 %v1886, %v1884
        %v1909 = vpack.c.b16 %v1887, %v1885
        %v1910 = vpack.c.b16 %v1890, %v1888
        %v1911 = vpack.c.b16 %v1891, %v1889
        %v1912 = vpack.c.b16 %v1894, %v1892
        %v1913 = vpack.c.b16 %v1895, %v1893
        %v1914 = vpack.c.b16 %v1898, %v1896
        %v1915 = vpack.c.b16 %v1899, %v1897
        %1932 = vmatprep.subr.bf16.mxu0 %v1915
        %1933 = vmatpush1.bf16.msra.mxu0 %v1914
        %1934 = vmatprep.subr.bf16.mxu0 %v1913
        %1935 = vmatpush1.bf16.msra.mxu0 %v1912
        %1936 = vmatprep.subr.bf16.mxu0 %v1911
        %1937 = vmatpush1.bf16.msra.mxu0 %v1910
        %1938 = vmatprep.subr.bf16.mxu0 %v1909
        %1939 = vmatpush1.bf16.msra.mxu0 %v1908
        %1940 = vmatprep.subr.bf16.mxu0 %v1907
        %1941 = vmatpush1.bf16.msra.mxu0 %v1906
        %1942 = vmatprep.subr.bf16.mxu0 %v1905
        %1943 = vmatpush1.bf16.msra.mxu0 %v1904
        %1944 = vmatprep.subr.bf16.mxu0 %v1903
        %1945 = vmatpush1.bf16.msra.mxu0 %v1902
        %1946 = vmatprep.subr.bf16.mxu0 %v1901
        %1947 = vmatpush1.bf16.msra.mxu0 %v1900
        %1948 = vmatprep.subr.bf16.mxu0 0
        %1949 = vmatpush2.bf16.msra.mxu0 0
        %1950 = vmatprep.subr.bf16.mxu0 0
        %1951 = vmatpush2.bf16.msra.mxu0 0
        %1952 = vmatprep.subr.bf16.mxu0 0
        %1953 = vmatpush2.bf16.msra.mxu0 0
        %1954 = vmatprep.subr.bf16.mxu0 0
        %1955 = vmatpush2.bf16.msra.mxu0 0
        %1956 = vmatprep.subr.bf16.mxu0 0
        %1957 = vmatpush2.bf16.msra.mxu0 0
        %1958 = vmatprep.subr.bf16.mxu0 0
        %1959 = vmatpush2.bf16.msra.mxu0 0
        %1960 = vmatprep.subr.bf16.mxu0 0
        %1961 = vmatpush2.bf16.msra.mxu0 0
        %1962 = vmatprep.subr.bf16.mxu0 0
        %1963 = vmatpush2.bf16.msra.mxu0 0
        %1964 = vmatprep.mubr.bf16.mxu0 0
        %1965 = vmatmul.mubr.bf16.gmra.mxu0 %v1838
        %v1966 = vpop.f32.mrf.mxu0
        %v1967 = vadd.f32 %v1845, %v1966
        %v1968 = vpop.f32.mrf.mxu0
        %v1969 = vadd.f32 %v1849, %v1968
        %v1970 = vpop.f32.mrf.mxu0
        %v1971 = vadd.f32 %v1845, %v1970
        %v1972 = vpop.f32.mrf.mxu0
        %v1973 = vadd.f32 %v1849, %v1972
        %1974 = vmatprep.mubr.bf16.mxu0 0
        %1975 = vmatmul.mubr.bf16.gmra.mxu0 %v1839
        %v1976 = vpop.f32.mrf.mxu0
        %v1977 = vadd.f32 %v1845, %v1976
        %v1978 = vpop.f32.mrf.mxu0
        %v1979 = vadd.f32 %v1849, %v1978
        %v1980 = vpop.f32.mrf.mxu0
        %v1981 = vadd.f32 %v1845, %v1980
        %v1982 = vpop.f32.mrf.mxu0
        %v1983 = vadd.f32 %v1849, %v1982
        %1984 = vdwg.mxu0
        %v1985 = vxor.u32 %v1969, 2147483648
        %v1986 = vxor.u32 %v1973, 2147483648
        %v1987 = vxor.u32 %v1979, 2147483648
        %v1988 = vxor.u32 %v1983, 2147483648
        %v1989 = vmul.f32 %v1985, 1.442695
        %v1990 = vpow.pop %v1989
        %v1991 = vmul.f32 %v1986, 1.442695
        %v1992 = vpow.pop %v1991
        %v1993 = vmul.f32 %v1987, 1.442695
        %v1994 = vpow.pop %v1993
        %v1995 = vmul.f32 %v1988, 1.442695
        %v1996 = vpow.pop %v1995
        %v1997 = vadd.f32 %v1990, 1.0
        %v1998 = vadd.f32 %v1992, 1.0
        %v1999 = vadd.f32 %v1994, 1.0
        %v2000 = vadd.f32 %v1996, 1.0
        %v2001 = vrcp.pop %v1997
        %v2002 = vmul.f32 1.0, %v2001
        %v2003 = vrcp.pop %v1998
        %v2004 = vmul.f32 1.0, %v2003
        %v2005 = vrcp.pop %v1999
        %v2006 = vmul.f32 1.0, %v2005
        %v2007 = vrcp.pop %v2000
        %v2008 = vmul.f32 1.0, %v2007
        %v2009 = vmul.f32 %v1967, %v2002
        %v2010 = vmul.f32 %v1971, %v2004
        %v2011 = vmul.f32 %v1977, %v2006
        %v2012 = vmul.f32 %v1981, %v2008
        %2013 = vst [vmem:[#allocation2] sm:$0x7] 0.0
        %2014 = vst [vmem:[#allocation2 + $0x23] sm:$0x7] 0.0
        %2015 = vst [vmem:[#allocation2 + $0x3] sm:$0xff] %v2009
        %2016 = vst [vmem:[#allocation2 + $0xb] sm:$0xff] %v2010
        %2017 = vst [vmem:[#allocation2 + $0x13] sm:$0xff] %v2011
        %2018 = vst [vmem:[#allocation2 + $0x1b] sm:$0xff] %v2012
        %v2019 = vld [vmem:[%s25] sm:$0x7f]
        %v2020 = vld [vmem:[#allocation2] sm:$0xff]
        %v2021 = vld [vmem:[#allocation2 + $0x8] sm:$0xff]
        %v2022 = vld [vmem:[#allocation2 + $0x10] sm:$0xff]
        %v2023 = vld [vmem:[#allocation2 + $0x18] sm:$0xff]
        %v2024 = vlaneseq
        %v2025 = vshrl.u32 %v2024, 7
        %v2026 = vsub.s32 0, %v2025
        %v2027 = vrot.slane %v2019, %v2026
        %v2028 = vmul.f32 %v2020, %v2027
        %v2029 = vmul.f32 %v2021, %v2027
        %v2030 = vmul.f32 %v2022, %v2027
        %v2031 = vmul.f32 %v2023, %v2027
        %v2032 = vadd.f32 %v2028, 0.0
        %v2033 = vadd.f32 %v2029, 0.0
        %v2034 = vadd.f32 %v2030, 0.0
        %v2035 = vadd.f32 %v2031, 0.0
        %v2036 = vld [vmem:[#allocation2 + $0x1] sm:$0xff]
        %v2037 = vld [vmem:[#allocation2 + $0x9] sm:$0xff]
        %v2038 = vld [vmem:[#allocation2 + $0x11] sm:$0xff]
        %v2039 = vld [vmem:[#allocation2 + $0x19] sm:$0xff]
        %v2040 = vlaneseq
        %v2041 = vshrl.u32 %v2040, 7
        %v2042 = vsub.s32 1, %v2041
        %v2043 = vrot.slane %v2019, %v2042
        %v2044 = vmul.f32 %v2036, %v2043
        %v2045 = vmul.f32 %v2037, %v2043
        %v2046 = vmul.f32 %v2038, %v2043
        %v2047 = vmul.f32 %v2039, %v2043
        %v2048 = vadd.f32 %v2032, %v2044
        %v2049 = vadd.f32 %v2033, %v2045
        %v2050 = vadd.f32 %v2034, %v2046
        %v2051 = vadd.f32 %v2035, %v2047
        %v2052 = vld [vmem:[#allocation2 + $0x2] sm:$0xff]
        %v2053 = vld [vmem:[#allocation2 + $0xa] sm:$0xff]
        %v2054 = vld [vmem:[#allocation2 + $0x12] sm:$0xff]
        %v2055 = vld [vmem:[#allocation2 + $0x1a] sm:$0xff]
        %v2056 = vlaneseq
        %v2057 = vshrl.u32 %v2056, 7
        %v2058 = vsub.s32 2, %v2057
        %v2059 = vrot.slane %v2019, %v2058
        %v2060 = vmul.f32 %v2052, %v2059
        %v2061 = vmul.f32 %v2053, %v2059
        %v2062 = vmul.f32 %v2054, %v2059
        %v2063 = vmul.f32 %v2055, %v2059
        %v2064 = vadd.f32 %v2048, %v2060
        %v2065 = vadd.f32 %v2049, %v2061
        %v2066 = vadd.f32 %v2050, %v2062
        %v2067 = vadd.f32 %v2051, %v2063
        %v2068 = vld [vmem:[#allocation2 + $0x3] sm:$0xff]
        %v2069 = vld [vmem:[#allocation2 + $0xb] sm:$0xff]
        %v2070 = vld [vmem:[#allocation2 + $0x13] sm:$0xff]
        %v2071 = vld [vmem:[#allocation2 + $0x1b] sm:$0xff]
        %v2072 = vlaneseq
        %v2073 = vshrl.u32 %v2072, 7
        %v2074 = vsub.s32 3, %v2073
        %v2075 = vrot.slane %v2019, %v2074
        %v2076 = vmul.f32 %v2068, %v2075
        %v2077 = vmul.f32 %v2069, %v2075
        %v2078 = vmul.f32 %v2070, %v2075
        %v2079 = vmul.f32 %v2071, %v2075
        %v2080 = vadd.f32 %v2064, %v2076
        %v2081 = vadd.f32 %v2065, %v2077
        %v2082 = vadd.f32 %v2066, %v2078
        %v2083 = vadd.f32 %v2067, %v2079
        %v2084 = vld [vmem:[#allocation2 + $0x4] sm:$0xff]
        %v2085 = vld [vmem:[#allocation2 + $0xc] sm:$0xff]
        %v2086 = vld [vmem:[#allocation2 + $0x14] sm:$0xff]
        %v2087 = vld [vmem:[#allocation2 + $0x1c] sm:$0xff]
        %v2088 = vlaneseq
        %v2089 = vshrl.u32 %v2088, 7
        %v2090 = vsub.s32 4, %v2089
        %v2091 = vrot.slane %v2019, %v2090
        %v2092 = vmul.f32 %v2084, %v2091
        %v2093 = vmul.f32 %v2085, %v2091
        %v2094 = vmul.f32 %v2086, %v2091
        %v2095 = vmul.f32 %v2087, %v2091
        %v2096 = vadd.f32 %v2080, %v2092
        %v2097 = vadd.f32 %v2081, %v2093
        %v2098 = vadd.f32 %v2082, %v2094
        %v2099 = vadd.f32 %v2083, %v2095
        %v2100 = vld [vmem:[#allocation2 + $0x5] sm:$0xff]
        %v2101 = vld [vmem:[#allocation2 + $0xd] sm:$0xff]
        %v2102 = vld [vmem:[#allocation2 + $0x15] sm:$0xff]
        %v2103 = vld [vmem:[#allocation2 + $0x1d] sm:$0xff]
        %v2104 = vlaneseq
        %v2105 = vshrl.u32 %v2104, 7
        %v2106 = vsub.s32 5, %v2105
        %v2107 = vrot.slane %v2019, %v2106
        %v2108 = vmul.f32 %v2100, %v2107
        %v2109 = vmul.f32 %v2101, %v2107
        %v2110 = vmul.f32 %v2102, %v2107
        %v2111 = vmul.f32 %v2103, %v2107
        %v2112 = vadd.f32 %v2096, %v2108
        %v2113 = vadd.f32 %v2097, %v2109
        %v2114 = vadd.f32 %v2098, %v2110
        %v2115 = vadd.f32 %v2099, %v2111
        %v2116 = vld [vmem:[#allocation2 + $0x6] sm:$0xff]
        %v2117 = vld [vmem:[#allocation2 + $0xe] sm:$0xff]
        %v2118 = vld [vmem:[#allocation2 + $0x16] sm:$0xff]
        %v2119 = vld [vmem:[#allocation2 + $0x1e] sm:$0xff]
        %v2120 = vlaneseq
        %v2121 = vshrl.u32 %v2120, 7
        %v2122 = vsub.s32 6, %v2121
        %v2123 = vrot.slane %v2019, %v2122
        %v2124 = vmul.f32 %v2116, %v2123
        %v2125 = vmul.f32 %v2117, %v2123
        %v2126 = vmul.f32 %v2118, %v2123
        %v2127 = vmul.f32 %v2119, %v2123
        %v2128 = vadd.f32 %v2112, %v2124
        %v2129 = vadd.f32 %v2113, %v2125
        %v2130 = vadd.f32 %v2114, %v2126
        %v2131 = vadd.f32 %v2115, %v2127
        %v2132 = vld [vmem:[#allocation17] sm:$0x1]
        %v2134 = vlaneseq
        %v2135 = vshrl.u32 %v2134, 7
        %v2136 = vsub.s32 0, %v2135
        %v2137 = vrot.slane %v2132, %v2136
        %v2139 = vadd.f32 %v2128, %v2137
        %v2140 = vadd.f32 %v2129, %v2137
        %v2141 = vadd.f32 %v2130, %v2137
        %v2142 = vadd.f32 %v2131, %v2137
        %v2143 = vld [vmem:[#allocation18] sm:$0x1]
        %v2144 = vld [vmem:[#allocation23] sm:$0x1]
        %v2145 = vadd.f32 %v2144, 1e-05
        %v2146 = vrsqrt.pop %v2145
        %v2147 = vmul.f32 %v2143, %v2146
        %v2148 = vld [vmem:[#allocation21] sm:$0x1]
        %v2150 = vlaneseq
        %v2151 = vshrl.u32 %v2150, 7
        %v2152 = vsub.s32 0, %v2151
        %v2153 = vrot.slane %v2148, %v2152
        %v2155 = vsub.f32 %v2139, %v2153
        %v2156 = vsub.f32 %v2140, %v2153
        %v2157 = vsub.f32 %v2141, %v2153
        %v2158 = vsub.f32 %v2142, %v2153
        %v2160 = vlaneseq
        %v2161 = vshrl.u32 %v2160, 7
        %v2162 = vsub.s32 0, %v2161
        %v2163 = vrot.slane %v2147, %v2162
        %v2165 = vmul.f32 %v2155, %v2163
        %v2166 = vmul.f32 %v2156, %v2163
        %v2167 = vmul.f32 %v2157, %v2163
        %v2168 = vmul.f32 %v2158, %v2163
        %v2169 = vld [vmem:[#allocation20] sm:$0x1]
        %v2171 = vlaneseq
        %v2172 = vshrl.u32 %v2171, 7
        %v2173 = vsub.s32 0, %v2172
        %v2174 = vrot.slane %v2169, %v2173
        %v2176 = vadd.f32 %v2165, %v2174
        %v2177 = vadd.f32 %v2166, %v2174
        %v2178 = vadd.f32 %v2167, %v2174
        %v2179 = vadd.f32 %v2168, %v2174
        %v2180 = vxor.u32 %v2176, 2147483648
        %v2181 = vxor.u32 %v2177, 2147483648
        %v2182 = vxor.u32 %v2178, 2147483648
        %v2183 = vxor.u32 %v2179, 2147483648
        %v2184 = vmul.f32 %v2180, 1.442695
        %v2185 = vpow.pop %v2184
        %v2186 = vmul.f32 %v2181, 1.442695
        %v2187 = vpow.pop %v2186
        %v2188 = vmul.f32 %v2182, 1.442695
        %v2189 = vpow.pop %v2188
        %v2190 = vmul.f32 %v2183, 1.442695
        %v2191 = vpow.pop %v2190
        %v2192 = vadd.f32 %v2185, 1.0
        %v2193 = vadd.f32 %v2187, 1.0
        %v2194 = vadd.f32 %v2189, 1.0
        %v2195 = vadd.f32 %v2191, 1.0
        %v2196 = vrcp.pop %v2192
        %v2197 = vmul.f32 1.0, %v2196
        %v2198 = vrcp.pop %v2193
        %v2199 = vmul.f32 1.0, %v2198
        %v2200 = vrcp.pop %v2194
        %v2201 = vmul.f32 1.0, %v2200
        %v2202 = vrcp.pop %v2195
        %v2203 = vmul.f32 1.0, %v2202
        %v2204 = vmul.f32 %v2176, %v2197
        %v2205 = vmul.f32 %v2177, %v2199
        %v2206 = vmul.f32 %v2178, %v2201
        %v2207 = vmul.f32 %v2179, %v2203
        %v2208 = vld [vmem:[%s37] sm:$0xf]
        %v2209 = vld [vmem:[%s37 + $0x4] sm:$0xf]
        %v2210 = vld [vmem:[%s37 + $0x8] sm:$0xf]
        %v2211 = vld [vmem:[%s37 + $0xc] sm:$0xf]
        %v2212 = vld [vmem:[%s37 + $0x10] sm:$0xf]
        %v2213 = vld [vmem:[%s37 + $0x14] sm:$0xf]
        %v2214 = vld [vmem:[%s37 + $0x18] sm:$0xf]
        %v2215 = vld [vmem:[%s37 + $0x1c] sm:$0xf]
        %v2216 = vld [vmem:[%s37 + $0x20] sm:$0xf]
        %v2217 = vld [vmem:[%s37 + $0x24] sm:$0xf]
        %v2218 = vld [vmem:[%s37 + $0x28] sm:$0xf]
        %v2219 = vld [vmem:[%s37 + $0x2c] sm:$0xf]
        %v2220 = vld [vmem:[%s37 + $0x30] sm:$0xf]
        %v2221 = vld [vmem:[%s37 + $0x34] sm:$0xf]
        %v2222 = vld [vmem:[%s37 + $0x38] sm:$0xf]
        %v2223 = vld [vmem:[%s37 + $0x3c] sm:$0xf]
        %v2224 = vpack.c.bf16 %v2205, %v2204
        %v2225 = vpack.c.bf16 %v2207, %v2206
        %v2226 = vld [vmem:[%s39] sm:$0x1]
        %v2228 = vlaneseq
        %v2229 = vshrl.u32 %v2228, 7
        %v2230 = vsub.s32 0, %v2229
        %v2231 = vrot.slane %v2226, %v2230
        %v2249 = vunpack.c.l.b16 %v2208
        %v2250 = vunpack.c.l.b16 %v2209
        %v2251 = vunpack.c.l.b16 %v2210
        %v2252 = vunpack.c.l.b16 %v2211
        %v2253 = vunpack.c.l.b16 %v2212
        %v2254 = vunpack.c.l.b16 %v2213
        %v2255 = vunpack.c.l.b16 %v2214
        %v2256 = vunpack.c.l.b16 %v2215
        %v2257 = vunpack.c.l.b16 %v2216
        %v2258 = vunpack.c.l.b16 %v2217
        %v2259 = vunpack.c.l.b16 %v2218
        %v2260 = vunpack.c.l.b16 %v2219
        %v2261 = vunpack.c.l.b16 %v2220
        %v2262 = vunpack.c.l.b16 %v2221
        %v2263 = vunpack.c.l.b16 %v2222
        %v2264 = vunpack.c.l.b16 %v2223
        %v2265 = vpack.c.b16 %v2250, %v2249
        %v2266 = vpack.c.b16 %v2252, %v2251
        %v2267 = vpack.c.b16 %v2254, %v2253
        %v2268 = vpack.c.b16 %v2256, %v2255
        %v2269 = vpack.c.b16 %v2258, %v2257
        %v2270 = vpack.c.b16 %v2260, %v2259
        %v2271 = vpack.c.b16 %v2262, %v2261
        %v2272 = vpack.c.b16 %v2264, %v2263
        %2281 = vmatprep.subr.bf16.mxu0 0
        %2282 = vmatpush1.bf16.msra.mxu0 %v2272
        %2283 = vmatprep.subr.bf16.mxu0 0
        %2284 = vmatpush1.bf16.msra.mxu0 %v2271
        %2285 = vmatprep.subr.bf16.mxu0 0
        %2286 = vmatpush1.bf16.msra.mxu0 %v2270
        %2287 = vmatprep.subr.bf16.mxu0 0
        %2288 = vmatpush1.bf16.msra.mxu0 %v2269
        %2289 = vmatprep.subr.bf16.mxu0 0
        %2290 = vmatpush1.bf16.msra.mxu0 %v2268
        %2291 = vmatprep.subr.bf16.mxu0 0
        %2292 = vmatpush1.bf16.msra.mxu0 %v2267
        %2293 = vmatprep.subr.bf16.mxu0 0
        %2294 = vmatpush1.bf16.msra.mxu0 %v2266
        %2295 = vmatprep.subr.bf16.mxu0 0
        %2296 = vmatpush1.bf16.msra.mxu0 %v2265
        %2297 = vmatprep.subr.bf16.mxu0 0
        %2298 = vmatpush2.bf16.msra.mxu0 0
        %2299 = vmatprep.subr.bf16.mxu0 0
        %2300 = vmatpush2.bf16.msra.mxu0 0
        %2301 = vmatprep.subr.bf16.mxu0 0
        %2302 = vmatpush2.bf16.msra.mxu0 0
        %2303 = vmatprep.subr.bf16.mxu0 0
        %2304 = vmatpush2.bf16.msra.mxu0 0
        %2305 = vmatprep.subr.bf16.mxu0 0
        %2306 = vmatpush2.bf16.msra.mxu0 0
        %2307 = vmatprep.subr.bf16.mxu0 0
        %2308 = vmatpush2.bf16.msra.mxu0 0
        %2309 = vmatprep.subr.bf16.mxu0 0
        %2310 = vmatpush2.bf16.msra.mxu0 0
        %2311 = vmatprep.subr.bf16.mxu0 0
        %2312 = vmatpush2.bf16.msra.mxu0 0
        %2313 = vmatprep.mubr.bf16.mxu0 0
        %2314 = vmatmul.mubr.bf16.gmra.mxu0 %v2224
        %v2315 = vpop.f32.mrf.mxu0
        %v2316 = vadd.f32 %v2231, %v2315
        %v2317 = vpop.f32.mrf.mxu0
        %v2318 = vpop.f32.mrf.mxu0
        %v2319 = vadd.f32 %v2231, %v2318
        %v2320 = vpop.f32.mrf.mxu0
        %2321 = vmatprep.mubr.bf16.mxu0 0
        %2322 = vmatmul.mubr.bf16.gmra.mxu0 %v2225
        %v2323 = vpop.f32.mrf.mxu0
        %v2324 = vadd.f32 %v2231, %v2323
        %v2325 = vpop.f32.mrf.mxu0
        %v2326 = vpop.f32.mrf.mxu0
        %v2327 = vadd.f32 %v2231, %v2326
        %v2328 = vpop.f32.mrf.mxu0
        %2329 = vdwg.mxu0
        %v2330 = vadd.f32 %v2316, %v1752
        %v2331 = vadd.f32 %v2319, %v1753
        %v2332 = vadd.f32 %v2324, %v1754
        %v2333 = vadd.f32 %v2327, %v1755
        %v2334 = vld [vmem:[%s41] sm:$0x1]
        %v2335 = vld [vmem:[%s43] sm:$0x1]
        %2336 = vadd.xlane.f32.xlu0 %v2330
        %v2337 = vpop.xlane.xlu0 %2336
        %2338 = vadd.xlane.f32.xlu0 %v2331
        %v2339 = vpop.xlane.xlu0 %2338
        %2340 = vadd.xlane.f32.xlu0 %v2332
        %v2341 = vpop.xlane.xlu0 %2340
        %2342 = vadd.xlane.f32.xlu0 %v2333
        %v2343 = vpop.xlane.xlu0 %2342
        %v2344 = vmul.f32 %v2337, %v1284
        %v2345 = vmul.f32 %v2339, %v1284
        %v2346 = vmul.f32 %v2341, %v1284
        %v2347 = vmul.f32 %v2343, %v1284
        %v2348 = vsub.f32 %v2330, %v2344
        %v2349 = vsub.f32 %v2331, %v2345
        %v2350 = vsub.f32 %v2332, %v2346
        %v2351 = vsub.f32 %v2333, %v2347
        %v2352 = vmul.f32 %v2348, %v2348
        %v2353 = vmul.f32 %v2349, %v2349
        %v2354 = vmul.f32 %v2350, %v2350
        %v2355 = vmul.f32 %v2351, %v2351
        %2356 = vadd.xlane.f32.xlu0 %v2352
        %v2357 = vpop.xlane.xlu0 %2356
        %2358 = vadd.xlane.f32.xlu0 %v2353
        %v2359 = vpop.xlane.xlu0 %2358
        %2360 = vadd.xlane.f32.xlu0 %v2354
        %v2361 = vpop.xlane.xlu0 %2360
        %2362 = vadd.xlane.f32.xlu0 %v2355
        %v2363 = vpop.xlane.xlu0 %2362
        %v2364 = vmul.f32 %v2357, %v1284
        %v2365 = vmul.f32 %v2359, %v1284
        %v2366 = vmul.f32 %v2361, %v1284
        %v2367 = vmul.f32 %v2363, %v1284
        %v2368 = vadd.f32 %v2364, 1e-05
        %v2369 = vadd.f32 %v2365, 1e-05
        %v2370 = vadd.f32 %v2366, 1e-05
        %v2371 = vadd.f32 %v2367, 1e-05
        %v2372 = vrsqrt.pop %v2368
        %v2373 = vrsqrt.pop %v2369
        %v2374 = vrsqrt.pop %v2370
        %v2375 = vrsqrt.pop %v2371
        %v2376 = vmul.f32 %v2348, %v2372
        %v2377 = vmul.f32 %v2349, %v2373
        %v2378 = vmul.f32 %v2350, %v2374
        %v2379 = vmul.f32 %v2351, %v2375
        %v2381 = vlaneseq
        %v2382 = vshrl.u32 %v2381, 7
        %v2383 = vsub.s32 0, %v2382
        %v2384 = vrot.slane %v2334, %v2383
        %v2386 = vmul.f32 %v2376, %v2384
        %v2387 = vmul.f32 %v2377, %v2384
        %v2388 = vmul.f32 %v2378, %v2384
        %v2389 = vmul.f32 %v2379, %v2384
        %v2391 = vlaneseq
        %v2392 = vshrl.u32 %v2391, 7
        %v2393 = vsub.s32 0, %v2392
        %v2394 = vrot.slane %v2335, %v2393
        %v2396 = vadd.f32 %v2386, %v2394
        %v2397 = vadd.f32 %v2387, %v2394
        %v2398 = vadd.f32 %v2388, %v2394
        %v2399 = vadd.f32 %v2389, %v2394
        %v2400 = vpack.c.bf16 %v2397, %v2396
        %v2401 = vpack.c.bf16 %v2399, %v2398
        %v2402 = vlaneseq
        %v2403 = vand.u32 %v2402, 127
        %s2404 = sld [smem:[#allocation5 + %s101]]
        %v2405 = vstv %s2404
        %vm2406 = vcmp.lt.s32.totalorder %v2403, %v2405
        %v2407 = vsel %vm2406, 0.0, -1e+30
        %v2408 = vld [vmem:[%s65] sm:$0xf]
        %v2409 = vld [vmem:[%s65 + $0x4] sm:$0xf]
        %v2410 = vld [vmem:[%s65 + $0x8] sm:$0xf]
        %v2411 = vld [vmem:[%s65 + $0xc] sm:$0xf]
        %v2412 = vld [vmem:[%s65 + $0x10] sm:$0xf]
        %v2413 = vld [vmem:[%s65 + $0x14] sm:$0xf]
        %v2414 = vld [vmem:[%s65 + $0x18] sm:$0xf]
        %v2415 = vld [vmem:[%s65 + $0x1c] sm:$0xf]
        %v2416 = vld [vmem:[%s65 + $0x20] sm:$0xf]
        %v2417 = vld [vmem:[%s65 + $0x24] sm:$0xf]
        %v2418 = vld [vmem:[%s65 + $0x28] sm:$0xf]
        %v2419 = vld [vmem:[%s65 + $0x2c] sm:$0xf]
        %v2420 = vld [vmem:[%s65 + $0x30] sm:$0xf]
        %v2421 = vld [vmem:[%s65 + $0x34] sm:$0xf]
        %v2422 = vld [vmem:[%s65 + $0x38] sm:$0xf]
        %v2423 = vld [vmem:[%s65 + $0x3c] sm:$0xf]
        %v2424 = vld [vmem:[%s71] sm:$0x1]
        %v2426 = vlaneseq
        %v2427 = vshrl.u32 %v2426, 7
        %v2428 = vsub.s32 0, %v2427
        %v2429 = vrot.slane %v2424, %v2428
        %v2447 = vunpack.c.l.b16 %v2408
        %v2448 = vunpack.c.l.b16 %v2409
        %v2449 = vunpack.c.l.b16 %v2410
        %v2450 = vunpack.c.l.b16 %v2411
        %v2451 = vunpack.c.l.b16 %v2412
        %v2452 = vunpack.c.l.b16 %v2413
        %v2453 = vunpack.c.l.b16 %v2414
        %v2454 = vunpack.c.l.b16 %v2415
        %v2455 = vunpack.c.l.b16 %v2416
        %v2456 = vunpack.c.l.b16 %v2417
        %v2457 = vunpack.c.l.b16 %v2418
        %v2458 = vunpack.c.l.b16 %v2419
        %v2459 = vunpack.c.l.b16 %v2420
        %v2460 = vunpack.c.l.b16 %v2421
        %v2461 = vunpack.c.l.b16 %v2422
        %v2462 = vunpack.c.l.b16 %v2423
        %v2463 = vpack.c.b16 %v2448, %v2447
        %v2464 = vpack.c.b16 %v2450, %v2449
        %v2465 = vpack.c.b16 %v2452, %v2451
        %v2466 = vpack.c.b16 %v2454, %v2453
        %v2467 = vpack.c.b16 %v2456, %v2455
        %v2468 = vpack.c.b16 %v2458, %v2457
        %v2469 = vpack.c.b16 %v2460, %v2459
        %v2470 = vpack.c.b16 %v2462, %v2461
        %2479 = vmatprep.subr.bf16.mxu0 0
        %2480 = vmatpush1.bf16.msra.mxu0 %v2470
        %2481 = vmatprep.subr.bf16.mxu0 0
        %2482 = vmatpush1.bf16.msra.mxu0 %v2469
        %2483 = vmatprep.subr.bf16.mxu0 0
        %2484 = vmatpush1.bf16.msra.mxu0 %v2468
        %2485 = vmatprep.subr.bf16.mxu0 0
        %2486 = vmatpush1.bf16.msra.mxu0 %v2467
        %2487 = vmatprep.subr.bf16.mxu0 0
        %2488 = vmatpush1.bf16.msra.mxu0 %v2466
        %2489 = vmatprep.subr.bf16.mxu0 0
        %2490 = vmatpush1.bf16.msra.mxu0 %v2465
        %2491 = vmatprep.subr.bf16.mxu0 0
        %2492 = vmatpush1.bf16.msra.mxu0 %v2464
        %2493 = vmatprep.subr.bf16.mxu0 0
        %2494 = vmatpush1.bf16.msra.mxu0 %v2463
        %2495 = vmatprep.subr.bf16.mxu0 0
        %2496 = vmatpush2.bf16.msra.mxu0 0
        %2497 = vmatprep.subr.bf16.mxu0 0
        %2498 = vmatpush2.bf16.msra.mxu0 0
        %2499 = vmatprep.subr.bf16.mxu0 0
        %2500 = vmatpush2.bf16.msra.mxu0 0
        %2501 = vmatprep.subr.bf16.mxu0 0
        %2502 = vmatpush2.bf16.msra.mxu0 0
        %2503 = vmatprep.subr.bf16.mxu0 0
        %2504 = vmatpush2.bf16.msra.mxu0 0
        %2505 = vmatprep.subr.bf16.mxu0 0
        %2506 = vmatpush2.bf16.msra.mxu0 0
        %2507 = vmatprep.subr.bf16.mxu0 0
        %2508 = vmatpush2.bf16.msra.mxu0 0
        %2509 = vmatprep.subr.bf16.mxu0 0
        %2510 = vmatpush2.bf16.msra.mxu0 0
        %2511 = vmatprep.mubr.bf16.mxu0 0
        %2512 = vmatmul.mubr.bf16.gmra.mxu0 %v2400
        %v2513 = vpop.f32.mrf.mxu0
        %v2514 = vadd.f32 %v2429, %v2513
        %v2515 = vpop.f32.mrf.mxu0
        %v2516 = vpop.f32.mrf.mxu0
        %v2517 = vadd.f32 %v2429, %v2516
        %v2518 = vpop.f32.mrf.mxu0
        %2519 = vmatprep.mubr.bf16.mxu0 0
        %2520 = vmatmul.mubr.bf16.gmra.mxu0 %v2401
        %v2521 = vpop.f32.mrf.mxu0
        %v2522 = vadd.f32 %v2429, %v2521
        %v2523 = vpop.f32.mrf.mxu0
        %v2524 = vpop.f32.mrf.mxu0
        %v2525 = vadd.f32 %v2429, %v2524
        %v2526 = vpop.f32.mrf.mxu0
        %2527 = vdwg.mxu0
        %v2528 = vpack.c.bf16 %v2517, %v2514
        %v2529 = vpack.c.bf16 %v2525, %v2522
        %v2530 = vld [vmem:[%s67] sm:$0xf]
        %v2531 = vld [vmem:[%s67 + $0x4] sm:$0xf]
        %v2532 = vld [vmem:[%s67 + $0x8] sm:$0xf]
        %v2533 = vld [vmem:[%s67 + $0xc] sm:$0xf]
        %v2534 = vld [vmem:[%s67 + $0x10] sm:$0xf]
        %v2535 = vld [vmem:[%s67 + $0x14] sm:$0xf]
        %v2536 = vld [vmem:[%s67 + $0x18] sm:$0xf]
        %v2537 = vld [vmem:[%s67 + $0x1c] sm:$0xf]
        %v2538 = vld [vmem:[%s67 + $0x20] sm:$0xf]
        %v2539 = vld [vmem:[%s67 + $0x24] sm:$0xf]
        %v2540 = vld [vmem:[%s67 + $0x28] sm:$0xf]
        %v2541 = vld [vmem:[%s67 + $0x2c] sm:$0xf]
        %v2542 = vld [vmem:[%s67 + $0x30] sm:$0xf]
        %v2543 = vld [vmem:[%s67 + $0x34] sm:$0xf]
        %v2544 = vld [vmem:[%s67 + $0x38] sm:$0xf]
        %v2545 = vld [vmem:[%s67 + $0x3c] sm:$0xf]
        %v2546 = vld [vmem:[%s73] sm:$0x1]
        %v2548 = vlaneseq
        %v2549 = vshrl.u32 %v2548, 7
        %v2550 = vsub.s32 0, %v2549
        %v2551 = vrot.slane %v2546, %v2550
        %v2569 = vunpack.c.l.b16 %v2530
        %v2570 = vunpack.c.l.b16 %v2531
        %v2571 = vunpack.c.l.b16 %v2532
        %v2572 = vunpack.c.l.b16 %v2533
        %v2573 = vunpack.c.l.b16 %v2534
        %v2574 = vunpack.c.l.b16 %v2535
        %v2575 = vunpack.c.l.b16 %v2536
        %v2576 = vunpack.c.l.b16 %v2537
        %v2577 = vunpack.c.l.b16 %v2538
        %v2578 = vunpack.c.l.b16 %v2539
        %v2579 = vunpack.c.l.b16 %v2540
        %v2580 = vunpack.c.l.b16 %v2541
        %v2581 = vunpack.c.l.b16 %v2542
        %v2582 = vunpack.c.l.b16 %v2543
        %v2583 = vunpack.c.l.b16 %v2544
        %v2584 = vunpack.c.l.b16 %v2545
        %v2585 = vpack.c.b16 %v2570, %v2569
        %v2586 = vpack.c.b16 %v2572, %v2571
        %v2587 = vpack.c.b16 %v2574, %v2573
        %v2588 = vpack.c.b16 %v2576, %v2575
        %v2589 = vpack.c.b16 %v2578, %v2577
        %v2590 = vpack.c.b16 %v2580, %v2579
        %v2591 = vpack.c.b16 %v2582, %v2581
        %v2592 = vpack.c.b16 %v2584, %v2583
        %2601 = vmatprep.subr.bf16.mxu0 0
        %2602 = vmatpush1.bf16.msra.mxu0 %v2592
        %2603 = vmatprep.subr.bf16.mxu0 0
        %2604 = vmatpush1.bf16.msra.mxu0 %v2591
        %2605 = vmatprep.subr.bf16.mxu0 0
        %2606 = vmatpush1.bf16.msra.mxu0 %v2590
        %2607 = vmatprep.subr.bf16.mxu0 0
        %2608 = vmatpush1.bf16.msra.mxu0 %v2589
        %2609 = vmatprep.subr.bf16.mxu0 0
        %2610 = vmatpush1.bf16.msra.mxu0 %v2588
        %2611 = vmatprep.subr.bf16.mxu0 0
        %2612 = vmatpush1.bf16.msra.mxu0 %v2587
        %2613 = vmatprep.subr.bf16.mxu0 0
        %2614 = vmatpush1.bf16.msra.mxu0 %v2586
        %2615 = vmatprep.subr.bf16.mxu0 0
        %2616 = vmatpush1.bf16.msra.mxu0 %v2585
        %2617 = vmatprep.subr.bf16.mxu0 0
        %2618 = vmatpush2.bf16.msra.mxu0 0
        %2619 = vmatprep.subr.bf16.mxu0 0
        %2620 = vmatpush2.bf16.msra.mxu0 0
        %2621 = vmatprep.subr.bf16.mxu0 0
        %2622 = vmatpush2.bf16.msra.mxu0 0
        %2623 = vmatprep.subr.bf16.mxu0 0
        %2624 = vmatpush2.bf16.msra.mxu0 0
        %2625 = vmatprep.subr.bf16.mxu0 0
        %2626 = vmatpush2.bf16.msra.mxu0 0
        %2627 = vmatprep.subr.bf16.mxu0 0
        %2628 = vmatpush2.bf16.msra.mxu0 0
        %2629 = vmatprep.subr.bf16.mxu0 0
        %2630 = vmatpush2.bf16.msra.mxu0 0
        %2631 = vmatprep.subr.bf16.mxu0 0
        %2632 = vmatpush2.bf16.msra.mxu0 0
        %2633 = vmatprep.mubr.bf16.mxu0 0
        %2634 = vmatmul.mubr.bf16.gmra.mxu0 %v2400
        %v2635 = vpop.f32.mrf.mxu0
        %v2636 = vadd.f32 %v2551, %v2635
        %v2637 = vpop.f32.mrf.mxu0
        %v2638 = vpop.f32.mrf.mxu0
        %v2639 = vadd.f32 %v2551, %v2638
        %v2640 = vpop.f32.mrf.mxu0
        %2641 = vmatprep.mubr.bf16.mxu0 0
        %2642 = vmatmul.mubr.bf16.gmra.mxu0 %v2401
        %v2643 = vpop.f32.mrf.mxu0
        %v2644 = vadd.f32 %v2551, %v2643
        %v2645 = vpop.f32.mrf.mxu0
        %v2646 = vpop.f32.mrf.mxu0
        %v2647 = vadd.f32 %v2551, %v2646
        %v2648 = vpop.f32.mrf.mxu0
        %2649 = vdwg.mxu0
        %v2650 = vpack.c.bf16 %v2639, %v2636
        %v2651 = vpack.c.bf16 %v2647, %v2644
        %v2652 = vld [vmem:[%s69] sm:$0xf]
        %v2653 = vld [vmem:[%s69 + $0x4] sm:$0xf]
        %v2654 = vld [vmem:[%s69 + $0x8] sm:$0xf]
        %v2655 = vld [vmem:[%s69 + $0xc] sm:$0xf]
        %v2656 = vld [vmem:[%s69 + $0x10] sm:$0xf]
        %v2657 = vld [vmem:[%s69 + $0x14] sm:$0xf]
        %v2658 = vld [vmem:[%s69 + $0x18] sm:$0xf]
        %v2659 = vld [vmem:[%s69 + $0x1c] sm:$0xf]
        %v2660 = vld [vmem:[%s69 + $0x20] sm:$0xf]
        %v2661 = vld [vmem:[%s69 + $0x24] sm:$0xf]
        %v2662 = vld [vmem:[%s69 + $0x28] sm:$0xf]
        %v2663 = vld [vmem:[%s69 + $0x2c] sm:$0xf]
        %v2664 = vld [vmem:[%s69 + $0x30] sm:$0xf]
        %v2665 = vld [vmem:[%s69 + $0x34] sm:$0xf]
        %v2666 = vld [vmem:[%s69 + $0x38] sm:$0xf]
        %v2667 = vld [vmem:[%s69 + $0x3c] sm:$0xf]
        %v2668 = vld [vmem:[%s75] sm:$0x1]
        %v2670 = vlaneseq
        %v2671 = vshrl.u32 %v2670, 7
        %v2672 = vsub.s32 0, %v2671
        %v2673 = vrot.slane %v2668, %v2672
        %v2691 = vunpack.c.l.b16 %v2652
        %v2692 = vunpack.c.l.b16 %v2653
        %v2693 = vunpack.c.l.b16 %v2654
        %v2694 = vunpack.c.l.b16 %v2655
        %v2695 = vunpack.c.l.b16 %v2656
        %v2696 = vunpack.c.l.b16 %v2657
        %v2697 = vunpack.c.l.b16 %v2658
        %v2698 = vunpack.c.l.b16 %v2659
        %v2699 = vunpack.c.l.b16 %v2660
        %v2700 = vunpack.c.l.b16 %v2661
        %v2701 = vunpack.c.l.b16 %v2662
        %v2702 = vunpack.c.l.b16 %v2663
        %v2703 = vunpack.c.l.b16 %v2664
        %v2704 = vunpack.c.l.b16 %v2665
        %v2705 = vunpack.c.l.b16 %v2666
        %v2706 = vunpack.c.l.b16 %v2667
        %v2707 = vpack.c.b16 %v2692, %v2691
        %v2708 = vpack.c.b16 %v2694, %v2693
        %v2709 = vpack.c.b16 %v2696, %v2695
        %v2710 = vpack.c.b16 %v2698, %v2697
        %v2711 = vpack.c.b16 %v2700, %v2699
        %v2712 = vpack.c.b16 %v2702, %v2701
        %v2713 = vpack.c.b16 %v2704, %v2703
        %v2714 = vpack.c.b16 %v2706, %v2705
        %2723 = vmatprep.subr.bf16.mxu0 0
        %2724 = vmatpush1.bf16.msra.mxu0 %v2714
        %2725 = vmatprep.subr.bf16.mxu0 0
        %2726 = vmatpush1.bf16.msra.mxu0 %v2713
        %2727 = vmatprep.subr.bf16.mxu0 0
        %2728 = vmatpush1.bf16.msra.mxu0 %v2712
        %2729 = vmatprep.subr.bf16.mxu0 0
        %2730 = vmatpush1.bf16.msra.mxu0 %v2711
        %2731 = vmatprep.subr.bf16.mxu0 0
        %2732 = vmatpush1.bf16.msra.mxu0 %v2710
        %2733 = vmatprep.subr.bf16.mxu0 0
        %2734 = vmatpush1.bf16.msra.mxu0 %v2709
        %2735 = vmatprep.subr.bf16.mxu0 0
        %2736 = vmatpush1.bf16.msra.mxu0 %v2708
        %2737 = vmatprep.subr.bf16.mxu0 0
        %2738 = vmatpush1.bf16.msra.mxu0 %v2707
        %2739 = vmatprep.subr.bf16.mxu0 0
        %2740 = vmatpush2.bf16.msra.mxu0 0
        %2741 = vmatprep.subr.bf16.mxu0 0
        %2742 = vmatpush2.bf16.msra.mxu0 0
        %2743 = vmatprep.subr.bf16.mxu0 0
        %2744 = vmatpush2.bf16.msra.mxu0 0
        %2745 = vmatprep.subr.bf16.mxu0 0
        %2746 = vmatpush2.bf16.msra.mxu0 0
        %2747 = vmatprep.subr.bf16.mxu0 0
        %2748 = vmatpush2.bf16.msra.mxu0 0
        %2749 = vmatprep.subr.bf16.mxu0 0
        %2750 = vmatpush2.bf16.msra.mxu0 0
        %2751 = vmatprep.subr.bf16.mxu0 0
        %2752 = vmatpush2.bf16.msra.mxu0 0
        %2753 = vmatprep.subr.bf16.mxu0 0
        %2754 = vmatpush2.bf16.msra.mxu0 0
        %2755 = vmatprep.mubr.bf16.mxu0 0
        %2756 = vmatmul.mubr.bf16.gmra.mxu0 %v2400
        %v2757 = vpop.f32.mrf.mxu0
        %v2758 = vadd.f32 %v2673, %v2757
        %v2759 = vpop.f32.mrf.mxu0
        %v2760 = vpop.f32.mrf.mxu0
        %v2761 = vadd.f32 %v2673, %v2760
        %v2762 = vpop.f32.mrf.mxu0
        %2763 = vmatprep.mubr.bf16.mxu0 0
        %2764 = vmatmul.mubr.bf16.gmra.mxu0 %v2401
        %v2765 = vpop.f32.mrf.mxu0
        %v2766 = vadd.f32 %v2673, %v2765
        %v2767 = vpop.f32.mrf.mxu0
        %v2768 = vpop.f32.mrf.mxu0
        %v2769 = vadd.f32 %v2673, %v2768
        %v2770 = vpop.f32.mrf.mxu0
        %2771 = vdwg.mxu0
        %v2772 = vpack.c.bf16 %v2761, %v2758
        %v2773 = vpack.c.bf16 %v2769, %v2766
        %vm2774 = vcmask 261120
        %v2776 = vsel %vm2774, %v2528, 0
        %v2779 = vsel %vm2774, %v2529, 0
        %v2782 = vsel %vm2774, %v2650, 0
        %v2785 = vsel %vm2774, %v2651, 0
        %2787 = vmatprep.subr.bf16.mxu0 0
        %2788 = vmatpush1.bf16.xpose.msra.mxu0 0
        %2789 = vmatprep.subr.bf16.mxu0 0
        %2790 = vmatpush1.bf16.xpose.msra.mxu0 0
        %2791 = vmatprep.subr.bf16.mxu0 0
        %2792 = vmatpush1.bf16.xpose.msra.mxu0 0
        %2793 = vmatprep.subr.bf16.mxu0 0
        %2794 = vmatpush1.bf16.xpose.msra.mxu0 0
        %2795 = vmatprep.subr.bf16.mxu0 0
        %2796 = vmatpush1.bf16.xpose.msra.mxu0 0
        %2797 = vmatprep.subr.bf16.mxu0 0
        %2798 = vmatpush1.bf16.xpose.msra.mxu0 0
        %2799 = vmatprep.subr.bf16.mxu0 0
        %2800 = vmatpush1.bf16.xpose.msra.mxu0 %v2785
        %2801 = vmatprep.subr.bf16.mxu0 0
        %2802 = vmatpush1.bf16.xpose.msra.mxu0 %v2782
        %2803 = vmatprep.subr.bf16.mxu0 0
        %2804 = vmatpush2.bf16.xpose.msra.mxu0 0
        %2805 = vmatprep.subr.bf16.mxu0 0
        %2806 = vmatpush2.bf16.xpose.msra.mxu0 0
        %2807 = vmatprep.subr.bf16.mxu0 0
        %2808 = vmatpush2.bf16.xpose.msra.mxu0 0
        %2809 = vmatprep.subr.bf16.mxu0 0
        %2810 = vmatpush2.bf16.xpose.msra.mxu0 0
        %2811 = vmatprep.subr.bf16.mxu0 0
        %2812 = vmatpush2.bf16.xpose.msra.mxu0 0
        %2813 = vmatprep.subr.bf16.mxu0 0
        %2814 = vmatpush2.bf16.xpose.msra.mxu0 0
        %2815 = vmatprep.subr.bf16.mxu0 0
        %2816 = vmatpush2.bf16.xpose.msra.mxu0 0
        %2817 = vmatprep.subr.bf16.mxu0 0
        %2818 = vmatpush2.bf16.xpose.msra.mxu0 0
        %2819 = vmatprep.mubr.bf16.mxu0 0
        %2820 = vmatmul.mubr.bf16.gmra.mxu0 %v2776
        %v2821 = vpop.f32.mrf.mxu0
        %v2822 = vadd.f32 %v2407, %v2821
        %v2823 = vpop.f32.mrf.mxu0
        %v2824 = vpop.f32.mrf.mxu0
        %v2825 = vadd.f32 %v2407, %v2824
        %v2826 = vpop.f32.mrf.mxu0
        %2827 = vmatprep.mubr.bf16.mxu0 0
        %2828 = vmatmul.mubr.bf16.gmra.mxu0 %v2779
        %v2829 = vpop.f32.mrf.mxu0
        %v2830 = vadd.f32 %v2407, %v2829
        %v2831 = vpop.f32.mrf.mxu0
        %v2832 = vpop.f32.mrf.mxu0
        %v2833 = vadd.f32 %v2407, %v2832
        %v2834 = vpop.f32.mrf.mxu0
        %2835 = vdwg.mxu0
        %v2836 = vsel %vm2774, %v2822, -inf
        %2837 = vmax.xlane.f32.xlu0 %v2836
        %v2838 = vpop.xlane.xlu0 %2837
        %v2839 = vsel %vm2774, %v2825, -inf
        %2840 = vmax.xlane.f32.xlu0 %v2839
        %v2841 = vpop.xlane.xlu0 %2840
        %v2842 = vsel %vm2774, %v2830, -inf
        %2843 = vmax.xlane.f32.xlu0 %v2842
        %v2844 = vpop.xlane.xlu0 %2843
        %v2845 = vsel %vm2774, %v2833, -inf
        %2846 = vmax.xlane.f32.xlu0 %v2845
        %v2847 = vpop.xlane.xlu0 %2846
        %v2848 = vsub.f32 %v2822, %v2838
        %v2849 = vsub.f32 %v2825, %v2841
        %v2850 = vsub.f32 %v2830, %v2844
        %v2851 = vsub.f32 %v2833, %v2847
        %v2852 = vmul.f32 %v2848, 1.442695
        %v2853 = vpow.pop %v2852
        %v2854 = vmul.f32 %v2849, 1.442695
        %v2855 = vpow.pop %v2854
        %v2856 = vmul.f32 %v2850, 1.442695
        %v2857 = vpow.pop %v2856
        %v2858 = vmul.f32 %v2851, 1.442695
        %v2859 = vpow.pop %v2858
        %v2860 = vsel %vm2774, %v2853, 0.0
        %2861 = vadd.xlane.f32.xlu0 %v2860
        %v2862 = vpop.xlane.xlu0 %2861
        %v2863 = vsel %vm2774, %v2855, 0.0
        %2864 = vadd.xlane.f32.xlu0 %v2863
        %v2865 = vpop.xlane.xlu0 %2864
        %v2866 = vsel %vm2774, %v2857, 0.0
        %2867 = vadd.xlane.f32.xlu0 %v2866
        %v2868 = vpop.xlane.xlu0 %2867
        %v2869 = vsel %vm2774, %v2859, 0.0
        %2870 = vadd.xlane.f32.xlu0 %v2869
        %v2871 = vpop.xlane.xlu0 %2870
        %v2872 = vrcp.pop %v2862
        %v2873 = vrcp.pop %v2865
        %v2874 = vrcp.pop %v2868
        %v2875 = vrcp.pop %v2871
        %v2876 = vmul.f32 %v2853, %v2872
        %v2877 = vmul.f32 %v2855, %v2873
        %v2878 = vmul.f32 %v2857, %v2874
        %v2879 = vmul.f32 %v2859, %v2875
        %v2880 = vpack.c.bf16 %v2877, %v2876
        %v2881 = vpack.c.bf16 %v2879, %v2878
        %v2883 = vsel %vm2774, %v2880, 0
        %v2886 = vsel %vm2774, %v2881, 0
        %2888 = vmatprep.subr.bf16.mxu0 0
        %2889 = vmatpush1.bf16.msra.mxu0 0
        %2890 = vmatprep.subr.bf16.mxu0 0
        %2891 = vmatpush1.bf16.msra.mxu0 0
        %2892 = vmatprep.subr.bf16.mxu0 0
        %2893 = vmatpush1.bf16.msra.mxu0 0
        %2894 = vmatprep.subr.bf16.mxu0 0
        %2895 = vmatpush1.bf16.msra.mxu0 0
        %2896 = vmatprep.subr.bf16.mxu0 0
        %2897 = vmatpush1.bf16.msra.mxu0 0
        %2898 = vmatprep.subr.bf16.mxu0 0
        %2899 = vmatpush1.bf16.msra.mxu0 0
        %2900 = vmatprep.subr.bf16.mxu0 0
        %2901 = vmatpush1.bf16.msra.mxu0 %v2773
        %2902 = vmatprep.subr.bf16.mxu0 0
        %2903 = vmatpush1.bf16.msra.mxu0 %v2772
        %2904 = vmatprep.subr.bf16.mxu0 0
        %2905 = vmatpush2.bf16.msra.mxu0 0
        %2906 = vmatprep.subr.bf16.mxu0 0
        %2907 = vmatpush2.bf16.msra.mxu0 0
        %2908 = vmatprep.subr.bf16.mxu0 0
        %2909 = vmatpush2.bf16.msra.mxu0 0
        %2910 = vmatprep.subr.bf16.mxu0 0
        %2911 = vmatpush2.bf16.msra.mxu0 0
        %2912 = vmatprep.subr.bf16.mxu0 0
        %2913 = vmatpush2.bf16.msra.mxu0 0
        %2914 = vmatprep.subr.bf16.mxu0 0
        %2915 = vmatpush2.bf16.msra.mxu0 0
        %2916 = vmatprep.subr.bf16.mxu0 0
        %2917 = vmatpush2.bf16.msra.mxu0 0
        %2918 = vmatprep.subr.bf16.mxu0 0
        %2919 = vmatpush2.bf16.msra.mxu0 0
        %2920 = vmatprep.mubr.bf16.mxu0 0
        %2921 = vmatmul.mubr.bf16.gmra.mxu0 %v2883
        %v2922 = vpop.f32.mrf.mxu0
        %v2923 = vadd.f32 0.0, %v2922
        %v2924 = vpop.f32.mrf.mxu0
        %v2925 = vpop.f32.mrf.mxu0
        %v2926 = vadd.f32 0.0, %v2925
        %v2927 = vpop.f32.mrf.mxu0
        %2928 = vmatprep.mubr.bf16.mxu0 0
        %2929 = vmatmul.mubr.bf16.gmra.mxu0 %v2886
        %v2930 = vpop.f32.mrf.mxu0
        %v2931 = vadd.f32 0.0, %v2930
        %v2932 = vpop.f32.mrf.mxu0
        %v2933 = vpop.f32.mrf.mxu0
        %v2934 = vadd.f32 0.0, %v2933
        %v2935 = vpop.f32.mrf.mxu0
        %2936 = vdwg.mxu0
        %v2937 = vpack.c.bf16 %v2926, %v2923
        %v2938 = vpack.c.bf16 %v2934, %v2931
        %v2941 = vunpack.c.l.b16 %v2937
        %v2942 = vunpack.c.h.b16 %v2937
        %v2943 = vunpack.c.l.b16 %v2938
        %v2944 = vunpack.c.h.b16 %v2938
        %v2945 = vpack.c.b16 %v2941, %v2941
        %v2946 = vpack.c.b16 %v2942, %v2942
        %v2947 = vpack.c.b16 %v2943, %v2943
        %v2948 = vpack.c.b16 %v2944, %v2944
        %vm2953 = vcmask 257024
        %2954 = vst.msk [vmem:[#allocation3] sm:$0xf] %vm2953, %v2945
        %2955 = vst.msk [vmem:[#allocation3 + $0x4] sm:$0xf] %vm2953, %v2946
        %2956 = vst.msk [vmem:[#allocation3 + $0x8] sm:$0xf] %vm2953, %v2947
        %2957 = vst.msk [vmem:[#allocation3 + $0xc] sm:$0xf] %vm2953, %v2948
        %s2958 = scalar_lea.vmem %s65, 64
        %v2959 = vld [vmem:[%s2958] sm:$0xf]
        %v2960 = vld [vmem:[%s2958 + $0x4] sm:$0xf]
        %v2961 = vld [vmem:[%s2958 + $0x8] sm:$0xf]
        %v2962 = vld [vmem:[%s2958 + $0xc] sm:$0xf]
        %v2963 = vld [vmem:[%s2958 + $0x10] sm:$0xf]
        %v2964 = vld [vmem:[%s2958 + $0x14] sm:$0xf]
        %v2965 = vld [vmem:[%s2958 + $0x18] sm:$0xf]
        %v2966 = vld [vmem:[%s2958 + $0x1c] sm:$0xf]
        %v2967 = vld [vmem:[%s2958 + $0x20] sm:$0xf]
        %v2968 = vld [vmem:[%s2958 + $0x24] sm:$0xf]
        %v2969 = vld [vmem:[%s2958 + $0x28] sm:$0xf]
        %v2970 = vld [vmem:[%s2958 + $0x2c] sm:$0xf]
        %v2971 = vld [vmem:[%s2958 + $0x30] sm:$0xf]
        %v2972 = vld [vmem:[%s2958 + $0x34] sm:$0xf]
        %v2973 = vld [vmem:[%s2958 + $0x38] sm:$0xf]
        %v2974 = vld [vmem:[%s2958 + $0x3c] sm:$0xf]
        %s2975 = scalar_lea.vmem %s71, 1
        %v2976 = vld [vmem:[%s2975] sm:$0x1]
        %v2978 = vlaneseq
        %v2979 = vshrl.u32 %v2978, 7
        %v2980 = vsub.s32 0, %v2979
        %v2981 = vrot.slane %v2976, %v2980
        %v2999 = vunpack.c.l.b16 %v2959
        %v3000 = vunpack.c.l.b16 %v2960
        %v3001 = vunpack.c.l.b16 %v2961
        %v3002 = vunpack.c.l.b16 %v2962
        %v3003 = vunpack.c.l.b16 %v2963
        %v3004 = vunpack.c.l.b16 %v2964
        %v3005 = vunpack.c.l.b16 %v2965
        %v3006 = vunpack.c.l.b16 %v2966
        %v3007 = vunpack.c.l.b16 %v2967
        %v3008 = vunpack.c.l.b16 %v2968
        %v3009 = vunpack.c.l.b16 %v2969
        %v3010 = vunpack.c.l.b16 %v2970
        %v3011 = vunpack.c.l.b16 %v2971
        %v3012 = vunpack.c.l.b16 %v2972
        %v3013 = vunpack.c.l.b16 %v2973
        %v3014 = vunpack.c.l.b16 %v2974
        %v3015 = vpack.c.b16 %v3000, %v2999
        %v3016 = vpack.c.b16 %v3002, %v3001
        %v3017 = vpack.c.b16 %v3004, %v3003
        %v3018 = vpack.c.b16 %v3006, %v3005
        %v3019 = vpack.c.b16 %v3008, %v3007
        %v3020 = vpack.c.b16 %v3010, %v3009
        %v3021 = vpack.c.b16 %v3012, %v3011
        %v3022 = vpack.c.b16 %v3014, %v3013
        %3031 = vmatprep.subr.bf16.mxu0 0
        %3032 = vmatpush1.bf16.msra.mxu0 %v3022
        %3033 = vmatprep.subr.bf16.mxu0 0
        %3034 = vmatpush1.bf16.msra.mxu0 %v3021
        %3035 = vmatprep.subr.bf16.mxu0 0
        %3036 = vmatpush1.bf16.msra.mxu0 %v3020
        %3037 = vmatprep.subr.bf16.mxu0 0
        %3038 = vmatpush1.bf16.msra.mxu0 %v3019
        %3039 = vmatprep.subr.bf16.mxu0 0
        %3040 = vmatpush1.bf16.msra.mxu0 %v3018
        %3041 = vmatprep.subr.bf16.mxu0 0
        %3042 = vmatpush1.bf16.msra.mxu0 %v3017
        %3043 = vmatprep.subr.bf16.mxu0 0
        %3044 = vmatpush1.bf16.msra.mxu0 %v3016
        %3045 = vmatprep.subr.bf16.mxu0 0
        %3046 = vmatpush1.bf16.msra.mxu0 %v3015
        %3047 = vmatprep.subr.bf16.mxu0 0
        %3048 = vmatpush2.bf16.msra.mxu0 0
        %3049 = vmatprep.subr.bf16.mxu0 0
        %3050 = vmatpush2.bf16.msra.mxu0 0
        %3051 = vmatprep.subr.bf16.mxu0 0
        %3052 = vmatpush2.bf16.msra.mxu0 0
        %3053 = vmatprep.subr.bf16.mxu0 0
        %3054 = vmatpush2.bf16.msra.mxu0 0
        %3055 = vmatprep.subr.bf16.mxu0 0
        %3056 = vmatpush2.bf16.msra.mxu0 0
        %3057 = vmatprep.subr.bf16.mxu0 0
        %3058 = vmatpush2.bf16.msra.mxu0 0
        %3059 = vmatprep.subr.bf16.mxu0 0
        %3060 = vmatpush2.bf16.msra.mxu0 0
        %3061 = vmatprep.subr.bf16.mxu0 0
        %3062 = vmatpush2.bf16.msra.mxu0 0
        %3063 = vmatprep.mubr.bf16.mxu0 0
        %3064 = vmatmul.mubr.bf16.gmra.mxu0 %v2400
        %v3065 = vpop.f32.mrf.mxu0
        %v3066 = vadd.f32 %v2981, %v3065
        %v3067 = vpop.f32.mrf.mxu0
        %v3068 = vpop.f32.mrf.mxu0
        %v3069 = vadd.f32 %v2981, %v3068
        %v3070 = vpop.f32.mrf.mxu0
        %3071 = vmatprep.mubr.bf16.mxu0 0
        %3072 = vmatmul.mubr.bf16.gmra.mxu0 %v2401
        %v3073 = vpop.f32.mrf.mxu0
        %v3074 = vadd.f32 %v2981, %v3073
        %v3075 = vpop.f32.mrf.mxu0
        %v3076 = vpop.f32.mrf.mxu0
        %v3077 = vadd.f32 %v2981, %v3076
        %v3078 = vpop.f32.mrf.mxu0
        %3079 = vdwg.mxu0
        %v3080 = vpack.c.bf16 %v3069, %v3066
        %v3081 = vpack.c.bf16 %v3077, %v3074
        %s3082 = scalar_lea.vmem %s67, 64
        %v3083 = vld [vmem:[%s3082] sm:$0xf]
        %v3084 = vld [vmem:[%s3082 + $0x4] sm:$0xf]
        %v3085 = vld [vmem:[%s3082 + $0x8] sm:$0xf]
        %v3086 = vld [vmem:[%s3082 + $0xc] sm:$0xf]
        %v3087 = vld [vmem:[%s3082 + $0x10] sm:$0xf]
        %v3088 = vld [vmem:[%s3082 + $0x14] sm:$0xf]
        %v3089 = vld [vmem:[%s3082 + $0x18] sm:$0xf]
        %v3090 = vld [vmem:[%s3082 + $0x1c] sm:$0xf]
        %v3091 = vld [vmem:[%s3082 + $0x20] sm:$0xf]
        %v3092 = vld [vmem:[%s3082 + $0x24] sm:$0xf]
        %v3093 = vld [vmem:[%s3082 + $0x28] sm:$0xf]
        %v3094 = vld [vmem:[%s3082 + $0x2c] sm:$0xf]
        %v3095 = vld [vmem:[%s3082 + $0x30] sm:$0xf]
        %v3096 = vld [vmem:[%s3082 + $0x34] sm:$0xf]
        %v3097 = vld [vmem:[%s3082 + $0x38] sm:$0xf]
        %v3098 = vld [vmem:[%s3082 + $0x3c] sm:$0xf]
        %s3099 = scalar_lea.vmem %s73, 1
        %v3100 = vld [vmem:[%s3099] sm:$0x1]
        %v3102 = vlaneseq
        %v3103 = vshrl.u32 %v3102, 7
        %v3104 = vsub.s32 0, %v3103
        %v3105 = vrot.slane %v3100, %v3104
        %v3123 = vunpack.c.l.b16 %v3083
        %v3124 = vunpack.c.l.b16 %v3084
        %v3125 = vunpack.c.l.b16 %v3085
        %v3126 = vunpack.c.l.b16 %v3086
        %v3127 = vunpack.c.l.b16 %v3087
        %v3128 = vunpack.c.l.b16 %v3088
        %v3129 = vunpack.c.l.b16 %v3089
        %v3130 = vunpack.c.l.b16 %v3090
        %v3131 = vunpack.c.l.b16 %v3091
        %v3132 = vunpack.c.l.b16 %v3092
        %v3133 = vunpack.c.l.b16 %v3093
        %v3134 = vunpack.c.l.b16 %v3094
        %v3135 = vunpack.c.l.b16 %v3095
        %v3136 = vunpack.c.l.b16 %v3096
        %v3137 = vunpack.c.l.b16 %v3097
        %v3138 = vunpack.c.l.b16 %v3098
        %v3139 = vpack.c.b16 %v3124, %v3123
        %v3140 = vpack.c.b16 %v3126, %v3125
        %v3141 = vpack.c.b16 %v3128, %v3127
        %v3142 = vpack.c.b16 %v3130, %v3129
        %v3143 = vpack.c.b16 %v3132, %v3131
        %v3144 = vpack.c.b16 %v3134, %v3133
        %v3145 = vpack.c.b16 %v3136, %v3135
        %v3146 = vpack.c.b16 %v3138, %v3137
        %3155 = vmatprep.subr.bf16.mxu0 0
        %3156 = vmatpush1.bf16.msra.mxu0 %v3146
        %3157 = vmatprep.subr.bf16.mxu0 0
        %3158 = vmatpush1.bf16.msra.mxu0 %v3145
        %3159 = vmatprep.subr.bf16.mxu0 0
        %3160 = vmatpush1.bf16.msra.mxu0 %v3144
        %3161 = vmatprep.subr.bf16.mxu0 0
        %3162 = vmatpush1.bf16.msra.mxu0 %v3143
        %3163 = vmatprep.subr.bf16.mxu0 0
        %3164 = vmatpush1.bf16.msra.mxu0 %v3142
        %3165 = vmatprep.subr.bf16.mxu0 0
        %3166 = vmatpush1.bf16.msra.mxu0 %v3141
        %3167 = vmatprep.subr.bf16.mxu0 0
        %3168 = vmatpush1.bf16.msra.mxu0 %v3140
        %3169 = vmatprep.subr.bf16.mxu0 0
        %3170 = vmatpush1.bf16.msra.mxu0 %v3139
        %3171 = vmatprep.subr.bf16.mxu0 0
        %3172 = vmatpush2.bf16.msra.mxu0 0
        %3173 = vmatprep.subr.bf16.mxu0 0
        %3174 = vmatpush2.bf16.msra.mxu0 0
        %3175 = vmatprep.subr.bf16.mxu0 0
        %3176 = vmatpush2.bf16.msra.mxu0 0
        %3177 = vmatprep.subr.bf16.mxu0 0
        %3178 = vmatpush2.bf16.msra.mxu0 0
        %3179 = vmatprep.subr.bf16.mxu0 0
        %3180 = vmatpush2.bf16.msra.mxu0 0
        %3181 = vmatprep.subr.bf16.mxu0 0
        %3182 = vmatpush2.bf16.msra.mxu0 0
        %3183 = vmatprep.subr.bf16.mxu0 0
        %3184 = vmatpush2.bf16.msra.mxu0 0
        %3185 = vmatprep.subr.bf16.mxu0 0
        %3186 = vmatpush2.bf16.msra.mxu0 0
        %3187 = vmatprep.mubr.bf16.mxu0 0
        %3188 = vmatmul.mubr.bf16.gmra.mxu0 %v2400
        %v3189 = vpop.f32.mrf.mxu0
        %v3190 = vadd.f32 %v3105, %v3189
        %v3191 = vpop.f32.mrf.mxu0
        %v3192 = vpop.f32.mrf.mxu0
        %v3193 = vadd.f32 %v3105, %v3192
        %v3194 = vpop.f32.mrf.mxu0
        %3195 = vmatprep.mubr.bf16.mxu0 0
        %3196 = vmatmul.mubr.bf16.gmra.mxu0 %v2401
        %v3197 = vpop.f32.mrf.mxu0
        %v3198 = vadd.f32 %v3105, %v3197
        %v3199 = vpop.f32.mrf.mxu0
        %v3200 = vpop.f32.mrf.mxu0
        %v3201 = vadd.f32 %v3105, %v3200
        %v3202 = vpop.f32.mrf.mxu0
        %3203 = vdwg.mxu0
        %v3204 = vpack.c.bf16 %v3193, %v3190
        %v3205 = vpack.c.bf16 %v3201, %v3198
        %s3206 = scalar_lea.vmem %s69, 64
        %v3207 = vld [vmem:[%s3206] sm:$0xf]
        %v3208 = vld [vmem:[%s3206 + $0x4] sm:$0xf]
        %v3209 = vld [vmem:[%s3206 + $0x8] sm:$0xf]
        %v3210 = vld [vmem:[%s3206 + $0xc] sm:$0xf]
        %v3211 = vld [vmem:[%s3206 + $0x10] sm:$0xf]
        %v3212 = vld [vmem:[%s3206 + $0x14] sm:$0xf]
        %v3213 = vld [vmem:[%s3206 + $0x18] sm:$0xf]
        %v3214 = vld [vmem:[%s3206 + $0x1c] sm:$0xf]
        %v3215 = vld [vmem:[%s3206 + $0x20] sm:$0xf]
        %v3216 = vld [vmem:[%s3206 + $0x24] sm:$0xf]
        %v3217 = vld [vmem:[%s3206 + $0x28] sm:$0xf]
        %v3218 = vld [vmem:[%s3206 + $0x2c] sm:$0xf]
        %v3219 = vld [vmem:[%s3206 + $0x30] sm:$0xf]
        %v3220 = vld [vmem:[%s3206 + $0x34] sm:$0xf]
        %v3221 = vld [vmem:[%s3206 + $0x38] sm:$0xf]
        %v3222 = vld [vmem:[%s3206 + $0x3c] sm:$0xf]
        %s3223 = scalar_lea.vmem %s75, 1
        %v3224 = vld [vmem:[%s3223] sm:$0x1]
        %v3226 = vlaneseq
        %v3227 = vshrl.u32 %v3226, 7
        %v3228 = vsub.s32 0, %v3227
        %v3229 = vrot.slane %v3224, %v3228
        %v3247 = vunpack.c.l.b16 %v3207
        %v3248 = vunpack.c.l.b16 %v3208
        %v3249 = vunpack.c.l.b16 %v3209
        %v3250 = vunpack.c.l.b16 %v3210
        %v3251 = vunpack.c.l.b16 %v3211
        %v3252 = vunpack.c.l.b16 %v3212
        %v3253 = vunpack.c.l.b16 %v3213
        %v3254 = vunpack.c.l.b16 %v3214
        %v3255 = vunpack.c.l.b16 %v3215
        %v3256 = vunpack.c.l.b16 %v3216
        %v3257 = vunpack.c.l.b16 %v3217
        %v3258 = vunpack.c.l.b16 %v3218
        %v3259 = vunpack.c.l.b16 %v3219
        %v3260 = vunpack.c.l.b16 %v3220
        %v3261 = vunpack.c.l.b16 %v3221
        %v3262 = vunpack.c.l.b16 %v3222
        %v3263 = vpack.c.b16 %v3248, %v3247
        %v3264 = vpack.c.b16 %v3250, %v3249
        %v3265 = vpack.c.b16 %v3252, %v3251
        %v3266 = vpack.c.b16 %v3254, %v3253
        %v3267 = vpack.c.b16 %v3256, %v3255
        %v3268 = vpack.c.b16 %v3258, %v3257
        %v3269 = vpack.c.b16 %v3260, %v3259
        %v3270 = vpack.c.b16 %v3262, %v3261
        %3279 = vmatprep.subr.bf16.mxu0 0
        %3280 = vmatpush1.bf16.msra.mxu0 %v3270
        %3281 = vmatprep.subr.bf16.mxu0 0
        %3282 = vmatpush1.bf16.msra.mxu0 %v3269
        %3283 = vmatprep.subr.bf16.mxu0 0
        %3284 = vmatpush1.bf16.msra.mxu0 %v3268
        %3285 = vmatprep.subr.bf16.mxu0 0
        %3286 = vmatpush1.bf16.msra.mxu0 %v3267
        %3287 = vmatprep.subr.bf16.mxu0 0
        %3288 = vmatpush1.bf16.msra.mxu0 %v3266
        %3289 = vmatprep.subr.bf16.mxu0 0
        %3290 = vmatpush1.bf16.msra.mxu0 %v3265
        %3291 = vmatprep.subr.bf16.mxu0 0
        %3292 = vmatpush1.bf16.msra.mxu0 %v3264
        %3293 = vmatprep.subr.bf16.mxu0 0
        %3294 = vmatpush1.bf16.msra.mxu0 %v3263
        %3295 = vmatprep.subr.bf16.mxu0 0
        %3296 = vmatpush2.bf16.msra.mxu0 0
        %3297 = vmatprep.subr.bf16.mxu0 0
        %3298 = vmatpush2.bf16.msra.mxu0 0
        %3299 = vmatprep.subr.bf16.mxu0 0
        %3300 = vmatpush2.bf16.msra.mxu0 0
        %3301 = vmatprep.subr.bf16.mxu0 0
        %3302 = vmatpush2.bf16.msra.mxu0 0
        %3303 = vmatprep.subr.bf16.mxu0 0
        %3304 = vmatpush2.bf16.msra.mxu0 0
        %3305 = vmatprep.subr.bf16.mxu0 0
        %3306 = vmatpush2.bf16.msra.mxu0 0
        %3307 = vmatprep.subr.bf16.mxu0 0
        %3308 = vmatpush2.bf16.msra.mxu0 0
        %3309 = vmatprep.subr.bf16.mxu0 0
        %3310 = vmatpush2.bf16.msra.mxu0 0
        %3311 = vmatprep.mubr.bf16.mxu0 0
        %3312 = vmatmul.mubr.bf16.gmra.mxu0 %v2400
        %v3313 = vpop.f32.mrf.mxu0
        %v3314 = vadd.f32 %v3229, %v3313
        %v3315 = vpop.f32.mrf.mxu0
        %v3316 = vpop.f32.mrf.mxu0
        %v3317 = vadd.f32 %v3229, %v3316
        %v3318 = vpop.f32.mrf.mxu0
        %3319 = vmatprep.mubr.bf16.mxu0 0
        %3320 = vmatmul.mubr.bf16.gmra.mxu0 %v2401
        %v3321 = vpop.f32.mrf.mxu0
        %v3322 = vadd.f32 %v3229, %v3321
        %v3323 = vpop.f32.mrf.mxu0
        %v3324 = vpop.f32.mrf.mxu0
        %v3325 = vadd.f32 %v3229, %v3324
        %v3326 = vpop.f32.mrf.mxu0
        %3327 = vdwg.mxu0
        %v3328 = vpack.c.bf16 %v3317, %v3314
        %v3329 = vpack.c.bf16 %v3325, %v3322
        %v3331 = vsel %vm2774, %v3080, 0
        %v3334 = vsel %vm2774, %v3081, 0
        %v3337 = vsel %vm2774, %v3204, 0
        %v3340 = vsel %vm2774, %v3205, 0
        %3342 = vmatprep.subr.bf16.mxu0 0
        %3343 = vmatpush1.bf16.xpose.msra.mxu0 0
        %3344 = vmatprep.subr.bf16.mxu0 0
        %3345 = vmatpush1.bf16.xpose.msra.mxu0 0
        %3346 = vmatprep.subr.bf16.mxu0 0
        %3347 = vmatpush1.bf16.xpose.msra.mxu0 0
        %3348 = vmatprep.subr.bf16.mxu0 0
        %3349 = vmatpush1.bf16.xpose.msra.mxu0 0
        %3350 = vmatprep.subr.bf16.mxu0 0
        %3351 = vmatpush1.bf16.xpose.msra.mxu0 0
        %3352 = vmatprep.subr.bf16.mxu0 0
        %3353 = vmatpush1.bf16.xpose.msra.mxu0 0
        %3354 = vmatprep.subr.bf16.mxu0 0
        %3355 = vmatpush1.bf16.xpose.msra.mxu0 %v3340
        %3356 = vmatprep.subr.bf16.mxu0 0
        %3357 = vmatpush1.bf16.xpose.msra.mxu0 %v3337
        %3358 = vmatprep.subr.bf16.mxu0 0
        %3359 = vmatpush2.bf16.xpose.msra.mxu0 0
        %3360 = vmatprep.subr.bf16.mxu0 0
        %3361 = vmatpush2.bf16.xpose.msra.mxu0 0
        %3362 = vmatprep.subr.bf16.mxu0 0
        %3363 = vmatpush2.bf16.xpose.msra.mxu0 0
        %3364 = vmatprep.subr.bf16.mxu0 0
        %3365 = vmatpush2.bf16.xpose.msra.mxu0 0
        %3366 = vmatprep.subr.bf16.mxu0 0
        %3367 = vmatpush2.bf16.xpose.msra.mxu0 0
        %3368 = vmatprep.subr.bf16.mxu0 0
        %3369 = vmatpush2.bf16.xpose.msra.mxu0 0
        %3370 = vmatprep.subr.bf16.mxu0 0
        %3371 = vmatpush2.bf16.xpose.msra.mxu0 0
        %3372 = vmatprep.subr.bf16.mxu0 0
        %3373 = vmatpush2.bf16.xpose.msra.mxu0 0
        %3374 = vmatprep.mubr.bf16.mxu0 0
        %3375 = vmatmul.mubr.bf16.gmra.mxu0 %v3331
        %v3376 = vpop.f32.mrf.mxu0
        %v3377 = vadd.f32 %v2407, %v3376
        %v3378 = vpop.f32.mrf.mxu0
        %v3379 = vpop.f32.mrf.mxu0
        %v3380 = vadd.f32 %v2407, %v3379
        %v3381 = vpop.f32.mrf.mxu0
        %3382 = vmatprep.mubr.bf16.mxu0 0
        %3383 = vmatmul.mubr.bf16.gmra.mxu0 %v3334
        %v3384 = vpop.f32.mrf.mxu0
        %v3385 = vadd.f32 %v2407, %v3384
        %v3386 = vpop.f32.mrf.mxu0
        %v3387 = vpop.f32.mrf.mxu0
        %v3388 = vadd.f32 %v2407, %v3387
        %v3389 = vpop.f32.mrf.mxu0
        %3390 = vdwg.mxu0
        %v3391 = vsel %vm2774, %v3377, -inf
        %3392 = vmax.xlane.f32.xlu0 %v3391
        %v3393 = vpop.xlane.xlu0 %3392
        %v3394 = vsel %vm2774, %v3380, -inf
        %3395 = vmax.xlane.f32.xlu0 %v3394
        %v3396 = vpop.xlane.xlu0 %3395
        %v3397 = vsel %vm2774, %v3385, -inf
        %3398 = vmax.xlane.f32.xlu0 %v3397
        %v3399 = vpop.xlane.xlu0 %3398
        %v3400 = vsel %vm2774, %v3388, -inf
        %3401 = vmax.xlane.f32.xlu0 %v3400
        %v3402 = vpop.xlane.xlu0 %3401
        %v3403 = vsub.f32 %v3377, %v3393
        %v3404 = vsub.f32 %v3380, %v3396
        %v3405 = vsub.f32 %v3385, %v3399
        %v3406 = vsub.f32 %v3388, %v3402
        %v3407 = vmul.f32 %v3403, 1.442695
        %v3408 = vpow.pop %v3407
        %v3409 = vmul.f32 %v3404, 1.442695
        %v3410 = vpow.pop %v3409
        %v3411 = vmul.f32 %v3405, 1.442695
        %v3412 = vpow.pop %v3411
        %v3413 = vmul.f32 %v3406, 1.442695
        %v3414 = vpow.pop %v3413
        %v3415 = vsel %vm2774, %v3408, 0.0
        %3416 = vadd.xlane.f32.xlu0 %v3415
        %v3417 = vpop.xlane.xlu0 %3416
        %v3418 = vsel %vm2774, %v3410, 0.0
        %3419 = vadd.xlane.f32.xlu0 %v3418
        %v3420 = vpop.xlane.xlu0 %3419
        %v3421 = vsel %vm2774, %v3412, 0.0
        %3422 = vadd.xlane.f32.xlu0 %v3421
        %v3423 = vpop.xlane.xlu0 %3422
        %v3424 = vsel %vm2774, %v3414, 0.0
        %3425 = vadd.xlane.f32.xlu0 %v3424
        %v3426 = vpop.xlane.xlu0 %3425
        %v3427 = vrcp.pop %v3417
        %v3428 = vrcp.pop %v3420
        %v3429 = vrcp.pop %v3423
        %v3430 = vrcp.pop %v3426
        %v3431 = vmul.f32 %v3408, %v3427
        %v3432 = vmul.f32 %v3410, %v3428
        %v3433 = vmul.f32 %v3412, %v3429
        %v3434 = vmul.f32 %v3414, %v3430
        %v3435 = vpack.c.bf16 %v3432, %v3431
        %v3436 = vpack.c.bf16 %v3434, %v3433
        %v3438 = vsel %vm2774, %v3435, 0
        %v3441 = vsel %vm2774, %v3436, 0
        %3443 = vmatprep.subr.bf16.mxu0 0
        %3444 = vmatpush1.bf16.msra.mxu0 0
        %3445 = vmatprep.subr.bf16.mxu0 0
        %3446 = vmatpush1.bf16.msra.mxu0 0
        %3447 = vmatprep.subr.bf16.mxu0 0
        %3448 = vmatpush1.bf16.msra.mxu0 0
        %3449 = vmatprep.subr.bf16.mxu0 0
        %3450 = vmatpush1.bf16.msra.mxu0 0
        %3451 = vmatprep.subr.bf16.mxu0 0
        %3452 = vmatpush1.bf16.msra.mxu0 0
        %3453 = vmatprep.subr.bf16.mxu0 0
        %3454 = vmatpush1.bf16.msra.mxu0 0
        %3455 = vmatprep.subr.bf16.mxu0 0
        %3456 = vmatpush1.bf16.msra.mxu0 %v3329
        %3457 = vmatprep.subr.bf16.mxu0 0
        %3458 = vmatpush1.bf16.msra.mxu0 %v3328
        %3459 = vmatprep.subr.bf16.mxu0 0
        %3460 = vmatpush2.bf16.msra.mxu0 0
        %3461 = vmatprep.subr.bf16.mxu0 0
        %3462 = vmatpush2.bf16.msra.mxu0 0
        %3463 = vmatprep.subr.bf16.mxu0 0
        %3464 = vmatpush2.bf16.msra.mxu0 0
        %3465 = vmatprep.subr.bf16.mxu0 0
        %3466 = vmatpush2.bf16.msra.mxu0 0
        %3467 = vmatprep.subr.bf16.mxu0 0
        %3468 = vmatpush2.bf16.msra.mxu0 0
        %3469 = vmatprep.subr.bf16.mxu0 0
        %3470 = vmatpush2.bf16.msra.mxu0 0
        %3471 = vmatprep.subr.bf16.mxu0 0
        %3472 = vmatpush2.bf16.msra.mxu0 0
        %3473 = vmatprep.subr.bf16.mxu0 0
        %3474 = vmatpush2.bf16.msra.mxu0 0
        %3475 = vmatprep.mubr.bf16.mxu0 0
        %3476 = vmatmul.mubr.bf16.gmra.mxu0 %v3438
        %v3477 = vpop.f32.mrf.mxu0
        %v3478 = vadd.f32 0.0, %v3477
        %v3479 = vpop.f32.mrf.mxu0
        %v3480 = vpop.f32.mrf.mxu0
        %v3481 = vadd.f32 0.0, %v3480
        %v3482 = vpop.f32.mrf.mxu0
        %3483 = vmatprep.mubr.bf16.mxu0 0
        %3484 = vmatmul.mubr.bf16.gmra.mxu0 %v3441
        %v3485 = vpop.f32.mrf.mxu0
        %v3486 = vadd.f32 0.0, %v3485
        %v3487 = vpop.f32.mrf.mxu0
        %v3488 = vpop.f32.mrf.mxu0
        %v3489 = vadd.f32 0.0, %v3488
        %v3490 = vpop.f32.mrf.mxu0
        %3491 = vdwg.mxu0
        %v3492 = vpack.c.bf16 %v3481, %v3478
        %v3493 = vpack.c.bf16 %v3489, %v3486
        %v3496 = vunpack.c.l.b16 %v3492
        %v3497 = vunpack.c.h.b16 %v3492
        %v3498 = vunpack.c.l.b16 %v3493
        %v3499 = vunpack.c.h.b16 %v3493
        %v3500 = vpack.c.b16 %v3496, %v3496
        %v3501 = vpack.c.b16 %v3497, %v3497
        %v3502 = vpack.c.b16 %v3498, %v3498
        %v3503 = vpack.c.b16 %v3499, %v3499
        %3504 = vrot.lane.b32.xlu0 %v3500, 32
        %v3505 = vpop.permute.xlu0 %3504
        %3506 = vrot.lane.b32.xlu0 %v3501, 32
        %v3507 = vpop.permute.xlu0 %3506
        %3508 = vrot.lane.b32.xlu0 %v3502, 32
        %v3509 = vpop.permute.xlu0 %3508
        %3510 = vrot.lane.b32.xlu0 %v3503, 32
        %v3511 = vpop.permute.xlu0 %3510
        %vm3516 = vcmask 519424
        %3517 = vst.msk [vmem:[#allocation3] sm:$0xf] %vm3516, %v3505
        %3518 = vst.msk [vmem:[#allocation3 + $0x4] sm:$0xf] %vm3516, %v3507
        %3519 = vst.msk [vmem:[#allocation3 + $0x8] sm:$0xf] %vm3516, %v3509
        %3520 = vst.msk [vmem:[#allocation3 + $0xc] sm:$0xf] %vm3516, %v3511
        %s3521 = scalar_lea.vmem %s65, 128
        %v3522 = vld [vmem:[%s3521] sm:$0xf]
        %v3523 = vld [vmem:[%s3521 + $0x4] sm:$0xf]
        %v3524 = vld [vmem:[%s3521 + $0x8] sm:$0xf]
        %v3525 = vld [vmem:[%s3521 + $0xc] sm:$0xf]
        %v3526 = vld [vmem:[%s3521 + $0x10] sm:$0xf]
        %v3527 = vld [vmem:[%s3521 + $0x14] sm:$0xf]
        %v3528 = vld [vmem:[%s3521 + $0x18] sm:$0xf]
        %v3529 = vld [vmem:[%s3521 + $0x1c] sm:$0xf]
        %v3530 = vld [vmem:[%s3521 + $0x20] sm:$0xf]
        %v3531 = vld [vmem:[%s3521 + $0x24] sm:$0xf]
        %v3532 = vld [vmem:[%s3521 + $0x28] sm:$0xf]
        %v3533 = vld [vmem:[%s3521 + $0x2c] sm:$0xf]
        %v3534 = vld [vmem:[%s3521 + $0x30] sm:$0xf]
        %v3535 = vld [vmem:[%s3521 + $0x34] sm:$0xf]
        %v3536 = vld [vmem:[%s3521 + $0x38] sm:$0xf]
        %v3537 = vld [vmem:[%s3521 + $0x3c] sm:$0xf]
        %s3538 = scalar_lea.vmem %s71, 2
        %v3539 = vld [vmem:[%s3538] sm:$0x1]
        %v3541 = vlaneseq
        %v3542 = vshrl.u32 %v3541, 7
        %v3543 = vsub.s32 0, %v3542
        %v3544 = vrot.slane %v3539, %v3543
        %v3562 = vunpack.c.l.b16 %v3522
        %v3563 = vunpack.c.l.b16 %v3523
        %v3564 = vunpack.c.l.b16 %v3524
        %v3565 = vunpack.c.l.b16 %v3525
        %v3566 = vunpack.c.l.b16 %v3526
        %v3567 = vunpack.c.l.b16 %v3527
        %v3568 = vunpack.c.l.b16 %v3528
        %v3569 = vunpack.c.l.b16 %v3529
        %v3570 = vunpack.c.l.b16 %v3530
        %v3571 = vunpack.c.l.b16 %v3531
        %v3572 = vunpack.c.l.b16 %v3532
        %v3573 = vunpack.c.l.b16 %v3533
        %v3574 = vunpack.c.l.b16 %v3534
        %v3575 = vunpack.c.l.b16 %v3535
        %v3576 = vunpack.c.l.b16 %v3536
        %v3577 = vunpack.c.l.b16 %v3537
        %v3578 = vpack.c.b16 %v3563, %v3562
        %v3579 = vpack.c.b16 %v3565, %v3564
        %v3580 = vpack.c.b16 %v3567, %v3566
        %v3581 = vpack.c.b16 %v3569, %v3568
        %v3582 = vpack.c.b16 %v3571, %v3570
        %v3583 = vpack.c.b16 %v3573, %v3572
        %v3584 = vpack.c.b16 %v3575, %v3574
        %v3585 = vpack.c.b16 %v3577, %v3576
        %3594 = vmatprep.subr.bf16.mxu0 0
        %3595 = vmatpush1.bf16.msra.mxu0 %v3585
        %3596 = vmatprep.subr.bf16.mxu0 0
        %3597 = vmatpush1.bf16.msra.mxu0 %v3584
        %3598 = vmatprep.subr.bf16.mxu0 0
        %3599 = vmatpush1.bf16.msra.mxu0 %v3583
        %3600 = vmatprep.subr.bf16.mxu0 0
        %3601 = vmatpush1.bf16.msra.mxu0 %v3582
        %3602 = vmatprep.subr.bf16.mxu0 0
        %3603 = vmatpush1.bf16.msra.mxu0 %v3581
        %3604 = vmatprep.subr.bf16.mxu0 0
        %3605 = vmatpush1.bf16.msra.mxu0 %v3580
        %3606 = vmatprep.subr.bf16.mxu0 0
        %3607 = vmatpush1.bf16.msra.mxu0 %v3579
        %3608 = vmatprep.subr.bf16.mxu0 0
        %3609 = vmatpush1.bf16.msra.mxu0 %v3578
        %3610 = vmatprep.subr.bf16.mxu0 0
        %3611 = vmatpush2.bf16.msra.mxu0 0
        %3612 = vmatprep.subr.bf16.mxu0 0
        %3613 = vmatpush2.bf16.msra.mxu0 0
        %3614 = vmatprep.subr.bf16.mxu0 0
        %3615 = vmatpush2.bf16.msra.mxu0 0
        %3616 = vmatprep.subr.bf16.mxu0 0
        %3617 = vmatpush2.bf16.msra.mxu0 0
        %3618 = vmatprep.subr.bf16.mxu0 0
        %3619 = vmatpush2.bf16.msra.mxu0 0
        %3620 = vmatprep.subr.bf16.mxu0 0
        %3621 = vmatpush2.bf16.msra.mxu0 0
        %3622 = vmatprep.subr.bf16.mxu0 0
        %3623 = vmatpush2.bf16.msra.mxu0 0
        %3624 = vmatprep.subr.bf16.mxu0 0
        %3625 = vmatpush2.bf16.msra.mxu0 0
        %3626 = vmatprep.mubr.bf16.mxu0 0
        %3627 = vmatmul.mubr.bf16.gmra.mxu0 %v2400
        %v3628 = vpop.f32.mrf.mxu0
        %v3629 = vadd.f32 %v3544, %v3628
        %v3630 = vpop.f32.mrf.mxu0
        %v3631 = vpop.f32.mrf.mxu0
        %v3632 = vadd.f32 %v3544, %v3631
        %v3633 = vpop.f32.mrf.mxu0
        %3634 = vmatprep.mubr.bf16.mxu0 0
        %3635 = vmatmul.mubr.bf16.gmra.mxu0 %v2401
        %v3636 = vpop.f32.mrf.mxu0
        %v3637 = vadd.f32 %v3544, %v3636
        %v3638 = vpop.f32.mrf.mxu0
        %v3639 = vpop.f32.mrf.mxu0
        %v3640 = vadd.f32 %v3544, %v3639
        %v3641 = vpop.f32.mrf.mxu0
        %3642 = vdwg.mxu0
        %v3643 = vpack.c.bf16 %v3632, %v3629
        %v3644 = vpack.c.bf16 %v3640, %v3637
        %s3645 = scalar_lea.vmem %s67, 128
        %v3646 = vld [vmem:[%s3645] sm:$0xf]
        %v3647 = vld [vmem:[%s3645 + $0x4] sm:$0xf]
        %v3648 = vld [vmem:[%s3645 + $0x8] sm:$0xf]
        %v3649 = vld [vmem:[%s3645 + $0xc] sm:$0xf]
        %v3650 = vld [vmem:[%s3645 + $0x10] sm:$0xf]
        %v3651 = vld [vmem:[%s3645 + $0x14] sm:$0xf]
        %v3652 = vld [vmem:[%s3645 + $0x18] sm:$0xf]
        %v3653 = vld [vmem:[%s3645 + $0x1c] sm:$0xf]
        %v3654 = vld [vmem:[%s3645 + $0x20] sm:$0xf]
        %v3655 = vld [vmem:[%s3645 + $0x24] sm:$0xf]
        %v3656 = vld [vmem:[%s3645 + $0x28] sm:$0xf]
        %v3657 = vld [vmem:[%s3645 + $0x2c] sm:$0xf]
        %v3658 = vld [vmem:[%s3645 + $0x30] sm:$0xf]
        %v3659 = vld [vmem:[%s3645 + $0x34] sm:$0xf]
        %v3660 = vld [vmem:[%s3645 + $0x38] sm:$0xf]
        %v3661 = vld [vmem:[%s3645 + $0x3c] sm:$0xf]
        %s3662 = scalar_lea.vmem %s73, 2
        %v3663 = vld [vmem:[%s3662] sm:$0x1]
        %v3665 = vlaneseq
        %v3666 = vshrl.u32 %v3665, 7
        %v3667 = vsub.s32 0, %v3666
        %v3668 = vrot.slane %v3663, %v3667
        %v3686 = vunpack.c.l.b16 %v3646
        %v3687 = vunpack.c.l.b16 %v3647
        %v3688 = vunpack.c.l.b16 %v3648
        %v3689 = vunpack.c.l.b16 %v3649
        %v3690 = vunpack.c.l.b16 %v3650
        %v3691 = vunpack.c.l.b16 %v3651
        %v3692 = vunpack.c.l.b16 %v3652
        %v3693 = vunpack.c.l.b16 %v3653
        %v3694 = vunpack.c.l.b16 %v3654
        %v3695 = vunpack.c.l.b16 %v3655
        %v3696 = vunpack.c.l.b16 %v3656
        %v3697 = vunpack.c.l.b16 %v3657
        %v3698 = vunpack.c.l.b16 %v3658
        %v3699 = vunpack.c.l.b16 %v3659
        %v3700 = vunpack.c.l.b16 %v3660
        %v3701 = vunpack.c.l.b16 %v3661
        %v3702 = vpack.c.b16 %v3687, %v3686
        %v3703 = vpack.c.b16 %v3689, %v3688
        %v3704 = vpack.c.b16 %v3691, %v3690
        %v3705 = vpack.c.b16 %v3693, %v3692
        %v3706 = vpack.c.b16 %v3695, %v3694
        %v3707 = vpack.c.b16 %v3697, %v3696
        %v3708 = vpack.c.b16 %v3699, %v3698
        %v3709 = vpack.c.b16 %v3701, %v3700
        %3718 = vmatprep.subr.bf16.mxu0 0
        %3719 = vmatpush1.bf16.msra.mxu0 %v3709
        %3720 = vmatprep.subr.bf16.mxu0 0
        %3721 = vmatpush1.bf16.msra.mxu0 %v3708
        %3722 = vmatprep.subr.bf16.mxu0 0
        %3723 = vmatpush1.bf16.msra.mxu0 %v3707
        %3724 = vmatprep.subr.bf16.mxu0 0
        %3725 = vmatpush1.bf16.msra.mxu0 %v3706
        %3726 = vmatprep.subr.bf16.mxu0 0
        %3727 = vmatpush1.bf16.msra.mxu0 %v3705
        %3728 = vmatprep.subr.bf16.mxu0 0
        %3729 = vmatpush1.bf16.msra.mxu0 %v3704
        %3730 = vmatprep.subr.bf16.mxu0 0
        %3731 = vmatpush1.bf16.msra.mxu0 %v3703
        %3732 = vmatprep.subr.bf16.mxu0 0
        %3733 = vmatpush1.bf16.msra.mxu0 %v3702
        %3734 = vmatprep.subr.bf16.mxu0 0
        %3735 = vmatpush2.bf16.msra.mxu0 0
        %3736 = vmatprep.subr.bf16.mxu0 0
        %3737 = vmatpush2.bf16.msra.mxu0 0
        %3738 = vmatprep.subr.bf16.mxu0 0
        %3739 = vmatpush2.bf16.msra.mxu0 0
        %3740 = vmatprep.subr.bf16.mxu0 0
        %3741 = vmatpush2.bf16.msra.mxu0 0
        %3742 = vmatprep.subr.bf16.mxu0 0
        %3743 = vmatpush2.bf16.msra.mxu0 0
        %3744 = vmatprep.subr.bf16.mxu0 0
        %3745 = vmatpush2.bf16.msra.mxu0 0
        %3746 = vmatprep.subr.bf16.mxu0 0
        %3747 = vmatpush2.bf16.msra.mxu0 0
        %3748 = vmatprep.subr.bf16.mxu0 0
        %3749 = vmatpush2.bf16.msra.mxu0 0
        %3750 = vmatprep.mubr.bf16.mxu0 0
        %3751 = vmatmul.mubr.bf16.gmra.mxu0 %v2400
        %v3752 = vpop.f32.mrf.mxu0
        %v3753 = vadd.f32 %v3668, %v3752
        %v3754 = vpop.f32.mrf.mxu0
        %v3755 = vpop.f32.mrf.mxu0
        %v3756 = vadd.f32 %v3668, %v3755
        %v3757 = vpop.f32.mrf.mxu0
        %3758 = vmatprep.mubr.bf16.mxu0 0
        %3759 = vmatmul.mubr.bf16.gmra.mxu0 %v2401
        %v3760 = vpop.f32.mrf.mxu0
        %v3761 = vadd.f32 %v3668, %v3760
        %v3762 = vpop.f32.mrf.mxu0
        %v3763 = vpop.f32.mrf.mxu0
        %v3764 = vadd.f32 %v3668, %v3763
        %v3765 = vpop.f32.mrf.mxu0
        %3766 = vdwg.mxu0
        %v3767 = vpack.c.bf16 %v3756, %v3753
        %v3768 = vpack.c.bf16 %v3764, %v3761
        %s3769 = scalar_lea.vmem %s69, 128
        %v3770 = vld [vmem:[%s3769] sm:$0xf]
        %v3771 = vld [vmem:[%s3769 + $0x4] sm:$0xf]
        %v3772 = vld [vmem:[%s3769 + $0x8] sm:$0xf]
        %v3773 = vld [vmem:[%s3769 + $0xc] sm:$0xf]
        %v3774 = vld [vmem:[%s3769 + $0x10] sm:$0xf]
        %v3775 = vld [vmem:[%s3769 + $0x14] sm:$0xf]
        %v3776 = vld [vmem:[%s3769 + $0x18] sm:$0xf]
        %v3777 = vld [vmem:[%s3769 + $0x1c] sm:$0xf]
        %v3778 = vld [vmem:[%s3769 + $0x20] sm:$0xf]
        %v3779 = vld [vmem:[%s3769 + $0x24] sm:$0xf]
        %v3780 = vld [vmem:[%s3769 + $0x28] sm:$0xf]
        %v3781 = vld [vmem:[%s3769 + $0x2c] sm:$0xf]
        %v3782 = vld [vmem:[%s3769 + $0x30] sm:$0xf]
        %v3783 = vld [vmem:[%s3769 + $0x34] sm:$0xf]
        %v3784 = vld [vmem:[%s3769 + $0x38] sm:$0xf]
        %v3785 = vld [vmem:[%s3769 + $0x3c] sm:$0xf]
        %s3786 = scalar_lea.vmem %s75, 2
        %v3787 = vld [vmem:[%s3786] sm:$0x1]
        %v3789 = vlaneseq
        %v3790 = vshrl.u32 %v3789, 7
        %v3791 = vsub.s32 0, %v3790
        %v3792 = vrot.slane %v3787, %v3791
        %v3810 = vunpack.c.l.b16 %v3770
        %v3811 = vunpack.c.l.b16 %v3771
        %v3812 = vunpack.c.l.b16 %v3772
        %v3813 = vunpack.c.l.b16 %v3773
        %v3814 = vunpack.c.l.b16 %v3774
        %v3815 = vunpack.c.l.b16 %v3775
        %v3816 = vunpack.c.l.b16 %v3776
        %v3817 = vunpack.c.l.b16 %v3777
        %v3818 = vunpack.c.l.b16 %v3778
        %v3819 = vunpack.c.l.b16 %v3779
        %v3820 = vunpack.c.l.b16 %v3780
        %v3821 = vunpack.c.l.b16 %v3781
        %v3822 = vunpack.c.l.b16 %v3782
        %v3823 = vunpack.c.l.b16 %v3783
        %v3824 = vunpack.c.l.b16 %v3784
        %v3825 = vunpack.c.l.b16 %v3785
        %v3826 = vpack.c.b16 %v3811, %v3810
        %v3827 = vpack.c.b16 %v3813, %v3812
        %v3828 = vpack.c.b16 %v3815, %v3814
        %v3829 = vpack.c.b16 %v3817, %v3816
        %v3830 = vpack.c.b16 %v3819, %v3818
        %v3831 = vpack.c.b16 %v3821, %v3820
        %v3832 = vpack.c.b16 %v3823, %v3822
        %v3833 = vpack.c.b16 %v3825, %v3824
        %3842 = vmatprep.subr.bf16.mxu0 0
        %3843 = vmatpush1.bf16.msra.mxu0 %v3833
        %3844 = vmatprep.subr.bf16.mxu0 0
        %3845 = vmatpush1.bf16.msra.mxu0 %v3832
        %3846 = vmatprep.subr.bf16.mxu0 0
        %3847 = vmatpush1.bf16.msra.mxu0 %v3831
        %3848 = vmatprep.subr.bf16.mxu0 0
        %3849 = vmatpush1.bf16.msra.mxu0 %v3830
        %3850 = vmatprep.subr.bf16.mxu0 0
        %3851 = vmatpush1.bf16.msra.mxu0 %v3829
        %3852 = vmatprep.subr.bf16.mxu0 0
        %3853 = vmatpush1.bf16.msra.mxu0 %v3828
        %3854 = vmatprep.subr.bf16.mxu0 0
        %3855 = vmatpush1.bf16.msra.mxu0 %v3827
        %3856 = vmatprep.subr.bf16.mxu0 0
        %3857 = vmatpush1.bf16.msra.mxu0 %v3826
        %3858 = vmatprep.subr.bf16.mxu0 0
        %3859 = vmatpush2.bf16.msra.mxu0 0
        %3860 = vmatprep.subr.bf16.mxu0 0
        %3861 = vmatpush2.bf16.msra.mxu0 0
        %3862 = vmatprep.subr.bf16.mxu0 0
        %3863 = vmatpush2.bf16.msra.mxu0 0
        %3864 = vmatprep.subr.bf16.mxu0 0
        %3865 = vmatpush2.bf16.msra.mxu0 0
        %3866 = vmatprep.subr.bf16.mxu0 0
        %3867 = vmatpush2.bf16.msra.mxu0 0
        %3868 = vmatprep.subr.bf16.mxu0 0
        %3869 = vmatpush2.bf16.msra.mxu0 0
        %3870 = vmatprep.subr.bf16.mxu0 0
        %3871 = vmatpush2.bf16.msra.mxu0 0
        %3872 = vmatprep.subr.bf16.mxu0 0
        %3873 = vmatpush2.bf16.msra.mxu0 0
        %3874 = vmatprep.mubr.bf16.mxu0 0
        %3875 = vmatmul.mubr.bf16.gmra.mxu0 %v2400
        %v3876 = vpop.f32.mrf.mxu0
        %v3877 = vadd.f32 %v3792, %v3876
        %v3878 = vpop.f32.mrf.mxu0
        %v3879 = vpop.f32.mrf.mxu0
        %v3880 = vadd.f32 %v3792, %v3879
        %v3881 = vpop.f32.mrf.mxu0
        %3882 = vmatprep.mubr.bf16.mxu0 0
        %3883 = vmatmul.mubr.bf16.gmra.mxu0 %v2401
        %v3884 = vpop.f32.mrf.mxu0
        %v3885 = vadd.f32 %v3792, %v3884
        %v3886 = vpop.f32.mrf.mxu0
        %v3887 = vpop.f32.mrf.mxu0
        %v3888 = vadd.f32 %v3792, %v3887
        %v3889 = vpop.f32.mrf.mxu0
        %3890 = vdwg.mxu0
        %v3891 = vpack.c.bf16 %v3880, %v3877
        %v3892 = vpack.c.bf16 %v3888, %v3885
        %v3894 = vsel %vm2774, %v3643, 0
        %v3897 = vsel %vm2774, %v3644, 0
        %v3900 = vsel %vm2774, %v3767, 0
        %v3903 = vsel %vm2774, %v3768, 0
        %3905 = vmatprep.subr.bf16.mxu0 0
        %3906 = vmatpush1.bf16.xpose.msra.mxu0 0
        %3907 = vmatprep.subr.bf16.mxu0 0
        %3908 = vmatpush1.bf16.xpose.msra.mxu0 0
        %3909 = vmatprep.subr.bf16.mxu0 0
        %3910 = vmatpush1.bf16.xpose.msra.mxu0 0
        %3911 = vmatprep.subr.bf16.mxu0 0
        %3912 = vmatpush1.bf16.xpose.msra.mxu0 0
        %3913 = vmatprep.subr.bf16.mxu0 0
        %3914 = vmatpush1.bf16.xpose.msra.mxu0 0
        %3915 = vmatprep.subr.bf16.mxu0 0
        %3916 = vmatpush1.bf16.xpose.msra.mxu0 0
        %3917 = vmatprep.subr.bf16.mxu0 0
        %3918 = vmatpush1.bf16.xpose.msra.mxu0 %v3903
        %3919 = vmatprep.subr.bf16.mxu0 0
        %3920 = vmatpush1.bf16.xpose.msra.mxu0 %v3900
        %3921 = vmatprep.subr.bf16.mxu0 0
        %3922 = vmatpush2.bf16.xpose.msra.mxu0 0
        %3923 = vmatprep.subr.bf16.mxu0 0
        %3924 = vmatpush2.bf16.xpose.msra.mxu0 0
        %3925 = vmatprep.subr.bf16.mxu0 0
        %3926 = vmatpush2.bf16.xpose.msra.mxu0 0
        %3927 = vmatprep.subr.bf16.mxu0 0
        %3928 = vmatpush2.bf16.xpose.msra.mxu0 0
        %3929 = vmatprep.subr.bf16.mxu0 0
        %3930 = vmatpush2.bf16.xpose.msra.mxu0 0
        %3931 = vmatprep.subr.bf16.mxu0 0
        %3932 = vmatpush2.bf16.xpose.msra.mxu0 0
        %3933 = vmatprep.subr.bf16.mxu0 0
        %3934 = vmatpush2.bf16.xpose.msra.mxu0 0
        %3935 = vmatprep.subr.bf16.mxu0 0
        %3936 = vmatpush2.bf16.xpose.msra.mxu0 0
        %3937 = vmatprep.mubr.bf16.mxu0 0
        %3938 = vmatmul.mubr.bf16.gmra.mxu0 %v3894
        %v3939 = vpop.f32.mrf.mxu0
        %v3940 = vadd.f32 %v2407, %v3939
        %v3941 = vpop.f32.mrf.mxu0
        %v3942 = vpop.f32.mrf.mxu0
        %v3943 = vadd.f32 %v2407, %v3942
        %v3944 = vpop.f32.mrf.mxu0
        %3945 = vmatprep.mubr.bf16.mxu0 0
        %3946 = vmatmul.mubr.bf16.gmra.mxu0 %v3897
        %v3947 = vpop.f32.mrf.mxu0
        %v3948 = vadd.f32 %v2407, %v3947
        %v3949 = vpop.f32.mrf.mxu0
        %v3950 = vpop.f32.mrf.mxu0
        %v3951 = vadd.f32 %v2407, %v3950
        %v3952 = vpop.f32.mrf.mxu0
        %3953 = vdwg.mxu0
        %v3954 = vsel %vm2774, %v3940, -inf
        %3955 = vmax.xlane.f32.xlu0 %v3954
        %v3956 = vpop.xlane.xlu0 %3955
        %v3957 = vsel %vm2774, %v3943, -inf
        %3958 = vmax.xlane.f32.xlu0 %v3957
        %v3959 = vpop.xlane.xlu0 %3958
        %v3960 = vsel %vm2774, %v3948, -inf
        %3961 = vmax.xlane.f32.xlu0 %v3960
        %v3962 = vpop.xlane.xlu0 %3961
        %v3963 = vsel %vm2774, %v3951, -inf
        %3964 = vmax.xlane.f32.xlu0 %v3963
        %v3965 = vpop.xlane.xlu0 %3964
        %v3966 = vsub.f32 %v3940, %v3956
        %v3967 = vsub.f32 %v3943, %v3959
        %v3968 = vsub.f32 %v3948, %v3962
        %v3969 = vsub.f32 %v3951, %v3965
        %v3970 = vmul.f32 %v3966, 1.442695
        %v3971 = vpow.pop %v3970
        %v3972 = vmul.f32 %v3967, 1.442695
        %v3973 = vpow.pop %v3972
        %v3974 = vmul.f32 %v3968, 1.442695
        %v3975 = vpow.pop %v3974
        %v3976 = vmul.f32 %v3969, 1.442695
        %v3977 = vpow.pop %v3976
        %v3978 = vsel %vm2774, %v3971, 0.0
        %3979 = vadd.xlane.f32.xlu0 %v3978
        %v3980 = vpop.xlane.xlu0 %3979
        %v3981 = vsel %vm2774, %v3973, 0.0
        %3982 = vadd.xlane.f32.xlu0 %v3981
        %v3983 = vpop.xlane.xlu0 %3982
        %v3984 = vsel %vm2774, %v3975, 0.0
        %3985 = vadd.xlane.f32.xlu0 %v3984
        %v3986 = vpop.xlane.xlu0 %3985
        %v3987 = vsel %vm2774, %v3977, 0.0
        %3988 = vadd.xlane.f32.xlu0 %v3987
        %v3989 = vpop.xlane.xlu0 %3988
        %v3990 = vrcp.pop %v3980
        %v3991 = vrcp.pop %v3983
        %v3992 = vrcp.pop %v3986
        %v3993 = vrcp.pop %v3989
        %v3994 = vmul.f32 %v3971, %v3990
        %v3995 = vmul.f32 %v3973, %v3991
        %v3996 = vmul.f32 %v3975, %v3992
        %v3997 = vmul.f32 %v3977, %v3993
        %v3998 = vpack.c.bf16 %v3995, %v3994
        %v3999 = vpack.c.bf16 %v3997, %v3996
        %v4001 = vsel %vm2774, %v3998, 0
        %v4004 = vsel %vm2774, %v3999, 0
        %4006 = vmatprep.subr.bf16.mxu0 0
        %4007 = vmatpush1.bf16.msra.mxu0 0
        %4008 = vmatprep.subr.bf16.mxu0 0
        %4009 = vmatpush1.bf16.msra.mxu0 0
        %4010 = vmatprep.subr.bf16.mxu0 0
        %4011 = vmatpush1.bf16.msra.mxu0 0
        %4012 = vmatprep.subr.bf16.mxu0 0
        %4013 = vmatpush1.bf16.msra.mxu0 0
        %4014 = vmatprep.subr.bf16.mxu0 0
        %4015 = vmatpush1.bf16.msra.mxu0 0
        %4016 = vmatprep.subr.bf16.mxu0 0
        %4017 = vmatpush1.bf16.msra.mxu0 0
        %4018 = vmatprep.subr.bf16.mxu0 0
        %4019 = vmatpush1.bf16.msra.mxu0 %v3892
        %4020 = vmatprep.subr.bf16.mxu0 0
        %4021 = vmatpush1.bf16.msra.mxu0 %v3891
        %4022 = vmatprep.subr.bf16.mxu0 0
        %4023 = vmatpush2.bf16.msra.mxu0 0
        %4024 = vmatprep.subr.bf16.mxu0 0
        %4025 = vmatpush2.bf16.msra.mxu0 0
        %4026 = vmatprep.subr.bf16.mxu0 0
        %4027 = vmatpush2.bf16.msra.mxu0 0
        %4028 = vmatprep.subr.bf16.mxu0 0
        %4029 = vmatpush2.bf16.msra.mxu0 0
        %4030 = vmatprep.subr.bf16.mxu0 0
        %4031 = vmatpush2.bf16.msra.mxu0 0
        %4032 = vmatprep.subr.bf16.mxu0 0
        %4033 = vmatpush2.bf16.msra.mxu0 0
        %4034 = vmatprep.subr.bf16.mxu0 0
        %4035 = vmatpush2.bf16.msra.mxu0 0
        %4036 = vmatprep.subr.bf16.mxu0 0
        %4037 = vmatpush2.bf16.msra.mxu0 0
        %4038 = vmatprep.mubr.bf16.mxu0 0
        %4039 = vmatmul.mubr.bf16.gmra.mxu0 %v4001
        %v4040 = vpop.f32.mrf.mxu0
        %v4041 = vadd.f32 0.0, %v4040
        %v4042 = vpop.f32.mrf.mxu0
        %v4043 = vpop.f32.mrf.mxu0
        %v4044 = vadd.f32 0.0, %v4043
        %v4045 = vpop.f32.mrf.mxu0
        %4046 = vmatprep.mubr.bf16.mxu0 0
        %4047 = vmatmul.mubr.bf16.gmra.mxu0 %v4004
        %v4048 = vpop.f32.mrf.mxu0
        %v4049 = vadd.f32 0.0, %v4048
        %v4050 = vpop.f32.mrf.mxu0
        %v4051 = vpop.f32.mrf.mxu0
        %v4052 = vadd.f32 0.0, %v4051
        %v4053 = vpop.f32.mrf.mxu0
        %4054 = vdwg.mxu0
        %v4055 = vpack.c.bf16 %v4044, %v4041
        %v4056 = vpack.c.bf16 %v4052, %v4049
        %v4059 = vunpack.c.l.b16 %v4055
        %v4060 = vunpack.c.h.b16 %v4055
        %v4061 = vunpack.c.l.b16 %v4056
        %v4062 = vunpack.c.h.b16 %v4056
        %v4063 = vpack.c.b16 %v4059, %v4059
        %v4064 = vpack.c.b16 %v4060, %v4060
        %v4065 = vpack.c.b16 %v4061, %v4061
        %v4066 = vpack.c.b16 %v4062, %v4062
        %4067 = vrot.lane.b32.xlu0 %v4063, 64
        %v4068 = vpop.permute.xlu0 %4067
        %4069 = vrot.lane.b32.xlu0 %v4064, 64
        %v4070 = vpop.permute.xlu0 %4069
        %4071 = vrot.lane.b32.xlu0 %v4065, 64
        %v4072 = vpop.permute.xlu0 %4071
        %4073 = vrot.lane.b32.xlu0 %v4066, 64
        %v4074 = vpop.permute.xlu0 %4073
        %vm4079 = vcmask 781824
        %4080 = vst.msk [vmem:[#allocation3] sm:$0xf] %vm4079, %v4068
        %4081 = vst.msk [vmem:[#allocation3 + $0x4] sm:$0xf] %vm4079, %v4070
        %4082 = vst.msk [vmem:[#allocation3 + $0x8] sm:$0xf] %vm4079, %v4072
        %4083 = vst.msk [vmem:[#allocation3 + $0xc] sm:$0xf] %vm4079, %v4074
        %s4084 = scalar_lea.vmem %s65, 192
        %v4085 = vld [vmem:[%s4084] sm:$0xf]
        %v4086 = vld [vmem:[%s4084 + $0x4] sm:$0xf]
        %v4087 = vld [vmem:[%s4084 + $0x8] sm:$0xf]
        %v4088 = vld [vmem:[%s4084 + $0xc] sm:$0xf]
        %v4089 = vld [vmem:[%s4084 + $0x10] sm:$0xf]
        %v4090 = vld [vmem:[%s4084 + $0x14] sm:$0xf]
        %v4091 = vld [vmem:[%s4084 + $0x18] sm:$0xf]
        %v4092 = vld [vmem:[%s4084 + $0x1c] sm:$0xf]
        %v4093 = vld [vmem:[%s4084 + $0x20] sm:$0xf]
        %v4094 = vld [vmem:[%s4084 + $0x24] sm:$0xf]
        %v4095 = vld [vmem:[%s4084 + $0x28] sm:$0xf]
        %v4096 = vld [vmem:[%s4084 + $0x2c] sm:$0xf]
        %v4097 = vld [vmem:[%s4084 + $0x30] sm:$0xf]
        %v4098 = vld [vmem:[%s4084 + $0x34] sm:$0xf]
        %v4099 = vld [vmem:[%s4084 + $0x38] sm:$0xf]
        %v4100 = vld [vmem:[%s4084 + $0x3c] sm:$0xf]
        %s4101 = scalar_lea.vmem %s71, 3
        %v4102 = vld [vmem:[%s4101] sm:$0x1]
        %v4104 = vlaneseq
        %v4105 = vshrl.u32 %v4104, 7
        %v4106 = vsub.s32 0, %v4105
        %v4107 = vrot.slane %v4102, %v4106
        %v4125 = vunpack.c.l.b16 %v4085
        %v4126 = vunpack.c.l.b16 %v4086
        %v4127 = vunpack.c.l.b16 %v4087
        %v4128 = vunpack.c.l.b16 %v4088
        %v4129 = vunpack.c.l.b16 %v4089
        %v4130 = vunpack.c.l.b16 %v4090
        %v4131 = vunpack.c.l.b16 %v4091
        %v4132 = vunpack.c.l.b16 %v4092
        %v4133 = vunpack.c.l.b16 %v4093
        %v4134 = vunpack.c.l.b16 %v4094
        %v4135 = vunpack.c.l.b16 %v4095
        %v4136 = vunpack.c.l.b16 %v4096
        %v4137 = vunpack.c.l.b16 %v4097
        %v4138 = vunpack.c.l.b16 %v4098
        %v4139 = vunpack.c.l.b16 %v4099
        %v4140 = vunpack.c.l.b16 %v4100
        %v4141 = vpack.c.b16 %v4126, %v4125
        %v4142 = vpack.c.b16 %v4128, %v4127
        %v4143 = vpack.c.b16 %v4130, %v4129
        %v4144 = vpack.c.b16 %v4132, %v4131
        %v4145 = vpack.c.b16 %v4134, %v4133
        %v4146 = vpack.c.b16 %v4136, %v4135
        %v4147 = vpack.c.b16 %v4138, %v4137
        %v4148 = vpack.c.b16 %v4140, %v4139
        %4157 = vmatprep.subr.bf16.mxu0 0
        %4158 = vmatpush1.bf16.msra.mxu0 %v4148
        %4159 = vmatprep.subr.bf16.mxu0 0
        %4160 = vmatpush1.bf16.msra.mxu0 %v4147
        %4161 = vmatprep.subr.bf16.mxu0 0
        %4162 = vmatpush1.bf16.msra.mxu0 %v4146
        %4163 = vmatprep.subr.bf16.mxu0 0
        %4164 = vmatpush1.bf16.msra.mxu0 %v4145
        %4165 = vmatprep.subr.bf16.mxu0 0
        %4166 = vmatpush1.bf16.msra.mxu0 %v4144
        %4167 = vmatprep.subr.bf16.mxu0 0
        %4168 = vmatpush1.bf16.msra.mxu0 %v4143
        %4169 = vmatprep.subr.bf16.mxu0 0
        %4170 = vmatpush1.bf16.msra.mxu0 %v4142
        %4171 = vmatprep.subr.bf16.mxu0 0
        %4172 = vmatpush1.bf16.msra.mxu0 %v4141
        %4173 = vmatprep.subr.bf16.mxu0 0
        %4174 = vmatpush2.bf16.msra.mxu0 0
        %4175 = vmatprep.subr.bf16.mxu0 0
        %4176 = vmatpush2.bf16.msra.mxu0 0
        %4177 = vmatprep.subr.bf16.mxu0 0
        %4178 = vmatpush2.bf16.msra.mxu0 0
        %4179 = vmatprep.subr.bf16.mxu0 0
        %4180 = vmatpush2.bf16.msra.mxu0 0
        %4181 = vmatprep.subr.bf16.mxu0 0
        %4182 = vmatpush2.bf16.msra.mxu0 0
        %4183 = vmatprep.subr.bf16.mxu0 0
        %4184 = vmatpush2.bf16.msra.mxu0 0
        %4185 = vmatprep.subr.bf16.mxu0 0
        %4186 = vmatpush2.bf16.msra.mxu0 0
        %4187 = vmatprep.subr.bf16.mxu0 0
        %4188 = vmatpush2.bf16.msra.mxu0 0
        %4189 = vmatprep.mubr.bf16.mxu0 0
        %4190 = vmatmul.mubr.bf16.gmra.mxu0 %v2400
        %v4191 = vpop.f32.mrf.mxu0
        %v4192 = vadd.f32 %v4107, %v4191
        %v4193 = vpop.f32.mrf.mxu0
        %v4194 = vpop.f32.mrf.mxu0
        %v4195 = vadd.f32 %v4107, %v4194
        %v4196 = vpop.f32.mrf.mxu0
        %4197 = vmatprep.mubr.bf16.mxu0 0
        %4198 = vmatmul.mubr.bf16.gmra.mxu0 %v2401
        %v4199 = vpop.f32.mrf.mxu0
        %v4200 = vadd.f32 %v4107, %v4199
        %v4201 = vpop.f32.mrf.mxu0
        %v4202 = vpop.f32.mrf.mxu0
        %v4203 = vadd.f32 %v4107, %v4202
        %v4204 = vpop.f32.mrf.mxu0
        %4205 = vdwg.mxu0
        %v4206 = vpack.c.bf16 %v4195, %v4192
        %v4207 = vpack.c.bf16 %v4203, %v4200
        %s4208 = scalar_lea.vmem %s67, 192
        %v4209 = vld [vmem:[%s4208] sm:$0xf]
        %v4210 = vld [vmem:[%s4208 + $0x4] sm:$0xf]
        %v4211 = vld [vmem:[%s4208 + $0x8] sm:$0xf]
        %v4212 = vld [vmem:[%s4208 + $0xc] sm:$0xf]
        %v4213 = vld [vmem:[%s4208 + $0x10] sm:$0xf]
        %v4214 = vld [vmem:[%s4208 + $0x14] sm:$0xf]
        %v4215 = vld [vmem:[%s4208 + $0x18] sm:$0xf]
        %v4216 = vld [vmem:[%s4208 + $0x1c] sm:$0xf]
        %v4217 = vld [vmem:[%s4208 + $0x20] sm:$0xf]
        %v4218 = vld [vmem:[%s4208 + $0x24] sm:$0xf]
        %v4219 = vld [vmem:[%s4208 + $0x28] sm:$0xf]
        %v4220 = vld [vmem:[%s4208 + $0x2c] sm:$0xf]
        %v4221 = vld [vmem:[%s4208 + $0x30] sm:$0xf]
        %v4222 = vld [vmem:[%s4208 + $0x34] sm:$0xf]
        %v4223 = vld [vmem:[%s4208 + $0x38] sm:$0xf]
        %v4224 = vld [vmem:[%s4208 + $0x3c] sm:$0xf]
        %s4225 = scalar_lea.vmem %s73, 3
        %v4226 = vld [vmem:[%s4225] sm:$0x1]
        %v4228 = vlaneseq
        %v4229 = vshrl.u32 %v4228, 7
        %v4230 = vsub.s32 0, %v4229
        %v4231 = vrot.slane %v4226, %v4230
        %v4249 = vunpack.c.l.b16 %v4209
        %v4250 = vunpack.c.l.b16 %v4210
        %v4251 = vunpack.c.l.b16 %v4211
        %v4252 = vunpack.c.l.b16 %v4212
        %v4253 = vunpack.c.l.b16 %v4213
        %v4254 = vunpack.c.l.b16 %v4214
        %v4255 = vunpack.c.l.b16 %v4215
        %v4256 = vunpack.c.l.b16 %v4216
        %v4257 = vunpack.c.l.b16 %v4217
        %v4258 = vunpack.c.l.b16 %v4218
        %v4259 = vunpack.c.l.b16 %v4219
        %v4260 = vunpack.c.l.b16 %v4220
        %v4261 = vunpack.c.l.b16 %v4221
        %v4262 = vunpack.c.l.b16 %v4222
        %v4263 = vunpack.c.l.b16 %v4223
        %v4264 = vunpack.c.l.b16 %v4224
        %v4265 = vpack.c.b16 %v4250, %v4249
        %v4266 = vpack.c.b16 %v4252, %v4251
        %v4267 = vpack.c.b16 %v4254, %v4253
        %v4268 = vpack.c.b16 %v4256, %v4255
        %v4269 = vpack.c.b16 %v4258, %v4257
        %v4270 = vpack.c.b16 %v4260, %v4259
        %v4271 = vpack.c.b16 %v4262, %v4261
        %v4272 = vpack.c.b16 %v4264, %v4263
        %4281 = vmatprep.subr.bf16.mxu0 0
        %4282 = vmatpush1.bf16.msra.mxu0 %v4272
        %4283 = vmatprep.subr.bf16.mxu0 0
        %4284 = vmatpush1.bf16.msra.mxu0 %v4271
        %4285 = vmatprep.subr.bf16.mxu0 0
        %4286 = vmatpush1.bf16.msra.mxu0 %v4270
        %4287 = vmatprep.subr.bf16.mxu0 0
        %4288 = vmatpush1.bf16.msra.mxu0 %v4269
        %4289 = vmatprep.subr.bf16.mxu0 0
        %4290 = vmatpush1.bf16.msra.mxu0 %v4268
        %4291 = vmatprep.subr.bf16.mxu0 0
        %4292 = vmatpush1.bf16.msra.mxu0 %v4267
        %4293 = vmatprep.subr.bf16.mxu0 0
        %4294 = vmatpush1.bf16.msra.mxu0 %v4266
        %4295 = vmatprep.subr.bf16.mxu0 0
        %4296 = vmatpush1.bf16.msra.mxu0 %v4265
        %4297 = vmatprep.subr.bf16.mxu0 0
        %4298 = vmatpush2.bf16.msra.mxu0 0
        %4299 = vmatprep.subr.bf16.mxu0 0
        %4300 = vmatpush2.bf16.msra.mxu0 0
        %4301 = vmatprep.subr.bf16.mxu0 0
        %4302 = vmatpush2.bf16.msra.mxu0 0
        %4303 = vmatprep.subr.bf16.mxu0 0
        %4304 = vmatpush2.bf16.msra.mxu0 0
        %4305 = vmatprep.subr.bf16.mxu0 0
        %4306 = vmatpush2.bf16.msra.mxu0 0
        %4307 = vmatprep.subr.bf16.mxu0 0
        %4308 = vmatpush2.bf16.msra.mxu0 0
        %4309 = vmatprep.subr.bf16.mxu0 0
        %4310 = vmatpush2.bf16.msra.mxu0 0
        %4311 = vmatprep.subr.bf16.mxu0 0
        %4312 = vmatpush2.bf16.msra.mxu0 0
        %4313 = vmatprep.mubr.bf16.mxu0 0
        %4314 = vmatmul.mubr.bf16.gmra.mxu0 %v2400
        %v4315 = vpop.f32.mrf.mxu0
        %v4316 = vadd.f32 %v4231, %v4315
        %v4317 = vpop.f32.mrf.mxu0
        %v4318 = vpop.f32.mrf.mxu0
        %v4319 = vadd.f32 %v4231, %v4318
        %v4320 = vpop.f32.mrf.mxu0
        %4321 = vmatprep.mubr.bf16.mxu0 0
        %4322 = vmatmul.mubr.bf16.gmra.mxu0 %v2401
        %v4323 = vpop.f32.mrf.mxu0
        %v4324 = vadd.f32 %v4231, %v4323
        %v4325 = vpop.f32.mrf.mxu0
        %v4326 = vpop.f32.mrf.mxu0
        %v4327 = vadd.f32 %v4231, %v4326
        %v4328 = vpop.f32.mrf.mxu0
        %4329 = vdwg.mxu0
        %v4330 = vpack.c.bf16 %v4319, %v4316
        %v4331 = vpack.c.bf16 %v4327, %v4324
        %s4332 = scalar_lea.vmem %s69, 192
        %v4333 = vld [vmem:[%s4332] sm:$0xf]
        %v4334 = vld [vmem:[%s4332 + $0x4] sm:$0xf]
        %v4335 = vld [vmem:[%s4332 + $0x8] sm:$0xf]
        %v4336 = vld [vmem:[%s4332 + $0xc] sm:$0xf]
        %v4337 = vld [vmem:[%s4332 + $0x10] sm:$0xf]
        %v4338 = vld [vmem:[%s4332 + $0x14] sm:$0xf]
        %v4339 = vld [vmem:[%s4332 + $0x18] sm:$0xf]
        %v4340 = vld [vmem:[%s4332 + $0x1c] sm:$0xf]
        %v4341 = vld [vmem:[%s4332 + $0x20] sm:$0xf]
        %v4342 = vld [vmem:[%s4332 + $0x24] sm:$0xf]
        %v4343 = vld [vmem:[%s4332 + $0x28] sm:$0xf]
        %v4344 = vld [vmem:[%s4332 + $0x2c] sm:$0xf]
        %v4345 = vld [vmem:[%s4332 + $0x30] sm:$0xf]
        %v4346 = vld [vmem:[%s4332 + $0x34] sm:$0xf]
        %v4347 = vld [vmem:[%s4332 + $0x38] sm:$0xf]
        %v4348 = vld [vmem:[%s4332 + $0x3c] sm:$0xf]
        %s4349 = scalar_lea.vmem %s75, 3
        %v4350 = vld [vmem:[%s4349] sm:$0x1]
        %v4352 = vlaneseq
        %v4353 = vshrl.u32 %v4352, 7
        %v4354 = vsub.s32 0, %v4353
        %v4355 = vrot.slane %v4350, %v4354
        %v4373 = vunpack.c.l.b16 %v4333
        %v4374 = vunpack.c.l.b16 %v4334
        %v4375 = vunpack.c.l.b16 %v4335
        %v4376 = vunpack.c.l.b16 %v4336
        %v4377 = vunpack.c.l.b16 %v4337
        %v4378 = vunpack.c.l.b16 %v4338
        %v4379 = vunpack.c.l.b16 %v4339
        %v4380 = vunpack.c.l.b16 %v4340
        %v4381 = vunpack.c.l.b16 %v4341
        %v4382 = vunpack.c.l.b16 %v4342
        %v4383 = vunpack.c.l.b16 %v4343
        %v4384 = vunpack.c.l.b16 %v4344
        %v4385 = vunpack.c.l.b16 %v4345
        %v4386 = vunpack.c.l.b16 %v4346
        %v4387 = vunpack.c.l.b16 %v4347
        %v4388 = vunpack.c.l.b16 %v4348
        %v4389 = vpack.c.b16 %v4374, %v4373
        %v4390 = vpack.c.b16 %v4376, %v4375
        %v4391 = vpack.c.b16 %v4378, %v4377
        %v4392 = vpack.c.b16 %v4380, %v4379
        %v4393 = vpack.c.b16 %v4382, %v4381
        %v4394 = vpack.c.b16 %v4384, %v4383
        %v4395 = vpack.c.b16 %v4386, %v4385
        %v4396 = vpack.c.b16 %v4388, %v4387
        %4405 = vmatprep.subr.bf16.mxu0 0
        %4406 = vmatpush1.bf16.msra.mxu0 %v4396
        %4407 = vmatprep.subr.bf16.mxu0 0
        %4408 = vmatpush1.bf16.msra.mxu0 %v4395
        %4409 = vmatprep.subr.bf16.mxu0 0
        %4410 = vmatpush1.bf16.msra.mxu0 %v4394
        %4411 = vmatprep.subr.bf16.mxu0 0
        %4412 = vmatpush1.bf16.msra.mxu0 %v4393
        %4413 = vmatprep.subr.bf16.mxu0 0
        %4414 = vmatpush1.bf16.msra.mxu0 %v4392
        %4415 = vmatprep.subr.bf16.mxu0 0
        %4416 = vmatpush1.bf16.msra.mxu0 %v4391
        %4417 = vmatprep.subr.bf16.mxu0 0
        %4418 = vmatpush1.bf16.msra.mxu0 %v4390
        %4419 = vmatprep.subr.bf16.mxu0 0
        %4420 = vmatpush1.bf16.msra.mxu0 %v4389
        %4421 = vmatprep.subr.bf16.mxu0 0
        %4422 = vmatpush2.bf16.msra.mxu0 0
        %4423 = vmatprep.subr.bf16.mxu0 0
        %4424 = vmatpush2.bf16.msra.mxu0 0
        %4425 = vmatprep.subr.bf16.mxu0 0
        %4426 = vmatpush2.bf16.msra.mxu0 0
        %4427 = vmatprep.subr.bf16.mxu0 0
        %4428 = vmatpush2.bf16.msra.mxu0 0
        %4429 = vmatprep.subr.bf16.mxu0 0
        %4430 = vmatpush2.bf16.msra.mxu0 0
        %4431 = vmatprep.subr.bf16.mxu0 0
        %4432 = vmatpush2.bf16.msra.mxu0 0
        %4433 = vmatprep.subr.bf16.mxu0 0
        %4434 = vmatpush2.bf16.msra.mxu0 0
        %4435 = vmatprep.subr.bf16.mxu0 0
        %4436 = vmatpush2.bf16.msra.mxu0 0
        %4437 = vmatprep.mubr.bf16.mxu0 0
        %4438 = vmatmul.mubr.bf16.gmra.mxu0 %v2400
        %v4439 = vpop.f32.mrf.mxu0
        %v4440 = vadd.f32 %v4355, %v4439
        %v4441 = vpop.f32.mrf.mxu0
        %v4442 = vpop.f32.mrf.mxu0
        %v4443 = vadd.f32 %v4355, %v4442
        %v4444 = vpop.f32.mrf.mxu0
        %4445 = vmatprep.mubr.bf16.mxu0 0
        %4446 = vmatmul.mubr.bf16.gmra.mxu0 %v2401
        %v4447 = vpop.f32.mrf.mxu0
        %v4448 = vadd.f32 %v4355, %v4447
        %v4449 = vpop.f32.mrf.mxu0
        %v4450 = vpop.f32.mrf.mxu0
        %v4451 = vadd.f32 %v4355, %v4450
        %v4452 = vpop.f32.mrf.mxu0
        %4453 = vdwg.mxu0
        %v4454 = vpack.c.bf16 %v4443, %v4440
        %v4455 = vpack.c.bf16 %v4451, %v4448
        %v4457 = vsel %vm2774, %v4206, 0
        %v4460 = vsel %vm2774, %v4207, 0
        %v4463 = vsel %vm2774, %v4330, 0
        %v4466 = vsel %vm2774, %v4331, 0
        %4468 = vmatprep.subr.bf16.mxu0 0
        %4469 = vmatpush1.bf16.xpose.msra.mxu0 0
        %4470 = vmatprep.subr.bf16.mxu0 0
        %4471 = vmatpush1.bf16.xpose.msra.mxu0 0
        %4472 = vmatprep.subr.bf16.mxu0 0
        %4473 = vmatpush1.bf16.xpose.msra.mxu0 0
        %4474 = vmatprep.subr.bf16.mxu0 0
        %4475 = vmatpush1.bf16.xpose.msra.mxu0 0
        %4476 = vmatprep.subr.bf16.mxu0 0
        %4477 = vmatpush1.bf16.xpose.msra.mxu0 0
        %4478 = vmatprep.subr.bf16.mxu0 0
        %4479 = vmatpush1.bf16.xpose.msra.mxu0 0
        %4480 = vmatprep.subr.bf16.mxu0 0
        %4481 = vmatpush1.bf16.xpose.msra.mxu0 %v4466
        %4482 = vmatprep.subr.bf16.mxu0 0
        %4483 = vmatpush1.bf16.xpose.msra.mxu0 %v4463
        %4484 = vmatprep.subr.bf16.mxu0 0
        %4485 = vmatpush2.bf16.xpose.msra.mxu0 0
        %4486 = vmatprep.subr.bf16.mxu0 0
        %4487 = vmatpush2.bf16.xpose.msra.mxu0 0
        %4488 = vmatprep.subr.bf16.mxu0 0
        %4489 = vmatpush2.bf16.xpose.msra.mxu0 0
        %4490 = vmatprep.subr.bf16.mxu0 0
        %4491 = vmatpush2.bf16.xpose.msra.mxu0 0
        %4492 = vmatprep.subr.bf16.mxu0 0
        %4493 = vmatpush2.bf16.xpose.msra.mxu0 0
        %4494 = vmatprep.subr.bf16.mxu0 0
        %4495 = vmatpush2.bf16.xpose.msra.mxu0 0
        %4496 = vmatprep.subr.bf16.mxu0 0
        %4497 = vmatpush2.bf16.xpose.msra.mxu0 0
        %4498 = vmatprep.subr.bf16.mxu0 0
        %4499 = vmatpush2.bf16.xpose.msra.mxu0 0
        %4500 = vmatprep.mubr.bf16.mxu0 0
        %4501 = vmatmul.mubr.bf16.gmra.mxu0 %v4457
        %v4502 = vpop.f32.mrf.mxu0
        %v4503 = vadd.f32 %v2407, %v4502
        %v4504 = vpop.f32.mrf.mxu0
        %v4505 = vpop.f32.mrf.mxu0
        %v4506 = vadd.f32 %v2407, %v4505
        %v4507 = vpop.f32.mrf.mxu0
        %4508 = vmatprep.mubr.bf16.mxu0 0
        %4509 = vmatmul.mubr.bf16.gmra.mxu0 %v4460
        %v4510 = vpop.f32.mrf.mxu0
        %v4511 = vadd.f32 %v2407, %v4510
        %v4512 = vpop.f32.mrf.mxu0
        %v4513 = vpop.f32.mrf.mxu0
        %v4514 = vadd.f32 %v2407, %v4513
        %v4515 = vpop.f32.mrf.mxu0
        %4516 = vdwg.mxu0
        %v4517 = vsel %vm2774, %v4503, -inf
        %4518 = vmax.xlane.f32.xlu0 %v4517
        %v4519 = vpop.xlane.xlu0 %4518
        %v4520 = vsel %vm2774, %v4506, -inf
        %4521 = vmax.xlane.f32.xlu0 %v4520
        %v4522 = vpop.xlane.xlu0 %4521
        %v4523 = vsel %vm2774, %v4511, -inf
        %4524 = vmax.xlane.f32.xlu0 %v4523
        %v4525 = vpop.xlane.xlu0 %4524
        %v4526 = vsel %vm2774, %v4514, -inf
        %4527 = vmax.xlane.f32.xlu0 %v4526
        %v4528 = vpop.xlane.xlu0 %4527
        %v4529 = vsub.f32 %v4503, %v4519
        %v4530 = vsub.f32 %v4506, %v4522
        %v4531 = vsub.f32 %v4511, %v4525
        %v4532 = vsub.f32 %v4514, %v4528
        %v4533 = vmul.f32 %v4529, 1.442695
        %v4534 = vpow.pop %v4533
        %v4535 = vmul.f32 %v4530, 1.442695
        %v4536 = vpow.pop %v4535
        %v4537 = vmul.f32 %v4531, 1.442695
        %v4538 = vpow.pop %v4537
        %v4539 = vmul.f32 %v4532, 1.442695
        %v4540 = vpow.pop %v4539
        %v4541 = vsel %vm2774, %v4534, 0.0
        %4542 = vadd.xlane.f32.xlu0 %v4541
        %v4543 = vpop.xlane.xlu0 %4542
        %v4544 = vsel %vm2774, %v4536, 0.0
        %4545 = vadd.xlane.f32.xlu0 %v4544
        %v4546 = vpop.xlane.xlu0 %4545
        %v4547 = vsel %vm2774, %v4538, 0.0
        %4548 = vadd.xlane.f32.xlu0 %v4547
        %v4549 = vpop.xlane.xlu0 %4548
        %v4550 = vsel %vm2774, %v4540, 0.0
        %4551 = vadd.xlane.f32.xlu0 %v4550
        %v4552 = vpop.xlane.xlu0 %4551
        %v4553 = vrcp.pop %v4543
        %v4554 = vrcp.pop %v4546
        %v4555 = vrcp.pop %v4549
        %v4556 = vrcp.pop %v4552
        %v4557 = vmul.f32 %v4534, %v4553
        %v4558 = vmul.f32 %v4536, %v4554
        %v4559 = vmul.f32 %v4538, %v4555
        %v4560 = vmul.f32 %v4540, %v4556
        %v4561 = vpack.c.bf16 %v4558, %v4557
        %v4562 = vpack.c.bf16 %v4560, %v4559
        %v4564 = vsel %vm2774, %v4561, 0
        %v4567 = vsel %vm2774, %v4562, 0
        %4569 = vmatprep.subr.bf16.mxu0 0
        %4570 = vmatpush1.bf16.msra.mxu0 0
        %4571 = vmatprep.subr.bf16.mxu0 0
        %4572 = vmatpush1.bf16.msra.mxu0 0
        %4573 = vmatprep.subr.bf16.mxu0 0
        %4574 = vmatpush1.bf16.msra.mxu0 0
        %4575 = vmatprep.subr.bf16.mxu0 0
        %4576 = vmatpush1.bf16.msra.mxu0 0
        %4577 = vmatprep.subr.bf16.mxu0 0
        %4578 = vmatpush1.bf16.msra.mxu0 0
        %4579 = vmatprep.subr.bf16.mxu0 0
        %4580 = vmatpush1.bf16.msra.mxu0 0
        %4581 = vmatprep.subr.bf16.mxu0 0
        %4582 = vmatpush1.bf16.msra.mxu0 %v4455
        %4583 = vmatprep.subr.bf16.mxu0 0
        %4584 = vmatpush1.bf16.msra.mxu0 %v4454
        %4585 = vmatprep.subr.bf16.mxu0 0
        %4586 = vmatpush2.bf16.msra.mxu0 0
        %4587 = vmatprep.subr.bf16.mxu0 0
        %4588 = vmatpush2.bf16.msra.mxu0 0
        %4589 = vmatprep.subr.bf16.mxu0 0
        %4590 = vmatpush2.bf16.msra.mxu0 0
        %4591 = vmatprep.subr.bf16.mxu0 0
        %4592 = vmatpush2.bf16.msra.mxu0 0
        %4593 = vmatprep.subr.bf16.mxu0 0
        %4594 = vmatpush2.bf16.msra.mxu0 0
        %4595 = vmatprep.subr.bf16.mxu0 0
        %4596 = vmatpush2.bf16.msra.mxu0 0
        %4597 = vmatprep.subr.bf16.mxu0 0
        %4598 = vmatpush2.bf16.msra.mxu0 0
        %4599 = vmatprep.subr.bf16.mxu0 0
        %4600 = vmatpush2.bf16.msra.mxu0 0
        %4601 = vmatprep.mubr.bf16.mxu0 0
        %4602 = vmatmul.mubr.bf16.gmra.mxu0 %v4564
        %v4603 = vpop.f32.mrf.mxu0
        %v4604 = vadd.f32 0.0, %v4603
        %v4605 = vpop.f32.mrf.mxu0
        %v4606 = vpop.f32.mrf.mxu0
        %v4607 = vadd.f32 0.0, %v4606
        %v4608 = vpop.f32.mrf.mxu0
        %4609 = vmatprep.mubr.bf16.mxu0 0
        %4610 = vmatmul.mubr.bf16.gmra.mxu0 %v4567
        %v4611 = vpop.f32.mrf.mxu0
        %v4612 = vadd.f32 0.0, %v4611
        %v4613 = vpop.f32.mrf.mxu0
        %v4614 = vpop.f32.mrf.mxu0
        %v4615 = vadd.f32 0.0, %v4614
        %v4616 = vpop.f32.mrf.mxu0
        %4617 = vdwg.mxu0
        %v4618 = vpack.c.bf16 %v4607, %v4604
        %v4619 = vpack.c.bf16 %v4615, %v4612
        %v4622 = vunpack.c.l.b16 %v4618
        %v4623 = vunpack.c.h.b16 %v4618
        %v4624 = vunpack.c.l.b16 %v4619
        %v4625 = vunpack.c.h.b16 %v4619
        %v4626 = vpack.c.b16 %v4622, %v4622
        %v4627 = vpack.c.b16 %v4623, %v4623
        %v4628 = vpack.c.b16 %v4624, %v4624
        %v4629 = vpack.c.b16 %v4625, %v4625
        %4630 = vrot.lane.b32.xlu0 %v4626, 96
        %v4631 = vpop.permute.xlu0 %4630
        %4632 = vrot.lane.b32.xlu0 %v4627, 96
        %v4633 = vpop.permute.xlu0 %4632
        %4634 = vrot.lane.b32.xlu0 %v4628, 96
        %v4635 = vpop.permute.xlu0 %4634
        %4636 = vrot.lane.b32.xlu0 %v4629, 96
        %v4637 = vpop.permute.xlu0 %4636
        %vm4642 = vcmask 1044224
        %4643 = vst.msk [vmem:[#allocation3] sm:$0xf] %vm4642, %v4631
        %4644 = vst.msk [vmem:[#allocation3 + $0x4] sm:$0xf] %vm4642, %v4633
        %4645 = vst.msk [vmem:[#allocation3 + $0x8] sm:$0xf] %vm4642, %v4635
        %4646 = vst.msk [vmem:[#allocation3 + $0xc] sm:$0xf] %vm4642, %v4637
        %v4647 = vld [vmem:[#allocation3] sm:$0xf]
        %v4648 = vld [vmem:[#allocation3 + $0x4] sm:$0xf]
        %v4649 = vld [vmem:[#allocation3 + $0x8] sm:$0xf]
        %v4650 = vld [vmem:[#allocation3 + $0xc] sm:$0xf]
        %v4651 = vld [vmem:[%s45] sm:$0xf]
        %v4652 = vld [vmem:[%s45 + $0x4] sm:$0xf]
        %v4653 = vld [vmem:[%s45 + $0x8] sm:$0xf]
        %v4654 = vld [vmem:[%s45 + $0xc] sm:$0xf]
        %v4655 = vld [vmem:[%s45 + $0x10] sm:$0xf]
        %v4656 = vld [vmem:[%s45 + $0x14] sm:$0xf]
        %v4657 = vld [vmem:[%s45 + $0x18] sm:$0xf]
        %v4658 = vld [vmem:[%s45 + $0x1c] sm:$0xf]
        %v4659 = vld [vmem:[%s45 + $0x20] sm:$0xf]
        %v4660 = vld [vmem:[%s45 + $0x24] sm:$0xf]
        %v4661 = vld [vmem:[%s45 + $0x28] sm:$0xf]
        %v4662 = vld [vmem:[%s45 + $0x2c] sm:$0xf]
        %v4663 = vld [vmem:[%s45 + $0x30] sm:$0xf]
        %v4664 = vld [vmem:[%s45 + $0x34] sm:$0xf]
        %v4665 = vld [vmem:[%s45 + $0x38] sm:$0xf]
        %v4666 = vld [vmem:[%s45 + $0x3c] sm:$0xf]
        %v4667 = vld [vmem:[%s47] sm:$0x1]
        %v4669 = vlaneseq
        %v4670 = vshrl.u32 %v4669, 7
        %v4671 = vsub.s32 0, %v4670
        %v4672 = vrot.slane %v4667, %v4671
        %v4678 = vunpack.c.l.b16 %v4647
        %v4679 = vunpack.c.l.b16 %v4648
        %v4680 = vunpack.c.l.b16 %v4649
        %v4681 = vunpack.c.l.b16 %v4650
        %v4682 = vpack.c.b16 %v4679, %v4678
        %v4683 = vpack.c.b16 %v4681, %v4680
        %v4702 = vunpack.c.l.b16 %v4651
        %v4703 = vunpack.c.l.b16 %v4652
        %v4704 = vunpack.c.l.b16 %v4653
        %v4705 = vunpack.c.l.b16 %v4654
        %v4706 = vunpack.c.l.b16 %v4655
        %v4707 = vunpack.c.l.b16 %v4656
        %v4708 = vunpack.c.l.b16 %v4657
        %v4709 = vunpack.c.l.b16 %v4658
        %v4710 = vunpack.c.l.b16 %v4659
        %v4711 = vunpack.c.l.b16 %v4660
        %v4712 = vunpack.c.l.b16 %v4661
        %v4713 = vunpack.c.l.b16 %v4662
        %v4714 = vunpack.c.l.b16 %v4663
        %v4715 = vunpack.c.l.b16 %v4664
        %v4716 = vunpack.c.l.b16 %v4665
        %v4717 = vunpack.c.l.b16 %v4666
        %v4718 = vpack.c.b16 %v4703, %v4702
        %v4719 = vpack.c.b16 %v4705, %v4704
        %v4720 = vpack.c.b16 %v4707, %v4706
        %v4721 = vpack.c.b16 %v4709, %v4708
        %v4722 = vpack.c.b16 %v4711, %v4710
        %v4723 = vpack.c.b16 %v4713, %v4712
        %v4724 = vpack.c.b16 %v4715, %v4714
        %v4725 = vpack.c.b16 %v4717, %v4716
        %4734 = vmatprep.subr.bf16.mxu0 0
        %4735 = vmatpush1.bf16.msra.mxu0 %v4725
        %4736 = vmatprep.subr.bf16.mxu0 0
        %4737 = vmatpush1.bf16.msra.mxu0 %v4724
        %4738 = vmatprep.subr.bf16.mxu0 0
        %4739 = vmatpush1.bf16.msra.mxu0 %v4723
        %4740 = vmatprep.subr.bf16.mxu0 0
        %4741 = vmatpush1.bf16.msra.mxu0 %v4722
        %4742 = vmatprep.subr.bf16.mxu0 0
        %4743 = vmatpush1.bf16.msra.mxu0 %v4721
        %4744 = vmatprep.subr.bf16.mxu0 0
        %4745 = vmatpush1.bf16.msra.mxu0 %v4720
        %4746 = vmatprep.subr.bf16.mxu0 0
        %4747 = vmatpush1.bf16.msra.mxu0 %v4719
        %4748 = vmatprep.subr.bf16.mxu0 0
        %4749 = vmatpush1.bf16.msra.mxu0 %v4718
        %4750 = vmatprep.subr.bf16.mxu0 0
        %4751 = vmatpush2.bf16.msra.mxu0 0
        %4752 = vmatprep.subr.bf16.mxu0 0
        %4753 = vmatpush2.bf16.msra.mxu0 0
        %4754 = vmatprep.subr.bf16.mxu0 0
        %4755 = vmatpush2.bf16.msra.mxu0 0
        %4756 = vmatprep.subr.bf16.mxu0 0
        %4757 = vmatpush2.bf16.msra.mxu0 0
        %4758 = vmatprep.subr.bf16.mxu0 0
        %4759 = vmatpush2.bf16.msra.mxu0 0
        %4760 = vmatprep.subr.bf16.mxu0 0
        %4761 = vmatpush2.bf16.msra.mxu0 0
        %4762 = vmatprep.subr.bf16.mxu0 0
        %4763 = vmatpush2.bf16.msra.mxu0 0
        %4764 = vmatprep.subr.bf16.mxu0 0
        %4765 = vmatpush2.bf16.msra.mxu0 0
        %4766 = vmatprep.mubr.bf16.mxu0 0
        %4767 = vmatmul.mubr.bf16.gmra.mxu0 %v4682
        %v4768 = vpop.f32.mrf.mxu0
        %v4769 = vadd.f32 %v4672, %v4768
        %v4770 = vpop.f32.mrf.mxu0
        %v4771 = vpop.f32.mrf.mxu0
        %v4772 = vadd.f32 %v4672, %v4771
        %v4773 = vpop.f32.mrf.mxu0
        %4774 = vmatprep.mubr.bf16.mxu0 0
        %4775 = vmatmul.mubr.bf16.gmra.mxu0 %v4683
        %v4776 = vpop.f32.mrf.mxu0
        %v4777 = vadd.f32 %v4672, %v4776
        %v4778 = vpop.f32.mrf.mxu0
        %v4779 = vpop.f32.mrf.mxu0
        %v4780 = vadd.f32 %v4672, %v4779
        %v4781 = vpop.f32.mrf.mxu0
        %4782 = vdwg.mxu0
        %v4783 = vadd.f32 %v4769, %v2330
        %v4784 = vadd.f32 %v4772, %v2331
        %v4785 = vadd.f32 %v4777, %v2332
        %v4786 = vadd.f32 %v4780, %v2333
        %v4787 = vld [vmem:[%s49] sm:$0x1]
        %v4788 = vld [vmem:[%s51] sm:$0x1]
        %4789 = vadd.xlane.f32.xlu0 %v4783
        %v4790 = vpop.xlane.xlu0 %4789
        %4791 = vadd.xlane.f32.xlu0 %v4784
        %v4792 = vpop.xlane.xlu0 %4791
        %4793 = vadd.xlane.f32.xlu0 %v4785
        %v4794 = vpop.xlane.xlu0 %4793
        %4795 = vadd.xlane.f32.xlu0 %v4786
        %v4796 = vpop.xlane.xlu0 %4795
        %v4797 = vmul.f32 %v4790, %v1284
        %v4798 = vmul.f32 %v4792, %v1284
        %v4799 = vmul.f32 %v4794, %v1284
        %v4800 = vmul.f32 %v4796, %v1284
        %v4801 = vsub.f32 %v4783, %v4797
        %v4802 = vsub.f32 %v4784, %v4798
        %v4803 = vsub.f32 %v4785, %v4799
        %v4804 = vsub.f32 %v4786, %v4800
        %v4805 = vmul.f32 %v4801, %v4801
        %v4806 = vmul.f32 %v4802, %v4802
        %v4807 = vmul.f32 %v4803, %v4803
        %v4808 = vmul.f32 %v4804, %v4804
        %4809 = vadd.xlane.f32.xlu0 %v4805
        %v4810 = vpop.xlane.xlu0 %4809
        %4811 = vadd.xlane.f32.xlu0 %v4806
        %v4812 = vpop.xlane.xlu0 %4811
        %4813 = vadd.xlane.f32.xlu0 %v4807
        %v4814 = vpop.xlane.xlu0 %4813
        %4815 = vadd.xlane.f32.xlu0 %v4808
        %v4816 = vpop.xlane.xlu0 %4815
        %v4817 = vmul.f32 %v4810, %v1284
        %v4818 = vmul.f32 %v4812, %v1284
        %v4819 = vmul.f32 %v4814, %v1284
        %v4820 = vmul.f32 %v4816, %v1284
        %v4821 = vadd.f32 %v4817, 1e-05
        %v4822 = vadd.f32 %v4818, 1e-05
        %v4823 = vadd.f32 %v4819, 1e-05
        %v4824 = vadd.f32 %v4820, 1e-05
        %v4825 = vrsqrt.pop %v4821
        %v4826 = vrsqrt.pop %v4822
        %v4827 = vrsqrt.pop %v4823
        %v4828 = vrsqrt.pop %v4824
        %v4829 = vmul.f32 %v4801, %v4825
        %v4830 = vmul.f32 %v4802, %v4826
        %v4831 = vmul.f32 %v4803, %v4827
        %v4832 = vmul.f32 %v4804, %v4828
        %v4834 = vlaneseq
        %v4835 = vshrl.u32 %v4834, 7
        %v4836 = vsub.s32 0, %v4835
        %v4837 = vrot.slane %v4787, %v4836
        %v4839 = vmul.f32 %v4829, %v4837
        %v4840 = vmul.f32 %v4830, %v4837
        %v4841 = vmul.f32 %v4831, %v4837
        %v4842 = vmul.f32 %v4832, %v4837
        %v4844 = vlaneseq
        %v4845 = vshrl.u32 %v4844, 7
        %v4846 = vsub.s32 0, %v4845
        %v4847 = vrot.slane %v4788, %v4846
        %v4849 = vadd.f32 %v4839, %v4847
        %v4850 = vadd.f32 %v4840, %v4847
        %v4851 = vadd.f32 %v4841, %v4847
        %v4852 = vadd.f32 %v4842, %v4847
        %v4853 = vld [vmem:[%s53] sm:$0xff]
        %v4854 = vld [vmem:[%s53 + $0x8] sm:$0xff]
        %v4855 = vld [vmem:[%s53 + $0x10] sm:$0xff]
        %v4856 = vld [vmem:[%s53 + $0x18] sm:$0xff]
        %v4857 = vld [vmem:[%s53 + $0x20] sm:$0xff]
        %v4858 = vld [vmem:[%s53 + $0x28] sm:$0xff]
        %v4859 = vld [vmem:[%s53 + $0x30] sm:$0xff]
        %v4860 = vld [vmem:[%s53 + $0x38] sm:$0xff]
        %v4861 = vld [vmem:[%s53 + $0x40] sm:$0xff]
        %v4862 = vld [vmem:[%s53 + $0x48] sm:$0xff]
        %v4863 = vld [vmem:[%s53 + $0x50] sm:$0xff]
        %v4864 = vld [vmem:[%s53 + $0x58] sm:$0xff]
        %v4865 = vld [vmem:[%s53 + $0x60] sm:$0xff]
        %v4866 = vld [vmem:[%s53 + $0x68] sm:$0xff]
        %v4867 = vld [vmem:[%s53 + $0x70] sm:$0xff]
        %v4868 = vld [vmem:[%s53 + $0x78] sm:$0xff]
        %v4869 = vpack.c.bf16 %v4850, %v4849
        %v4870 = vpack.c.bf16 %v4852, %v4851
        %v4871 = vld [vmem:[%s55] sm:$0x3]
        %v4873 = vlaneseq
        %v4874 = vshrl.u32 %v4873, 7
        %v4875 = vsub.s32 0, %v4874
        %v4876 = vrot.slane %v4871, %v4875
        %v4877 = vlaneseq
        %v4878 = vshrl.u32 %v4877, 7
        %v4879 = vsub.s32 1, %v4878
        %v4880 = vrot.slane %v4871, %v4879
        %v4899 = vunpack.c.l.b16 %v4853
        %v4900 = vunpack.c.h.b16 %v4853
        %v4901 = vunpack.c.l.b16 %v4854
        %v4902 = vunpack.c.h.b16 %v4854
        %v4903 = vunpack.c.l.b16 %v4855
        %v4904 = vunpack.c.h.b16 %v4855
        %v4905 = vunpack.c.l.b16 %v4856
        %v4906 = vunpack.c.h.b16 %v4856
        %v4907 = vunpack.c.l.b16 %v4857
        %v4908 = vunpack.c.h.b16 %v4857
        %v4909 = vunpack.c.l.b16 %v4858
        %v4910 = vunpack.c.h.b16 %v4858
        %v4911 = vunpack.c.l.b16 %v4859
        %v4912 = vunpack.c.h.b16 %v4859
        %v4913 = vunpack.c.l.b16 %v4860
        %v4914 = vunpack.c.h.b16 %v4860
        %v4915 = vunpack.c.l.b16 %v4861
        %v4916 = vunpack.c.h.b16 %v4861
        %v4917 = vunpack.c.l.b16 %v4862
        %v4918 = vunpack.c.h.b16 %v4862
        %v4919 = vunpack.c.l.b16 %v4863
        %v4920 = vunpack.c.h.b16 %v4863
        %v4921 = vunpack.c.l.b16 %v4864
        %v4922 = vunpack.c.h.b16 %v4864
        %v4923 = vunpack.c.l.b16 %v4865
        %v4924 = vunpack.c.h.b16 %v4865
        %v4925 = vunpack.c.l.b16 %v4866
        %v4926 = vunpack.c.h.b16 %v4866
        %v4927 = vunpack.c.l.b16 %v4867
        %v4928 = vunpack.c.h.b16 %v4867
        %v4929 = vunpack.c.l.b16 %v4868
        %v4930 = vunpack.c.h.b16 %v4868
        %v4931 = vpack.c.b16 %v4901, %v4899
        %v4932 = vpack.c.b16 %v4902, %v4900
        %v4933 = vpack.c.b16 %v4905, %v4903
        %v4934 = vpack.c.b16 %v4906, %v4904
        %v4935 = vpack.c.b16 %v4909, %v4907
        %v4936 = vpack.c.b16 %v4910, %v4908
        %v4937 = vpack.c.b16 %v4913, %v4911
        %v4938 = vpack.c.b16 %v4914, %v4912
        %v4939 = vpack.c.b16 %v4917, %v4915
        %v4940 = vpack.c.b16 %v4918, %v4916
        %v4941 = vpack.c.b16 %v4921, %v4919
        %v4942 = vpack.c.b16 %v4922, %v4920
        %v4943 = vpack.c.b16 %v4925, %v4923
        %v4944 = vpack.c.b16 %v4926, %v4924
        %v4945 = vpack.c.b16 %v4929, %v4927
        %v4946 = vpack.c.b16 %v4930, %v4928
        %4963 = vmatprep.subr.bf16.mxu0 %v4946
        %4964 = vmatpush1.bf16.msra.mxu0 %v4945
        %4965 = vmatprep.subr.bf16.mxu0 %v4944
        %4966 = vmatpush1.bf16.msra.mxu0 %v4943
        %4967 = vmatprep.subr.bf16.mxu0 %v4942
        %4968 = vmatpush1.bf16.msra.mxu0 %v4941
        %4969 = vmatprep.subr.bf16.mxu0 %v4940
        %4970 = vmatpush1.bf16.msra.mxu0 %v4939
        %4971 = vmatprep.subr.bf16.mxu0 %v4938
        %4972 = vmatpush1.bf16.msra.mxu0 %v4937
        %4973 = vmatprep.subr.bf16.mxu0 %v4936
        %4974 = vmatpush1.bf16.msra.mxu0 %v4935
        %4975 = vmatprep.subr.bf16.mxu0 %v4934
        %4976 = vmatpush1.bf16.msra.mxu0 %v4933
        %4977 = vmatprep.subr.bf16.mxu0 %v4932
        %4978 = vmatpush1.bf16.msra.mxu0 %v4931
        %4979 = vmatprep.subr.bf16.mxu0 0
        %4980 = vmatpush2.bf16.msra.mxu0 0
        %4981 = vmatprep.subr.bf16.mxu0 0
        %4982 = vmatpush2.bf16.msra.mxu0 0
        %4983 = vmatprep.subr.bf16.mxu0 0
        %4984 = vmatpush2.bf16.msra.mxu0 0
        %4985 = vmatprep.subr.bf16.mxu0 0
        %4986 = vmatpush2.bf16.msra.mxu0 0
        %4987 = vmatprep.subr.bf16.mxu0 0
        %4988 = vmatpush2.bf16.msra.mxu0 0
        %4989 = vmatprep.subr.bf16.mxu0 0
        %4990 = vmatpush2.bf16.msra.mxu0 0
        %4991 = vmatprep.subr.bf16.mxu0 0
        %4992 = vmatpush2.bf16.msra.mxu0 0
        %4993 = vmatprep.subr.bf16.mxu0 0
        %4994 = vmatpush2.bf16.msra.mxu0 0
        %4995 = vmatprep.mubr.bf16.mxu0 0
        %4996 = vmatmul.mubr.bf16.gmra.mxu0 %v4869
        %v4997 = vpop.f32.mrf.mxu0
        %v4998 = vadd.f32 %v4876, %v4997
        %v4999 = vpop.f32.mrf.mxu0
        %v5000 = vadd.f32 %v4880, %v4999
        %v5001 = vpop.f32.mrf.mxu0
        %v5002 = vadd.f32 %v4876, %v5001
        %v5003 = vpop.f32.mrf.mxu0
        %v5004 = vadd.f32 %v4880, %v5003
        %5005 = vmatprep.mubr.bf16.mxu0 0
        %5006 = vmatmul.mubr.bf16.gmra.mxu0 %v4870
        %v5007 = vpop.f32.mrf.mxu0
        %v5008 = vadd.f32 %v4876, %v5007
        %v5009 = vpop.f32.mrf.mxu0
        %v5010 = vadd.f32 %v4880, %v5009
        %v5011 = vpop.f32.mrf.mxu0
        %v5012 = vadd.f32 %v4876, %v5011
        %v5013 = vpop.f32.mrf.mxu0
        %v5014 = vadd.f32 %v4880, %v5013
        %5015 = vdwg.mxu0
        %v5016 = vxor.u32 %v4998, 2147483648
        %v5017 = vxor.u32 %v5000, 2147483648
        %v5018 = vxor.u32 %v5002, 2147483648
        %v5019 = vxor.u32 %v5004, 2147483648
        %v5020 = vxor.u32 %v5008, 2147483648
        %v5021 = vxor.u32 %v5010, 2147483648
        %v5022 = vxor.u32 %v5012, 2147483648
        %v5023 = vxor.u32 %v5014, 2147483648
        %v5024 = vmul.f32 %v5016, 1.442695
        %v5025 = vpow.pop %v5024
        %v5026 = vmul.f32 %v5017, 1.442695
        %v5027 = vpow.pop %v5026
        %v5028 = vmul.f32 %v5018, 1.442695
        %v5029 = vpow.pop %v5028
        %v5030 = vmul.f32 %v5019, 1.442695
        %v5031 = vpow.pop %v5030
        %v5032 = vmul.f32 %v5020, 1.442695
        %v5033 = vpow.pop %v5032
        %v5034 = vmul.f32 %v5021, 1.442695
        %v5035 = vpow.pop %v5034
        %v5036 = vmul.f32 %v5022, 1.442695
        %v5037 = vpow.pop %v5036
        %v5038 = vmul.f32 %v5023, 1.442695
        %v5039 = vpow.pop %v5038
        %v5040 = vadd.f32 %v5025, 1.0
        %v5041 = vadd.f32 %v5027, 1.0
        %v5042 = vadd.f32 %v5029, 1.0
        %v5043 = vadd.f32 %v5031, 1.0
        %v5044 = vadd.f32 %v5033, 1.0
        %v5045 = vadd.f32 %v5035, 1.0
        %v5046 = vadd.f32 %v5037, 1.0
        %v5047 = vadd.f32 %v5039, 1.0
        %v5048 = vrcp.pop %v5040
        %v5049 = vmul.f32 1.0, %v5048
        %v5050 = vrcp.pop %v5041
        %v5051 = vmul.f32 1.0, %v5050
        %v5052 = vrcp.pop %v5042
        %v5053 = vmul.f32 1.0, %v5052
        %v5054 = vrcp.pop %v5043
        %v5055 = vmul.f32 1.0, %v5054
        %v5056 = vrcp.pop %v5044
        %v5057 = vmul.f32 1.0, %v5056
        %v5058 = vrcp.pop %v5045
        %v5059 = vmul.f32 1.0, %v5058
        %v5060 = vrcp.pop %v5046
        %v5061 = vmul.f32 1.0, %v5060
        %v5062 = vrcp.pop %v5047
        %v5063 = vmul.f32 1.0, %v5062
        %v5064 = vmul.f32 %v4998, %v5049
        %v5065 = vmul.f32 %v5000, %v5051
        %v5066 = vmul.f32 %v5002, %v5053
        %v5067 = vmul.f32 %v5004, %v5055
        %v5068 = vmul.f32 %v5008, %v5057
        %v5069 = vmul.f32 %v5010, %v5059
        %v5070 = vmul.f32 %v5012, %v5061
        %v5071 = vmul.f32 %v5014, %v5063
        %v5072 = vld [vmem:[%s57] sm:$0xf]
        %v5073 = vld [vmem:[%s57 + $0x4] sm:$0xf]
        %v5074 = vld [vmem:[%s57 + $0x8] sm:$0xf]
        %v5075 = vld [vmem:[%s57 + $0xc] sm:$0xf]
        %v5076 = vld [vmem:[%s57 + $0x10] sm:$0xf]
        %v5077 = vld [vmem:[%s57 + $0x14] sm:$0xf]
        %v5078 = vld [vmem:[%s57 + $0x18] sm:$0xf]
        %v5079 = vld [vmem:[%s57 + $0x1c] sm:$0xf]
        %v5080 = vld [vmem:[%s57 + $0x20] sm:$0xf]
        %v5081 = vld [vmem:[%s57 + $0x24] sm:$0xf]
        %v5082 = vld [vmem:[%s57 + $0x28] sm:$0xf]
        %v5083 = vld [vmem:[%s57 + $0x2c] sm:$0xf]
        %v5084 = vld [vmem:[%s57 + $0x30] sm:$0xf]
        %v5085 = vld [vmem:[%s57 + $0x34] sm:$0xf]
        %v5086 = vld [vmem:[%s57 + $0x38] sm:$0xf]
        %v5087 = vld [vmem:[%s57 + $0x3c] sm:$0xf]
        %v5088 = vld [vmem:[%s57 + $0x40] sm:$0xf]
        %v5089 = vld [vmem:[%s57 + $0x44] sm:$0xf]
        %v5090 = vld [vmem:[%s57 + $0x48] sm:$0xf]
        %v5091 = vld [vmem:[%s57 + $0x4c] sm:$0xf]
        %v5092 = vld [vmem:[%s57 + $0x50] sm:$0xf]
        %v5093 = vld [vmem:[%s57 + $0x54] sm:$0xf]
        %v5094 = vld [vmem:[%s57 + $0x58] sm:$0xf]
        %v5095 = vld [vmem:[%s57 + $0x5c] sm:$0xf]
        %v5096 = vld [vmem:[%s57 + $0x60] sm:$0xf]
        %v5097 = vld [vmem:[%s57 + $0x64] sm:$0xf]
        %v5098 = vld [vmem:[%s57 + $0x68] sm:$0xf]
        %v5099 = vld [vmem:[%s57 + $0x6c] sm:$0xf]
        %v5100 = vld [vmem:[%s57 + $0x70] sm:$0xf]
        %v5101 = vld [vmem:[%s57 + $0x74] sm:$0xf]
        %v5102 = vld [vmem:[%s57 + $0x78] sm:$0xf]
        %v5103 = vld [vmem:[%s57 + $0x7c] sm:$0xf]
        %v5104 = vpack.c.bf16 %v5066, %v5064
        %v5105 = vpack.c.bf16 %v5067, %v5065
        %v5106 = vpack.c.bf16 %v5070, %v5068
        %v5107 = vpack.c.bf16 %v5071, %v5069
        %v5108 = vld [vmem:[%s59] sm:$0x1]
        %v5110 = vlaneseq
        %v5111 = vshrl.u32 %v5110, 7
        %v5112 = vsub.s32 0, %v5111
        %v5113 = vrot.slane %v5108, %v5112
        %v5147 = vunpack.c.l.b16 %v5072
        %v5148 = vunpack.c.l.b16 %v5073
        %v5149 = vunpack.c.l.b16 %v5074
        %v5150 = vunpack.c.l.b16 %v5075
        %v5151 = vunpack.c.l.b16 %v5076
        %v5152 = vunpack.c.l.b16 %v5077
        %v5153 = vunpack.c.l.b16 %v5078
        %v5154 = vunpack.c.l.b16 %v5079
        %v5155 = vunpack.c.l.b16 %v5080
        %v5156 = vunpack.c.l.b16 %v5081
        %v5157 = vunpack.c.l.b16 %v5082
        %v5158 = vunpack.c.l.b16 %v5083
        %v5159 = vunpack.c.l.b16 %v5084
        %v5160 = vunpack.c.l.b16 %v5085
        %v5161 = vunpack.c.l.b16 %v5086
        %v5162 = vunpack.c.l.b16 %v5087
        %v5163 = vunpack.c.l.b16 %v5088
        %v5164 = vunpack.c.l.b16 %v5089
        %v5165 = vunpack.c.l.b16 %v5090
        %v5166 = vunpack.c.l.b16 %v5091
        %v5167 = vunpack.c.l.b16 %v5092
        %v5168 = vunpack.c.l.b16 %v5093
        %v5169 = vunpack.c.l.b16 %v5094
        %v5170 = vunpack.c.l.b16 %v5095
        %v5171 = vunpack.c.l.b16 %v5096
        %v5172 = vunpack.c.l.b16 %v5097
        %v5173 = vunpack.c.l.b16 %v5098
        %v5174 = vunpack.c.l.b16 %v5099
        %v5175 = vunpack.c.l.b16 %v5100
        %v5176 = vunpack.c.l.b16 %v5101
        %v5177 = vunpack.c.l.b16 %v5102
        %v5178 = vunpack.c.l.b16 %v5103
        %v5179 = vpack.c.b16 %v5148, %v5147
        %v5180 = vpack.c.b16 %v5150, %v5149
        %v5181 = vpack.c.b16 %v5152, %v5151
        %v5182 = vpack.c.b16 %v5154, %v5153
        %v5183 = vpack.c.b16 %v5156, %v5155
        %v5184 = vpack.c.b16 %v5158, %v5157
        %v5185 = vpack.c.b16 %v5160, %v5159
        %v5186 = vpack.c.b16 %v5162, %v5161
        %v5187 = vpack.c.b16 %v5164, %v5163
        %v5188 = vpack.c.b16 %v5166, %v5165
        %v5189 = vpack.c.b16 %v5168, %v5167
        %v5190 = vpack.c.b16 %v5170, %v5169
        %v5191 = vpack.c.b16 %v5172, %v5171
        %v5192 = vpack.c.b16 %v5174, %v5173
        %v5193 = vpack.c.b16 %v5176, %v5175
        %v5194 = vpack.c.b16 %v5178, %v5177
        %5211 = vmatprep.subr.bf16.mxu0 0
        %5212 = vmatpush1.bf16.msra.mxu0 %v5186
        %5213 = vmatprep.subr.bf16.mxu0 0
        %5214 = vmatpush1.bf16.msra.mxu0 %v5185
        %5215 = vmatprep.subr.bf16.mxu0 0
        %5216 = vmatpush1.bf16.msra.mxu0 %v5184
        %5217 = vmatprep.subr.bf16.mxu0 0
        %5218 = vmatpush1.bf16.msra.mxu0 %v5183
        %5219 = vmatprep.subr.bf16.mxu0 0
        %5220 = vmatpush1.bf16.msra.mxu0 %v5182
        %5221 = vmatprep.subr.bf16.mxu0 0
        %5222 = vmatpush1.bf16.msra.mxu0 %v5181
        %5223 = vmatprep.subr.bf16.mxu0 0
        %5224 = vmatpush1.bf16.msra.mxu0 %v5180
        %5225 = vmatprep.subr.bf16.mxu0 0
        %5226 = vmatpush1.bf16.msra.mxu0 %v5179
        %5227 = vmatprep.subr.bf16.mxu0 0
        %5228 = vmatpush2.bf16.msra.mxu0 %v5194
        %5229 = vmatprep.subr.bf16.mxu0 0
        %5230 = vmatpush2.bf16.msra.mxu0 %v5193
        %5231 = vmatprep.subr.bf16.mxu0 0
        %5232 = vmatpush2.bf16.msra.mxu0 %v5192
        %5233 = vmatprep.subr.bf16.mxu0 0
        %5234 = vmatpush2.bf16.msra.mxu0 %v5191
        %5235 = vmatprep.subr.bf16.mxu0 0
        %5236 = vmatpush2.bf16.msra.mxu0 %v5190
        %5237 = vmatprep.subr.bf16.mxu0 0
        %5238 = vmatpush2.bf16.msra.mxu0 %v5189
        %5239 = vmatprep.subr.bf16.mxu0 0
        %5240 = vmatpush2.bf16.msra.mxu0 %v5188
        %5241 = vmatprep.subr.bf16.mxu0 0
        %5242 = vmatpush2.bf16.msra.mxu0 %v5187
        %5243 = vmatprep.mubr.bf16.mxu0 %v5105
        %5244 = vmatmul.mubr.bf16.gmra.mxu0 %v5104
        %v5245 = vpop.f32.mrf.mxu0
        %v5246 = vadd.f32 %v5113, %v5245
        %v5247 = vpop.f32.mrf.mxu0
        %v5248 = vpop.f32.mrf.mxu0
        %v5249 = vadd.f32 %v5113, %v5248
        %v5250 = vpop.f32.mrf.mxu0
        %5251 = vmatprep.mubr.bf16.mxu0 %v5107
        %5252 = vmatmul.mubr.bf16.gmra.mxu0 %v5106
        %v5253 = vpop.f32.mrf.mxu0
        %v5254 = vadd.f32 %v5113, %v5253
        %v5255 = vpop.f32.mrf.mxu0
        %v5256 = vpop.f32.mrf.mxu0
        %v5257 = vadd.f32 %v5113, %v5256
        %v5258 = vpop.f32.mrf.mxu0
        %5259 = vdwg.mxu0
        %v5260 = vmul.f32 %v5246, 0.5
        %v5261 = vmul.f32 %v5249, 0.5
        %v5262 = vmul.f32 %v5254, 0.5
        %v5263 = vmul.f32 %v5257, 0.5
        %v5264 = vadd.f32 %v5260, %v4783
        %v5265 = vadd.f32 %v5261, %v4784
        %v5266 = vadd.f32 %v5262, %v4785
        %v5267 = vadd.f32 %v5263, %v4786
        %v5268 = vld [vmem:[%s61] sm:$0x1]
        %v5269 = vld [vmem:[%s63] sm:$0x1]
        %5270 = vadd.xlane.f32.xlu0 %v5264
        %v5271 = vpop.xlane.xlu0 %5270
        %5272 = vadd.xlane.f32.xlu0 %v5265
        %v5273 = vpop.xlane.xlu0 %5272
        %5274 = vadd.xlane.f32.xlu0 %v5266
        %v5275 = vpop.xlane.xlu0 %5274
        %5276 = vadd.xlane.f32.xlu0 %v5267
        %v5277 = vpop.xlane.xlu0 %5276
        %v5278 = vmul.f32 %v5271, %v1284
        %v5279 = vmul.f32 %v5273, %v1284
        %v5280 = vmul.f32 %v5275, %v1284
        %v5281 = vmul.f32 %v5277, %v1284
        %v5282 = vsub.f32 %v5264, %v5278
        %v5283 = vsub.f32 %v5265, %v5279
        %v5284 = vsub.f32 %v5266, %v5280
        %v5285 = vsub.f32 %v5267, %v5281
        %v5286 = vmul.f32 %v5282, %v5282
        %v5287 = vmul.f32 %v5283, %v5283
        %v5288 = vmul.f32 %v5284, %v5284
        %v5289 = vmul.f32 %v5285, %v5285
        %5290 = vadd.xlane.f32.xlu0 %v5286
        %v5291 = vpop.xlane.xlu0 %5290
        %5292 = vadd.xlane.f32.xlu0 %v5287
        %v5293 = vpop.xlane.xlu0 %5292
        %5294 = vadd.xlane.f32.xlu0 %v5288
        %v5295 = vpop.xlane.xlu0 %5294
        %5296 = vadd.xlane.f32.xlu0 %v5289
        %v5297 = vpop.xlane.xlu0 %5296
        %v5298 = vmul.f32 %v5291, %v1284
        %v5299 = vmul.f32 %v5293, %v1284
        %v5300 = vmul.f32 %v5295, %v1284
        %v5301 = vmul.f32 %v5297, %v1284
        %v5302 = vadd.f32 %v5298, 1e-05
        %v5303 = vadd.f32 %v5299, 1e-05
        %v5304 = vadd.f32 %v5300, 1e-05
        %v5305 = vadd.f32 %v5301, 1e-05
        %v5306 = vrsqrt.pop %v5302
        %v5307 = vrsqrt.pop %v5303
        %v5308 = vrsqrt.pop %v5304
        %v5309 = vrsqrt.pop %v5305
        %v5310 = vmul.f32 %v5282, %v5306
        %v5311 = vmul.f32 %v5283, %v5307
        %v5312 = vmul.f32 %v5284, %v5308
        %v5313 = vmul.f32 %v5285, %v5309
        %v5315 = vlaneseq
        %v5316 = vshrl.u32 %v5315, 7
        %v5317 = vsub.s32 0, %v5316
        %v5318 = vrot.slane %v5268, %v5317
        %v5320 = vmul.f32 %v5310, %v5318
        %v5321 = vmul.f32 %v5311, %v5318
        %v5322 = vmul.f32 %v5312, %v5318
        %v5323 = vmul.f32 %v5313, %v5318
        %v5325 = vlaneseq
        %v5326 = vshrl.u32 %v5325, 7
        %v5327 = vsub.s32 0, %v5326
        %v5328 = vrot.slane %v5269, %v5327
        %v5330 = vadd.f32 %v5320, %v5328
        %v5331 = vadd.f32 %v5321, %v5328
        %v5332 = vadd.f32 %v5322, %v5328
        %v5333 = vadd.f32 %v5323, %v5328
        %5334 = vst [vmem:[%s1263] sm:$0xff] %v5330
        %5335 = vst [vmem:[%s1263 + $0x8] sm:$0xff] %v5331
        %5336 = vst [vmem:[%s1263 + $0x10] sm:$0xff] %v5332
        %5337 = vst [vmem:[%s1263 + $0x18] sm:$0xff] %v5333
        %s5338 = sand.u32 %s891, 1
        %s5339 = scalar_lea.sflag [#allocation8], %s5338
        %s5340 = sand.u32 %s891, 1
        %s5341 = smul.addr %s5340, 32
        %s5342 = scalar_lea.vmem [#allocation24], %s5341
        // Predicated region
        $region213: #{tpu_custom_call.1} parent=167 // pred_check
          %p5343 = pneg %p901
        $region214: #{tpu_custom_call.1} parent=167 // pred_check_branch
          %5345 = sbr.rel (%p5343) target = $region216
        $region215: #{tpu_custom_call.1} parent=167 // pred_region
          %s5347 = ssub.s32 512, 512
          %5348 = vsyncadd %s5339, %s5347
          %s5349 = smul.addr %s101, 4
          %s5350 = smul.addr %s5349, 128
          %s5351 = scalar_lea.hbm %s77, %s5350
          %s5352 = sshll.u32 %s5342, 4
          %s5353 = int_to_ptr.vmem [resolvable:$true] %s5352
          %5358 = dma.vmem_to_hbm [thread:$0]  %s5353, 512, %s5351, %s5339, 128, 128, 8
        $region216: #{tpu_custom_call.1} parent=167 // pred_fallthru
          _
      $region168: #{tpu_custom_call.1} parent=5 // pred_fallthru
        _
      %p5359 = scmp.le.s32.totalorder 2, %s96
      // Predicated region
      $region217: #{tpu_custom_call.1} parent=5 // pred_check
        %p5360 = pneg %p5359
      $region218: #{tpu_custom_call.1} parent=5 // pred_check_branch
        %5362 = sbr.rel (%p5360) target = $region220
      $region219: #{tpu_custom_call.1} parent=5 // pred_region
        %s5363 = ssub.s32 %s96, 2
        // Predicated region
        $region221: #{tpu_custom_call.1} parent=219 // pred_check
          %p5364 = pneg %p907
        $region222: #{tpu_custom_call.1} parent=219 // pred_check_branch
          %5366 = sbr.rel (%p5364) target = $region224
        $region223: #{tpu_custom_call.1} parent=219 // pred_region
          %s5367 = sand.u32 %s892, 1
          %s5368 = scalar_lea.sflag [#allocation8], %s5367
          %s5369 = sand.u32 %s892, 1
          %s5370 = smul.addr %s5369, 32
          %s5371 = scalar_lea.vmem [#allocation24], %s5370
          %5372 = dma.done %s5368, 512
        $region224: #{tpu_custom_call.1} parent=219 // pred_fallthru
          _
      $region220: #{tpu_custom_call.1} parent=5 // pred_fallthru
        _
    $region6: #{tpu_custom_call.1} parent=1 // loop_footer
      %s100 = sadd.s32 1, %s96
    $region7: #{tpu_custom_call.1} parent=1 // loop_footer_branch
      %95 = sbr.rel target = $region3
    $region8: #{tpu_custom_call.1} parent=1 // loop_exit
      _
    %5373 = vsyncpa [#allocation7], 1
    %s5374 = scalar_lea.sflag [#allocation7], 1
    %5375 = vsyncpa %s5374, 1
    %5376 = vsyncpa [#allocation10], 1
    %5377 = vsyncpa [#allocation13], 1
    %5378 = vsyncpa [#allocation16], 1
    %5379 = vsyncpa [#allocation19], 1
    %5380 = vsyncpa [#allocation22], 1
    %5381 = vsyncpa [#allocation8], 1
    %s5382 = scalar_lea.sflag [#allocation8], 1
    %5383 = vsyncpa %s5382, 1

</llo_original>
